<compile_context>
chip_gen: v7x
topology: tpu7x:2x2x1
jax: 0.10.0
libtpu: 0.0.40
codegen_flags: <defaults>
</compile_context>

<pallas_src>
import functools

import jax
import jax.numpy as jnp
from jax.experimental import pallas as pl
from jax.experimental.pallas import tpu as pltpu

BN_EPS = 1e-5
# At TN=2048 the conv3 step (~2048x128x1024 MACs) clearly exceeds the ~0.35us
# fixed per-step overhead while live VMEM (~20-28 MiB) still fits v7x.
POINT_TILE_TARGET = 2048


def _cdiv(a, b):
    return -(-a // b)


def _round_up(x, m):
    return (x + m - 1) // m * m


def _vmem_limit_bytes():
    """Generation-aware scoped-VMEM limit (v5e/v6e: 128 MiB phys, v7x: 64 MiB)."""
    try:
        cap = int(pltpu.get_tpu_info().vmem_capacity_bytes)
    except Exception:
        cap = 64 << 20  # conservative (v7x-sized) fallback
    return int(min(cap - (16 << 20), 96 << 20))


_VMEM_LIMIT = _vmem_limit_bytes()


def _pick_point_tile(n):
    """Largest near-equal point tile <= POINT_TILE_TARGET (multiple of 8)."""
    num_tiles = max(1, _cdiv(n, POINT_TILE_TARGET))
    tn = _round_up(_cdiv(n, num_tiles), 8)
    return tn, num_tiles * tn


# ------------------------- in-kernel helpers -------------------------

def _mac3(x3, w, bias=None):
    """(R, 3) x (3, C) contraction on the VPU (three broadcast multiply-adds).
    A depth-3 contraction is <3% MXU-efficient, so keep it off the MXU."""
    h = (x3[:, 0:1] * w[0:1, :]
         + x3[:, 1:2] * w[1:2, :]
         + x3[:, 2:3] * w[2:3, :])
    if bias is not None:
        h = h + bias
    return h


def _accumulate_max(acc_ref, h, nt, tn, n_valid, mask_rows):
    """Running max over points into an (8, C) accumulator.  Padded rows are
    masked to -inf; the cross-sublane (8->1) reduce is deferred to the final
    epilogue so the per-step reduction stays on the VPU."""
    if mask_rows:
        row = nt * tn + jax.lax.broadcasted_iota(jnp.int32, (tn, 1), 0)
        h = jnp.where(row < n_valid, h, -jnp.inf)
    acc_ref[...] = jnp.maximum(
        acc_ref[...], jnp.max(h.reshape(tn // 8, 8, h.shape[-1]), axis=0))


def _tnet_tail(h64, nt, tn, n_valid, mask_rows,
               w2_ref, b2_ref, w3_ref, b3_ref,
               fw1_ref, fb1_ref, fw2_ref, fb2_ref, fw3_ref, fb3_ref,
               t_ref, acc_ref):
    """Shared TNet tail: conv2+relu -> conv3 (NO relu, matches TNet) -> running
    max; at the last point tile run the fc head (fc1+relu, fc2+relu, fc3 with
    the identity already folded into fb3) and emit the (1, k*k) transform."""
    @pl.when(nt == 0)
    def _():
        acc_ref[...] = jnp.full(acc_ref.shape, -jnp.inf, jnp.float32)

    h = jnp.dot(h64, w2_ref[...], preferred_element_type=jnp.float32) + b2_ref[...]
    h = jnp.maximum(h, 0.0).astype(jnp.bfloat16)                    # (TN, 128)
    h = jnp.dot(h, w3_ref[...], preferred_element_type=jnp.float32) + b3_ref[...]
    # (TN, 1024): bn3(conv3), no ReLU before the max (TNet semantics)

    _accumulate_max(acc_ref, h, nt, tn, n_valid, mask_rows)

    @pl.when(nt == pl.num_programs(1) - 1)
    def _():
        g = jnp.max(acc_ref[...], axis=0, keepdims=True).astype(jnp.bfloat16)
        z = jnp.dot(g, fw1_ref[...], preferred_element_type=jnp.float32) + fb1_ref[...]
        z = jnp.maximum(z, 0.0).astype(jnp.bfloat16)                # (1, 512)
        z = jnp.dot(z, fw2_ref[...], preferred_element_type=jnp.float32) + fb2_ref[...]
        z = jnp.maximum(z, 0.0).astype(jnp.bfloat16)                # (1, 256)
        z = jnp.dot(z, fw3_ref[...], preferred_element_type=jnp.float32) + fb3_ref[...]
        t_ref[0] = z                                                # (1, k*k)


# ------------------------- Pallas kernels -------------------------

def _tnet3_kernel(x_ref,
                  w1_ref, b1_ref, w2_ref, b2_ref, w3_ref, b3_ref,
                  fw1_ref, fb1_ref, fw2_ref, fb2_ref, fw3_ref, fb3_ref,
                  t_ref, acc_ref, *, n_valid, mask_rows):
    """TNet(k=3), trunk + head fused (conv1 on the VPU)."""
    nt = pl.program_id(1)
    tn = x_ref.shape[1]
    h64 = _mac3(x_ref[0], w1_ref[...], b1_ref[...])       # (TN, 64) conv1+bn1
    h64 = jnp.maximum(h64, 0.0).astype(jnp.bfloat16)
    _tnet_tail(h64, nt, tn, n_valid, mask_rows,
               w2_ref, b2_ref, w3_ref, b3_ref,
               fw1_ref, fb1_ref, fw2_ref, fb2_ref, fw3_ref, fb3_ref,
               t_ref, acc_ref)


def _tnet64_kernel(x_ref, t3_ref, ew1_ref, eb1_ref,
                   w1_ref, b1_ref, w2_ref, b2_ref, w3_ref, b3_ref,
                   fw1_ref, fb1_ref, fw2_ref, fb2_ref, fw3_ref, fb3_ref,
                   t_ref, acc_ref, *, n_valid, mask_rows):
    """TNet(k=64), trunk + head fused.  The (B, N, 64) encoder stage-1 tensor is
    never materialized: relu(bn1(conv1(x @ T3))) is recomputed here from the
    raw 12 B/point input, using (x @ T3) @ W1 == x @ (T3 @ W1)."""
    nt = pl.program_id(1)
    tn = x_ref.shape[1]
    w_eff = _mac3(t3_ref[0], ew1_ref[...])                # (3, 64) = T3 @ W1
    x64 = _mac3(x_ref[0], w_eff, eb1_ref[...])            # (TN, 64)
    x64 = jnp.maximum(x64, 0.0).astype(jnp.bfloat16)
    h64 = jnp.dot(x64, w1_ref[...], preferred_element_type=jnp.float32) + b1_ref[...]
    h64 = jnp.maximum(h64, 0.0).astype(jnp.bfloat16)      # (TN, 64) tnet64 conv1
    _tnet_tail(h64, nt, tn, n_valid, mask_rows,
               w2_ref, b2_ref, w3_ref, b3_ref,
               fw1_ref, fb1_ref, fw2_ref, fb2_ref, fw3_ref, fb3_ref,
               t_ref, acc_ref)


def _encoder_global_kernel(x_ref, t3_ref, ew1_ref, eb1_ref, t64_ref,
                           w2_ref, b2_ref, w3_ref, b3_ref,
                           g_ref, acc_ref, *, n_valid, mask_rows):
    """Encoder trunk: recompute stage-1, apply T64, conv2+relu, conv3+relu
    (encoder applies ReLU BEFORE the max), running max -> global feature.
    No point-feature output in this variant (saves the (B,N,64) writeback)."""
    nt = pl.program_id(1)
    tn = x_ref.shape[1]

    @pl.when(nt == 0)
    def _():
        acc_ref[...] = jnp.full(acc_ref.shape, -jnp.inf, jnp.float32)

    w_eff = _mac3(t3_ref[0], ew1_ref[...])
    x64 = _mac3(x_ref[0], w_eff, eb1_ref[...])
    x64 = jnp.maximum(x64, 0.0).astype(jnp.bfloat16)
    pf = jnp.dot(x64, t64_ref[0].astype(jnp.bfloat16),
                 preferred_element_type=jnp.float32)      # point features (TN, 64)
    h = jnp.dot(pf.astype(jnp.bfloat16), w2_ref[...],
                preferred_element_type=jnp.float32) + b2_ref[...]
    h = jnp.maximum(h, 0.0).astype(jnp.bfloat16)          # (TN, 128)
    h = jnp.dot(h, w3_ref[...], preferred_element_type=jnp.float32) + b3_ref[...]
    h = jnp.maximum(h, 0.0)                               # (TN, 1024), relu before max

    _accumulate_max(acc_ref, h, nt, tn, n_valid, mask_rows)

    @pl.when(nt == pl.num_programs(1) - 1)
    def _():
        g_ref[0] = jnp.max(acc_ref[...], axis=0, keepdims=True)


def _concat_kernel(x_ref, t3_ref, ew1_ref, eb1_ref, t64_ref, g_ref, o_ref):
    """[global feature (broadcast) | point features] along channels.  Point
    features are recomputed from the raw input (cheaper than re-reading a
    materialized (B,N,64) HBM tensor); output rows beyond N are masked by
    Pallas so no wrapper-side slice is needed."""
    tn = o_ref.shape[1]
    w_eff = _mac3(t3_ref[0], ew1_ref[...])
    x64 = _mac3(x_ref[0], w_eff, eb1_ref[...])
    x64 = jnp.maximum(x64, 0.0).astype(jnp.bfloat16)
    pf = jnp.dot(x64, t64_ref[0].astype(jnp.bfloat16),
                 preferred_element_type=jnp.float32)      # (TN, 64)
    g_rep = jnp.broadcast_to(g_ref[0], (tn, 1024))
    o_ref[0] = jnp.concatenate([g_rep, pf], axis=-1)      # (TN, 1088)


# ------------------------- pallas_call wrappers -------------------------

def _const2d(shape):
    return pl.BlockSpec(shape, lambda b, nt: (0, 0))


def tnet3_transform(x, p, *, tn, n_valid):
    """x: (B, N_pad, 3) -> T3: (B, 3, 3) f32 (trunk + head in one pallas_call)."""
    B, n_pad, _ = x.shape
    (w1, b1), (w2, b2), (w3, b3) = p["convs"]
    (fw1, fb1), (fw2, fb2), (fw3, fb3) = p["fcs"]
    kern = functools.partial(_tnet3_kernel, n_valid=n_valid,
                             mask_rows=(n_valid != n_pad))
    t = pl.pallas_call(
        kern,
        out_shape=jax.ShapeDtypeStruct((B, 1, 9), jnp.float32),
        grid=(B, n_pad // tn),
        in_specs=[
            pl.BlockSpec((1, tn, 3), lambda b, nt: (b, nt, 0)),
            _const2d((3, 64)), _const2d((1, 64)),
            _const2d((64, 128)), _const2d((1, 128)),
            _const2d((128, 1024)), _const2d((1, 1024)),
            _const2d((1024, 512)), _const2d((1, 512)),
            _const2d((512, 256)), _const2d((1, 256)),
            _const2d((256, 9)), _const2d((1, 9)),
        ],
        out_specs=pl.BlockSpec((1, 1, 9), lambda b, nt: (b, 0, 0)),
        scratch_shapes=[pltpu.VMEM((8, 1024), jnp.float32)],
        compiler_params=pltpu.CompilerParams(
            dimension_semantics=("parallel", "arbitrary"),
            vmem_limit_bytes=_VMEM_LIMIT),
    )(x, w1, b1, w2, b2, w3, b3, fw1, fb1, fw2, fb2, fw3, fb3)
    return t.reshape(B, 3, 3)


def tnet64_transform(x, t3, enc_conv1, p, *, tn, n_valid):
    """x: (B, N_pad, 3), t3: (B, 3, 3) -> T64: (B, 64, 64) f32."""
    B, n_pad, _ = x.shape
    ew1, eb1 = enc_conv1
    (w1, b1), (w2, b2), (w3, b3) = p["convs"]
    (fw1, fb1), (fw2, fb2), (fw3, fb3) = p["fcs"]
    kern = functools.partial(_tnet64_kernel, n_valid=n_valid,
                             mask_rows=(n_valid != n_pad))
    t = pl.pallas_call(
        kern,
        out_shape=jax.ShapeDtypeStruct((B, 1, 64 * 64), jnp.float32),
        grid=(B, n_pad // tn),
        in_specs=[
            pl.BlockSpec((1, tn, 3), lambda b, nt: (b, nt, 0)),
            pl.BlockSpec((1, 3, 3), lambda b, nt: (b, 0, 0)),
            _const2d((3, 64)), _const2d((1, 64)),
            _const2d((64, 64)), _const2d((1, 64)),
            _const2d((64, 128)), _const2d((1, 128)),
            _const2d((128, 1024)), _const2d((1, 1024)),
            _const2d((1024, 512)), _const2d((1, 512)),
            _const2d((512, 256)), _const2d((1, 256)),
            _const2d((256, 64 * 64)), _const2d((1, 64 * 64)),
        ],
        out_specs=pl.BlockSpec((1, 1, 64 * 64), lambda b, nt: (b, 0, 0)),
        scratch_shapes=[pltpu.VMEM((8, 1024), jnp.float32)],
        compiler_params=pltpu.CompilerParams(
            dimension_semantics=("parallel", "arbitrary"),
            vmem_limit_bytes=_VMEM_LIMIT),
    )(x, t3, ew1, eb1, w1, b1, w2, b2, w3, b3, fw1, fb1, fw2, fb2, fw3, fb3)
    return t.reshape(B, 64, 64)


def encoder_global(x, t3, enc_conv1, t64, conv2, conv3, *, tn, n_valid):
    """-> global max-pooled feature (B, 1, 1024) f32 (no point-feature output)."""
    B, n_pad, _ = x.shape
    ew1, eb1 = enc_conv1
    (w2, b2), (w3, b3) = conv2, conv3
    kern = functools.partial(_encoder_global_kernel, n_valid=n_valid,
                             mask_rows=(n_valid != n_pad))
    return pl.pallas_call(
        kern,
        out_shape=jax.ShapeDtypeStruct((B, 1, 1024), jnp.float32),
        grid=(B, n_pad // tn),
        in_specs=[
            pl.BlockSpec((1, tn, 3), lambda b, nt: (b, nt, 0)),
            pl.BlockSpec((1, 3, 3), lambda b, nt: (b, 0, 0)),
            _const2d((3, 64)), _const2d((1, 64)),
            pl.BlockSpec((1, 64, 64), lambda b, nt: (b, 0, 0)),
            _const2d((64, 128)), _const2d((1, 128)),
            _const2d((128, 1024)), _const2d((1, 1024)),
        ],
        out_specs=pl.BlockSpec((1, 1, 1024), lambda b, nt: (b, 0, 0)),
        scratch_shapes=[pltpu.VMEM((8, 1024), jnp.float32)],
        compiler_params=pltpu.CompilerParams(
            dimension_semantics=("parallel", "arbitrary"),
            vmem_limit_bytes=_VMEM_LIMIT),
    )(x, t3, ew1, eb1, t64, w2, b2, w3, b3)


def concat_global_point(x, t3, enc_conv1, t64, g, *, tn, n_valid):
    """-> (B, N, 1088) channels-last [global | point features], f32."""
    B, n_pad, _ = x.shape
    ew1, eb1 = enc_conv1
    return pl.pallas_call(
        _concat_kernel,
        out_shape=jax.ShapeDtypeStruct((B, n_valid, 1088), jnp.float32),
        grid=(B, n_pad // tn),
        in_specs=[
            pl.BlockSpec((1, tn, 3), lambda b, nt: (b, nt, 0)),
            pl.BlockSpec((1, 3, 3), lambda b, nt: (b, 0, 0)),
            _const2d((3, 64)), _const2d((1, 64)),
            pl.BlockSpec((1, 64, 64), lambda b, nt: (b, 0, 0)),
            pl.BlockSpec((1, 1, 1024), lambda b, nt: (b, 0, 0)),
        ],
        out_specs=pl.BlockSpec((1, tn, 1088), lambda b, nt: (b, nt, 0)),
        compiler_params=pltpu.CompilerParams(
            dimension_semantics=("parallel", "parallel"),
            vmem_limit_bytes=_VMEM_LIMIT),
    )(x, t3, ew1, eb1, t64, g)


# ------------------------- Parameter setup (deterministic) -------------------------

def _init_dense(key, out_c, in_c, scale=0.1):
    kw, kb = jax.random.split(key)
    w = scale * jax.random.normal(kw, (out_c, in_c), jnp.float32)   # torch (out, in)
    b = scale * jax.random.normal(kb, (out_c,), jnp.float32)
    return w, b


def _init_bn(key, c):
    k1, k2, k3, k4 = jax.random.split(key, 4)
    gamma = 1.0 + 0.1 * jax.random.normal(k1, (c,), jnp.float32)
    beta = 0.1 * jax.random.normal(k2, (c,), jnp.float32)
    mean = 0.1 * jax.random.normal(k3, (c,), jnp.float32)
    var = 1.0 + 0.1 * jnp.abs(jax.random.normal(k4, (c,), jnp.float32))
    return gamma, beta, mean, var


def _bn_fold(w, b, bn, w_dtype=jnp.bfloat16):
    """Fold BatchNorm1d (inference, running stats) into the preceding 1x1 conv /
    linear.  Returns (W (in, out), bias (1, out) f32).  Depth-3 weights stay
    f32 since they run on the VPU, not the MXU."""
    gamma, beta, mean, var = bn
    scale = gamma / jnp.sqrt(var + BN_EPS)
    w_eff = (w * scale[:, None]).T.astype(w_dtype)        # (in, out)
    b_eff = ((b - mean) * scale + beta).reshape(1, -1)    # (1, out) f32
    return w_eff, b_eff


def init_tnet(key, k):
    keys = jax.random.split(key, 11)
    conv_dims = [(64, k), (128, 64), (1024, 128)]
    fc_dims = [(512, 1024), (256, 512)]
    convs, fcs = [], []
    i = 0
    for oc, ic in conv_dims:
        w, b = _init_dense(keys[i], oc, ic)
        bn = _init_bn(keys[i + 1], oc)
        convs.append(_bn_fold(w, b, bn, jnp.float32 if ic == 3 else jnp.bfloat16))
        i += 2
    for oc, ic in fc_dims:
        w, b = _init_dense(keys[i], oc, ic)
        bn = _init_bn(keys[i + 1], oc)
        fcs.append(_bn_fold(w, b, bn))
        i += 2
    w3, b3 = _init_dense(keys[i], k * k, 256)                  # fc3: no BN
    b3 = b3 + jnp.eye(k, dtype=jnp.float32).reshape(-1)        # fold "+ identity" into bias
    fcs.append((w3.T.astype(jnp.bfloat16), b3.reshape(1, -1)))
    return {"convs": convs, "fcs": fcs, "k": k}


def init_pointnet(key, return_point_features=False):
    keys = jax.random.split(key, 8)
    params = {"tnet3": init_tnet(keys[0], 3), "tnet64": init_tnet(keys[1], 64)}
    dims = [(64, 3), (128, 64), (1024, 128)]
    convs = []
    for i, (oc, ic) in enumerate(dims):
        w, b = _init_dense(keys[2 + 2 * i], oc, ic)
        bn = _init_bn(keys[3 + 2 * i], oc)
        convs.append(_bn_fold(w, b, bn, jnp.float32 if ic == 3 else jnp.bfloat16))
    params["convs"] = convs
    params["return_point_features"] = return_point_features
    return params


# ------------------------- Forward pass -------------------------

def pointnet_encoder_forward(x_bcn, p):
    """x_bcn: (B, 3, N) — PyTorch NCW layout.  Returns the (B, 1024) global
    feature, or the channels-last (B, N, 1088) [global | point-features] slab
    when return_point_features (PyTorch returns the NCW transpose of this)."""
    B, C, N = x_bcn.shape
    assert C == 3
    tn, n_pad = _pick_point_tile(N)

    x = jnp.transpose(x_bcn, (0, 2, 1))                    # (B, N, 3) channels-last
    if n_pad != N:
        x = jnp.pad(x, ((0, 0), (0, n_pad - N), (0, 0)))   # masked in the kernels

    t3 = tnet3_transform(x, p["tnet3"], tn=tn, n_valid=N)                       # (B, 3, 3)
    t64 = tnet64_transform(x, t3, p["convs"][0], p["tnet64"], tn=tn, n_valid=N)  # (B, 64, 64)
    g = encoder_global(x, t3, p["convs"][0], t64, p["convs"][1], p["convs"][2],
                       tn=tn, n_valid=N)                                        # (B, 1, 1024)

    if p["return_point_features"]:
        return concat_global_point(x, t3, p["convs"][0], t64, g, tn=tn, n_valid=N)
    return g.reshape(B, 1024)


# ------------------------- Main -------------------------

if __name__ == "__main__":
    key = jax.random.PRNGKey(0)
    kp, kx = jax.random.split(key)

    B, N = 2, 16
    x = jax.random.normal(kx, (B, 3, N), jnp.float32)      # PyTorch NCW input (B, 3, N)

    params = init_pointnet(kp, return_point_features=False)
    out = pointnet_encoder_forward(x, params)
    jax.block_until_ready(out)
    assert out.shape == (B, 1024), out.shape
    assert out.dtype == jnp.float32

    params_pf = dict(params, return_point_features=True)
    out_pf = pointnet_encoder_forward(x, params_pf)
    jax.block_until_ready(out_pf)
    assert out_pf.shape == (B, N, 1088), out_pf.shape

    print("KERNEL_OK")
</pallas_src>

<mosaic_0001>
module attributes {stable_mosaic.version = 11 : i64} {
  func.func @_tnet3_kernel(%arg0: i32, %arg1: i32, %arg2: memref<1x16x3xf32, #tpu.memory_space<vmem>>, %arg3: memref<3x64xf32, #tpu.memory_space<vmem>>, %arg4: memref<1x64xf32, #tpu.memory_space<vmem>>, %arg5: memref<64x128xbf16, #tpu.memory_space<vmem>>, %arg6: memref<1x128xf32, #tpu.memory_space<vmem>>, %arg7: memref<128x1024xbf16, #tpu.memory_space<vmem>>, %arg8: memref<1x1024xf32, #tpu.memory_space<vmem>>, %arg9: memref<1024x512xbf16, #tpu.memory_space<vmem>>, %arg10: memref<1x512xf32, #tpu.memory_space<vmem>>, %arg11: memref<512x256xbf16, #tpu.memory_space<vmem>>, %arg12: memref<1x256xf32, #tpu.memory_space<vmem>>, %arg13: memref<256x9xbf16, #tpu.memory_space<vmem>>, %arg14: memref<1x9xf32, #tpu.memory_space<vmem>>, %arg15: memref<1x1x9xf32, #tpu.memory_space<vmem>>, %arg16: memref<8x1024xf32, #tpu.memory_space<vmem>>) attributes {dimension_semantics = [#tpu.dimension_semantics<parallel>, #tpu.dimension_semantics<arbitrary>], iteration_bounds = array<i64: 2, 1>, scalar_prefetch = 0 : i64, scratch_operands = 1 : i64, tpu.core_type = #tpu.core_type<tc>, window_params = [{transform_indices = @transform_0, window_bounds = array<i64: 1, 16, 3>}, {pipeline_mode = #tpu.pipeline_mode<synchronous>, transform_indices = @transform_1, window_bounds = array<i64: 3, 64>}, {pipeline_mode = #tpu.pipeline_mode<synchronous>, transform_indices = @transform_2, window_bounds = array<i64: 1, 64>}, {pipeline_mode = #tpu.pipeline_mode<synchronous>, transform_indices = @transform_3, window_bounds = array<i64: 64, 128>}, {pipeline_mode = #tpu.pipeline_mode<synchronous>, transform_indices = @transform_4, window_bounds = array<i64: 1, 128>}, {pipeline_mode = #tpu.pipeline_mode<synchronous>, transform_indices = @transform_5, window_bounds = array<i64: 128, 1024>}, {pipeline_mode = #tpu.pipeline_mode<synchronous>, transform_indices = @transform_6, window_bounds = array<i64: 1, 1024>}, {pipeline_mode = #tpu.pipeline_mode<synchronous>, transform_indices = @transform_7, window_bounds = array<i64: 1024, 512>}, {pipeline_mode = #tpu.pipeline_mode<synchronous>, transform_indices = @transform_8, window_bounds = array<i64: 1, 512>}, {pipeline_mode = #tpu.pipeline_mode<synchronous>, transform_indices = @transform_9, window_bounds = array<i64: 512, 256>}, {pipeline_mode = #tpu.pipeline_mode<synchronous>, transform_indices = @transform_10, window_bounds = array<i64: 1, 256>}, {pipeline_mode = #tpu.pipeline_mode<synchronous>, transform_indices = @transform_11, window_bounds = array<i64: 256, 9>}, {pipeline_mode = #tpu.pipeline_mode<synchronous>, transform_indices = @transform_12, window_bounds = array<i64: 1, 9>}, {transform_indices = @transform_13, window_bounds = array<i64: 1, 1, 9>}]} {
    %c0 = arith.constant 0 : index
    %c0_0 = arith.constant 0 : index
    %c0_1 = arith.constant 0 : index
    %0 = vector.load %arg2[%c0, %c0_0, %c0_1] : memref<1x16x3xf32, #tpu.memory_space<vmem>>, vector<1x16x3xf32>
    %1 = vector.shape_cast %0 : vector<1x16x3xf32> to vector<16x3xf32>
    %c0_2 = arith.constant 0 : index
    %c0_3 = arith.constant 0 : index
    %2 = vector.load %arg3[%c0_2, %c0_3] : memref<3x64xf32, #tpu.memory_space<vmem>>, vector<3x64xf32>
    %c0_4 = arith.constant 0 : index
    %c0_5 = arith.constant 0 : index
    %3 = vector.load %arg4[%c0_4, %c0_5] : memref<1x64xf32, #tpu.memory_space<vmem>>, vector<1x64xf32>
    %4 = vector.extract_strided_slice %1 {offsets = [0, 0], sizes = [16, 1], strides = [1, 1]} : vector<16x3xf32> to vector<16x1xf32>
    %5 = vector.extract_strided_slice %2 {offsets = [0, 0], sizes = [1, 64], strides = [1, 1]} : vector<3x64xf32> to vector<1x64xf32>
    %6 = vector.broadcast %4 : vector<16x1xf32> to vector<16x64xf32>
    %7 = vector.broadcast %5 : vector<1x64xf32> to vector<16x64xf32>
    %8 = arith.mulf %6, %7 : vector<16x64xf32>
    %9 = vector.extract_strided_slice %1 {offsets = [0, 1], sizes = [16, 1], strides = [1, 1]} : vector<16x3xf32> to vector<16x1xf32>
    %10 = vector.extract_strided_slice %2 {offsets = [1, 0], sizes = [1, 64], strides = [1, 1]} : vector<3x64xf32> to vector<1x64xf32>
    %11 = vector.broadcast %9 : vector<16x1xf32> to vector<16x64xf32>
    %12 = vector.broadcast %10 : vector<1x64xf32> to vector<16x64xf32>
    %13 = arith.mulf %11, %12 : vector<16x64xf32>
    %14 = arith.addf %8, %13 : vector<16x64xf32>
    %15 = vector.extract_strided_slice %1 {offsets = [0, 2], sizes = [16, 1], strides = [1, 1]} : vector<16x3xf32> to vector<16x1xf32>
    %16 = vector.extract_strided_slice %2 {offsets = [2, 0], sizes = [1, 64], strides = [1, 1]} : vector<3x64xf32> to vector<1x64xf32>
    %17 = vector.broadcast %15 : vector<16x1xf32> to vector<16x64xf32>
    %18 = vector.broadcast %16 : vector<1x64xf32> to vector<16x64xf32>
    %19 = arith.mulf %17, %18 : vector<16x64xf32>
    %20 = arith.addf %14, %19 : vector<16x64xf32>
    %21 = vector.broadcast %3 : vector<1x64xf32> to vector<16x64xf32>
    %22 = arith.addf %20, %21 : vector<16x64xf32>
    %cst = arith.constant 0.000000e+00 : f32
    %23 = vector.broadcast %cst : f32 to vector<16x64xf32>
    %24 = arith.maximumf %22, %23 : vector<16x64xf32>
    %25 = arith.truncf %24 : vector<16x64xf32> to vector<16x64xbf16>
    %c0_i32 = arith.constant 0 : i32
    %26 = arith.cmpi eq, %arg1, %c0_i32 : i32
    %27 = arith.extui %26 : i1 to i32
    %c0_i32_6 = arith.constant 0 : i32
    %28 = arith.cmpi ne, %27, %c0_i32_6 : i32
    scf.if %28 {
      %cst_25 = arith.constant 0xFF800000 : f32
      %50 = vector.broadcast %cst_25 : f32 to vector<8x1024xf32>
      %c0_26 = arith.constant 0 : index
      %c0_27 = arith.constant 0 : index
      %51 = vector.load %arg16[%c0_26, %c0_27] : memref<8x1024xf32, #tpu.memory_space<vmem>>, vector<8x1024xf32>
      tpu.vector_store %arg16[%c0_26, %c0_27], %50 {strides = array<i32>} : memref<8x1024xf32, #tpu.memory_space<vmem>>, vector<8x1024xf32>,
    } else {
    }
    %c0_7 = arith.constant 0 : index
    %c0_8 = arith.constant 0 : index
    %29 = vector.load %arg5[%c0_7, %c0_8] : memref<64x128xbf16, #tpu.memory_space<vmem>>, vector<64x128xbf16>
    %cst_9 = arith.constant dense<0.000000e+00> : vector<16x128xf32>
    %30 = tpu.matmul %25, %29, %cst_9 {dimension_numbers = #tpu.dot_dimension_numbers<[1], [0], [0], [1], [0, 0, 1, 1], [], []>} : vector<16x64xbf16>, vector<64x128xbf16>, vector<16x128xf32> -> vector<16x128xf32>
    %c0_10 = arith.constant 0 : index
    %c0_11 = arith.constant 0 : index
    %31 = vector.load %arg6[%c0_10, %c0_11] : memref<1x128xf32, #tpu.memory_space<vmem>>, vector<1x128xf32>
    %32 = vector.broadcast %31 : vector<1x128xf32> to vector<16x128xf32>
    %33 = arith.addf %30, %32 : vector<16x128xf32>
    %cst_12 = arith.constant 0.000000e+00 : f32
    %34 = vector.broadcast %cst_12 : f32 to vector<16x128xf32>
    %35 = arith.maximumf %33, %34 : vector<16x128xf32>
    %36 = arith.truncf %35 : vector<16x128xf32> to vector<16x128xbf16>
    %c0_13 = arith.constant 0 : index
    %c0_14 = arith.constant 0 : index
    %37 = vector.load %arg7[%c0_13, %c0_14] : memref<128x1024xbf16, #tpu.memory_space<vmem>>, vector<128x1024xbf16>
    %cst_15 = arith.constant dense<0.000000e+00> : vector<16x1024xf32>
    %38 = tpu.matmul %36, %37, %cst_15 {dimension_numbers = #tpu.dot_dimension_numbers<[1], [0], [0], [1], [0, 0, 1, 1], [], []>} : vector<16x128xbf16>, vector<128x1024xbf16>, vector<16x1024xf32> -> vector<16x1024xf32>
    %c0_16 = arith.constant 0 : index
    %c0_17 = arith.constant 0 : index
    %39 = vector.load %arg8[%c0_16, %c0_17] : memref<1x1024xf32, #tpu.memory_space<vmem>>, vector<1x1024xf32>
    %40 = vector.broadcast %39 : vector<1x1024xf32> to vector<16x1024xf32>
    %41 = arith.addf %38, %40 : vector<16x1024xf32>
    %c0_18 = arith.constant 0 : index
    %c0_19 = arith.constant 0 : index
    %42 = vector.load %arg16[%c0_18, %c0_19] : memref<8x1024xf32, #tpu.memory_space<vmem>>, vector<8x1024xf32>
    %43 = vector.shape_cast %41 : vector<16x1024xf32> to vector<2x8x1024xf32>
    %cst_20 = arith.constant dense<0xFF800000> : vector<8x1024xf32>
    %44 = vector.multi_reduction <maximumf>, %43, %cst_20 [0] : vector<2x8x1024xf32> to vector<8x1024xf32>
    %45 = arith.maximumf %42, %44 : vector<8x1024xf32>
    %c0_21 = arith.constant 0 : index
    %c0_22 = arith.constant 0 : index
    %46 = vector.load %arg16[%c0_21, %c0_22] : memref<8x1024xf32, #tpu.memory_space<vmem>>, vector<8x1024xf32>
    tpu.vector_store %arg16[%c0_21, %c0_22], %45 {strides = array<i32>} : memref<8x1024xf32, #tpu.memory_space<vmem>>, vector<8x1024xf32>,
    %c0_i32_23 = arith.constant 0 : i32
    %47 = arith.cmpi eq, %arg1, %c0_i32_23 : i32
    %48 = arith.extui %47 : i1 to i32
    %c0_i32_24 = arith.constant 0 : i32
    %49 = arith.cmpi ne, %48, %c0_i32_24 : i32
    scf.if %49 {
      %c0_25 = arith.constant 0 : index
      %c0_26 = arith.constant 0 : index
      %50 = vector.load %arg16[%c0_25, %c0_26] : memref<8x1024xf32, #tpu.memory_space<vmem>>, vector<8x1024xf32>
      %cst_27 = arith.constant dense<0xFF800000> : vector<1024xf32>
      %51 = vector.multi_reduction <maximumf>, %50, %cst_27 [0] : vector<8x1024xf32> to vector<1024xf32>
      %52 = vector.shape_cast %51 : vector<1024xf32> to vector<1x1024xf32>
      %53 = arith.truncf %52 : vector<1x1024xf32> to vector<1x1024xbf16>
      %c0_28 = arith.constant 0 : index
      %c0_29 = arith.constant 0 : index
      %54 = vector.load %arg9[%c0_28, %c0_29] : memref<1024x512xbf16, #tpu.memory_space<vmem>>, vector<1024x512xbf16>
      %cst_30 = arith.constant dense<0.000000e+00> : vector<1x512xf32>
      %55 = tpu.matmul %53, %54, %cst_30 {dimension_numbers = #tpu.dot_dimension_numbers<[1], [0], [0], [1], [0, 0, 1, 1], [], []>} : vector<1x1024xbf16>, vector<1024x512xbf16>, vector<1x512xf32> -> vector<1x512xf32>
      %c0_31 = arith.constant 0 : index
      %c0_32 = arith.constant 0 : index
      %56 = vector.load %arg10[%c0_31, %c0_32] : memref<1x512xf32, #tpu.memory_space<vmem>>, vector<1x512xf32>
      %57 = arith.addf %55, %56 : vector<1x512xf32>
      %cst_33 = arith.constant 0.000000e+00 : f32
      %58 = vector.broadcast %cst_33 : f32 to vector<1x512xf32>
      %59 = arith.maximumf %57, %58 : vector<1x512xf32>
      %60 = arith.truncf %59 : vector<1x512xf32> to vector<1x512xbf16>
      %c0_34 = arith.constant 0 : index
      %c0_35 = arith.constant 0 : index
      %61 = vector.load %arg11[%c0_34, %c0_35] : memref<512x256xbf16, #tpu.memory_space<vmem>>, vector<512x256xbf16>
      %cst_36 = arith.constant dense<0.000000e+00> : vector<1x256xf32>
      %62 = tpu.matmul %60, %61, %cst_36 {dimension_numbers = #tpu.dot_dimension_numbers<[1], [0], [0], [1], [0, 0, 1, 1], [], []>} : vector<1x512xbf16>, vector<512x256xbf16>, vector<1x256xf32> -> vector<1x256xf32>
      %c0_37 = arith.constant 0 : index
      %c0_38 = arith.constant 0 : index
      %63 = vector.load %arg12[%c0_37, %c0_38] : memref<1x256xf32, #tpu.memory_space<vmem>>, vector<1x256xf32>
      %64 = arith.addf %62, %63 : vector<1x256xf32>
      %cst_39 = arith.constant 0.000000e+00 : f32
      %65 = vector.broadcast %cst_39 : f32 to vector<1x256xf32>
      %66 = arith.maximumf %64, %65 : vector<1x256xf32>
      %67 = arith.truncf %66 : vector<1x256xf32> to vector<1x256xbf16>
      %c0_40 = arith.constant 0 : index
      %c0_41 = arith.constant 0 : index
      %68 = vector.load %arg13[%c0_40, %c0_41] : memref<256x9xbf16, #tpu.memory_space<vmem>>, vector<256x9xbf16>
      %cst_42 = arith.constant dense<0.000000e+00> : vector<1x9xf32>
      %69 = tpu.matmul %67, %68, %cst_42 {dimension_numbers = #tpu.dot_dimension_numbers<[1], [0], [0], [1], [0, 0, 1, 1], [], []>} : vector<1x256xbf16>, vector<256x9xbf16>, vector<1x9xf32> -> vector<1x9xf32>
      %c0_43 = arith.constant 0 : index
      %c0_44 = arith.constant 0 : index
      %70 = vector.load %arg14[%c0_43, %c0_44] : memref<1x9xf32, #tpu.memory_space<vmem>>, vector<1x9xf32>
      %71 = arith.addf %69, %70 : vector<1x9xf32>
      %c0_45 = arith.constant 0 : index
      %c0_46 = arith.constant 0 : index
      %c0_47 = arith.constant 0 : index
      %72 = vector.load %arg15[%c0_45, %c0_46, %c0_47] : memref<1x1x9xf32, #tpu.memory_space<vmem>>, vector<1x1x9xf32>
      %73 = vector.shape_cast %72 : vector<1x1x9xf32> to vector<1x9xf32>
      %74 = vector.shape_cast %71 : vector<1x9xf32> to vector<1x1x9xf32>
      tpu.vector_store %arg15[%c0_45, %c0_46, %c0_47], %74 {strides = array<i32>} : memref<1x1x9xf32, #tpu.memory_space<vmem>>, vector<1x1x9xf32>,
    } else {
    }
    return
  }
  func.func @transform_0(%arg0: i32, %arg1: i32) -> (i32, i32, i32) {
    %c0_i32 = arith.constant 0 : i32
    %c0_i32_0 = arith.constant 0 : i32
    return %arg0, %arg1, %c0_i32 : i32, i32, i32
  }
  func.func @transform_1(%arg0: i32, %arg1: i32) -> (i32, i32) {
    %c0_i32 = arith.constant 0 : i32
    %c0_i32_0 = arith.constant 0 : i32
    %c0_i32_1 = arith.constant 0 : i32
    return %c0_i32, %c0_i32_0 : i32, i32
  }
  func.func @transform_2(%arg0: i32, %arg1: i32) -> (i32, i32) {
    %c0_i32 = arith.constant 0 : i32
    %c0_i32_0 = arith.constant 0 : i32
    %c0_i32_1 = arith.constant 0 : i32
    return %c0_i32, %c0_i32_0 : i32, i32
  }
  func.func @transform_3(%arg0: i32, %arg1: i32) -> (i32, i32) {
    %c0_i32 = arith.constant 0 : i32
    %c0_i32_0 = arith.constant 0 : i32
    %c0_i32_1 = arith.constant 0 : i32
    return %c0_i32, %c0_i32_0 : i32, i32
  }
  func.func @transform_4(%arg0: i32, %arg1: i32) -> (i32, i32) {
    %c0_i32 = arith.constant 0 : i32
    %c0_i32_0 = arith.constant 0 : i32
    %c0_i32_1 = arith.constant 0 : i32
    return %c0_i32, %c0_i32_0 : i32, i32
  }
  func.func @transform_5(%arg0: i32, %arg1: i32) -> (i32, i32) {
    %c0_i32 = arith.constant 0 : i32
    %c0_i32_0 = arith.constant 0 : i32
    %c0_i32_1 = arith.constant 0 : i32
    return %c0_i32, %c0_i32_0 : i32, i32
  }
  func.func @transform_6(%arg0: i32, %arg1: i32) -> (i32, i32) {
    %c0_i32 = arith.constant 0 : i32
    %c0_i32_0 = arith.constant 0 : i32
    %c0_i32_1 = arith.constant 0 : i32
    return %c0_i32, %c0_i32_0 : i32, i32
  }
  func.func @transform_7(%arg0: i32, %arg1: i32) -> (i32, i32) {
    %c0_i32 = arith.constant 0 : i32
    %c0_i32_0 = arith.constant 0 : i32
    %c0_i32_1 = arith.constant 0 : i32
    return %c0_i32, %c0_i32_0 : i32, i32
  }
  func.func @transform_8(%arg0: i32, %arg1: i32) -> (i32, i32) {
    %c0_i32 = arith.constant 0 : i32
    %c0_i32_0 = arith.constant 0 : i32
    %c0_i32_1 = arith.constant 0 : i32
    return %c0_i32, %c0_i32_0 : i32, i32
  }
  func.func @transform_9(%arg0: i32, %arg1: i32) -> (i32, i32) {
    %c0_i32 = arith.constant 0 : i32
    %c0_i32_0 = arith.constant 0 : i32
    %c0_i32_1 = arith.constant 0 : i32
    return %c0_i32, %c0_i32_0 : i32, i32
  }
  func.func @transform_10(%arg0: i32, %arg1: i32) -> (i32, i32) {
    %c0_i32 = arith.constant 0 : i32
    %c0_i32_0 = arith.constant 0 : i32
    %c0_i32_1 = arith.constant 0 : i32
    return %c0_i32, %c0_i32_0 : i32, i32
  }
  func.func @transform_11(%arg0: i32, %arg1: i32) -> (i32, i32) {
    %c0_i32 = arith.constant 0 : i32
    %c0_i32_0 = arith.constant 0 : i32
    %c0_i32_1 = arith.constant 0 : i32
    return %c0_i32, %c0_i32_0 : i32, i32
  }
  func.func @transform_12(%arg0: i32, %arg1: i32) -> (i32, i32) {
    %c0_i32 = arith.constant 0 : i32
    %c0_i32_0 = arith.constant 0 : i32
    %c0_i32_1 = arith.constant 0 : i32
    return %c0_i32, %c0_i32_0 : i32, i32
  }
  func.func @transform_13(%arg0: i32, %arg1: i32) -> (i32, i32, i32) {
    %c0_i32 = arith.constant 0 : i32
    %c0_i32_0 = arith.constant 0 : i32
    %c0_i32_1 = arith.constant 0 : i32
    return %arg0, %c0_i32, %c0_i32_0 : i32, i32, i32
  }
}

</mosaic_0001>

<llo_original>
// kernel: tpu_custom_call.1
$region0: #{tpu_custom_call.1}
  #allocation0 [shape = 'u32[]', space=smem, size = 0x4, offset = 0x4, fixed_abs, tag = 'smem constant byte address 0x4 - core index']
  #allocation1 [shape = 'u32[144,128]{1,0:T(1,128)}', space=vmem, size = 0x12000, scoped, tag = 'internal scratch']
  #allocation2 [shape = 'f32[8,1024]{1,0:T(8,128)}', space=vmem, size = 0x8000, scoped, tag = 'scratch operand']
  %s0 = inlined_call_operand.vmem [shape: f32[2,16,3], index: 0, kind: input, shape index: {}]
  %s1 = inlined_call_operand.vmem [shape: f32[3,64], index: 1, kind: input, shape index: {}]
  %s2 = inlined_call_operand.vmem [shape: f32[1,64], index: 2, kind: input, shape index: {}]
  %s3 = inlined_call_operand.vmem [shape: bf16[64,128], index: 3, kind: input, shape index: {}]
  %s4 = inlined_call_operand.vmem [shape: f32[1,128], index: 4, kind: input, shape index: {}]
  %s5 = inlined_call_operand.hbm [shape: bf16[128,1024], index: 5, kind: input, shape index: {}]
  %s6 = inlined_call_operand.vmem [shape: f32[1,1024], index: 6, kind: input, shape index: {}]
  %s7 = inlined_call_operand.hbm [shape: bf16[1024,512], index: 7, kind: input, shape index: {}]
  %s8 = inlined_call_operand.vmem [shape: f32[1,512], index: 8, kind: input, shape index: {}]
  %s9 = inlined_call_operand.hbm [shape: bf16[512,256], index: 9, kind: input, shape index: {}]
  %s10 = inlined_call_operand.vmem [shape: f32[1,256], index: 10, kind: input, shape index: {}]
  %s11 = inlined_call_operand.vmem [shape: bf16[256,9], index: 11, kind: input, shape index: {}]
  %s12 = inlined_call_operand.vmem [shape: f32[1,9], index: 12, kind: input, shape index: {}]
  %s13 = inlined_call_operand.hbm [shape: f32[2,1,9], index: 13, kind: output, shape index: {}]
  %s14 = sld [smem:[#allocation0]]
  $region105: #{tpu_custom_call.1} parent=0
    _
  %s16 = ssub.s32 1, %s14
  %s17 = scalar_select 0, %s16, %s14
  $region1: #{tpu_custom_call.1} parent=0
    #allocation3 [shape = 'u8[262144]{0}', space=vmem, size = 0x40000, scoped, tag = 'input window, operand 5, single buffered']
    #allocation4 [shape = 's32[2]{0}', space=sflag, size = 0x8, scoped, tag = 'scoped memory for tpu_custom_call.1']
    #allocation5 [shape = 's32[2]{0}', space=sflag, size = 0x8, scoped, tag = 'scoped memory for tpu_custom_call.1']
    #allocation6 [shape = 'u8[1048576]{0}', space=vmem, size = 0x100000, scoped, tag = 'input window, operand 7, single buffered']
    #allocation7 [shape = 's32[1]{0}', space=sflag, size = 0x4, scoped, tag = 'scoped memory for tpu_custom_call.1']
    #allocation8 [shape = 'u8[262144]{0}', space=vmem, size = 0x40000, scoped, tag = 'input window, operand 9, single buffered']
    #allocation9 [shape = 'u8[1024]{0}', space=vmem, size = 0x400, scoped, tag = 'output window, operand 0']
    %18 = vsyncpa [#allocation4], 0
    %19 = vsyncpa [#allocation7], 0
    %20 = vsyncpa [#allocation5], 0
    %s21 = scalar_lea.sflag [#allocation5], 1
    %22 = vsyncpa %s21, 0
    loop: start=0, step=1, limit=4
    $region2: #{tpu_custom_call.1} parent=1 // loop_pre_header
      _
    $region3: #{tpu_custom_call.1} parent=1 // loop_header
      %s24 = sphi 0, %s28
      %p25 = scmp.ge.s32.totalorder %s24, 4
      %s31 = sphi 0, %s43
      %s32 = sphi 0, %s39
      %s33 = sphi 0, %s31
      %s34 = sphi 0, %s32
      %s35 = sphi 0, %s33
      %s36 = sphi 0, %s34
      %s48 = sphi 0, %s50
      %s51 = sphi 0, %s48
      %s52 = sphi 0, %s51
      %s68 = sphi 0, %s52
      %s72 = sphi 0, %s72
      %s74 = sphi 0, %s72
      %s75 = sphi 0, %s74
      %s89 = sphi 0, %s75
      %s93 = sphi 0, %s93
      %s95 = sphi 0, %s93
      %s96 = sphi 0, %s95
      %s110 = sphi 0, %s96
      %s114 = sphi 0, %s114
      %s116 = sphi 0, %s114
      %s117 = sphi 0, %s116
      %s131 = sphi 0, %s117
      %s135 = sphi 0, %s135
      %s137 = sphi 0, %s135
      %s138 = sphi 0, %s137
      %s152 = sphi 0, %s138
      %s156 = sphi 0, %s156
      %s158 = sphi 0, %s156
      %s159 = sphi 0, %s158
      %s173 = sphi 0, %s159
      %s177 = sphi 0, %s177
      %s179 = sphi 0, %s177
      %s180 = sphi 0, %s179
      %s194 = sphi 0, %s180
      %s198 = sphi 0, %s198
      %s200 = sphi 0, %s198
      %s201 = sphi 0, %s200
      %s215 = sphi 0, %s201
      %s219 = sphi 0, %s219
      %s221 = sphi 0, %s219
      %s222 = sphi 0, %s221
      %s236 = sphi 0, %s222
      %s240 = sphi 0, %s240
      %s242 = sphi 0, %s240
      %s243 = sphi 0, %s242
      %s257 = sphi 0, %s243
      %s261 = sphi 0, %s261
      %s263 = sphi 0, %s261
      %s264 = sphi 0, %s263
      %s278 = sphi 0, %s264
      %s282 = sphi 0, %s282
      %s284 = sphi 0, %s282
      %s285 = sphi 0, %s284
      %s299 = sphi 0, %s285
      %s303 = sphi 0, %s303
      %s305 = sphi 0, %s303
      %s306 = sphi 0, %s305
      %s320 = sphi 0, %s306
      %s326 = sphi 0, %s328
      %s329 = sphi 0, %s326
      %s330 = sphi 0, %s329
      %s346 = sphi 0, %s330
    $region4: #{tpu_custom_call.1} parent=1 // loop_header_branch
      %27 = sbr.rel (%p25) target = $region8
    $region5: #{tpu_custom_call.1} parent=1 // loop_body
      %s29 = ssub.s32 %s24, 1
      %s30 = ssub.s32 %s24, 2
      %s37 = sadd.s32 1, %s32
      %p38 = scmp.ge.s32.totalorder %s37, 1
      %s39 = scalar_select %p38, 0, %s37
      %s40 = sadd.s32 1, %s31
      %s41 = scalar_select %p38, %s40, %s31
      %p42 = scmp.ge.s32.totalorder %s41, 2
      %s43 = scalar_select %p42, 0, %s41
      %s44 = ssub.s32 %s31, %s43
      %s45 = ssub.s32 %s32, %s39
      %s46 = sor.u32 %s44, %s45
      %p47 = scmp.eq.s32.totalorder %s46, 0
      %s49 = sadd.s32 %s48, 1
      %s50 = scalar_select %p47, %s48, %s49
      %p53 = pneg %p47
      %p54 = scmp.eq.s32.totalorder %s24, 1
      %p55 = por %p53, %p54
      %p56 = scmp.ne.s32.totalorder %s48, %s51
      %p57 = scmp.eq.s32.totalorder %s24, 0
      %p58 = por %p56, %p57
      %p59 = scmp.ne.s32.totalorder %s48, %s51
      %p60 = scmp.eq.s32.totalorder %s29, 1
      %p61 = por %p59, %p60
      %p62 = scmp.ne.s32.totalorder %s51, %s52
      %p63 = scmp.eq.s32.totalorder %s29, 0
      %p64 = por %p62, %p63
      %p65 = scmp.ne.s32.totalorder %s51, %s52
      %p66 = scmp.eq.s32.totalorder %s30, 1
      %p67 = por %p65, %p66
      %p69 = scmp.ne.s32.totalorder %s52, %s68
      %p70 = scmp.eq.s32.totalorder %s30, 0
      %p71 = por %p69, %p70
      %s73 = sadd.s32 %s72, 1
      %p76 = scmp.eq.s32.totalorder %s24, 1
      %p77 = scmp.ne.s32.totalorder %s72, %s74
      %p78 = scmp.eq.s32.totalorder %s24, 0
      %p79 = por %p77, %p78
      %p80 = scmp.ne.s32.totalorder %s72, %s74
      %p81 = scmp.eq.s32.totalorder %s29, 1
      %p82 = por %p80, %p81
      %p83 = scmp.ne.s32.totalorder %s74, %s75
      %p84 = scmp.eq.s32.totalorder %s29, 0
      %p85 = por %p83, %p84
      %p86 = scmp.ne.s32.totalorder %s74, %s75
      %p87 = scmp.eq.s32.totalorder %s30, 1
      %p88 = por %p86, %p87
      %p90 = scmp.ne.s32.totalorder %s75, %s89
      %p91 = scmp.eq.s32.totalorder %s30, 0
      %p92 = por %p90, %p91
      %s94 = sadd.s32 %s93, 1
      %p97 = scmp.eq.s32.totalorder %s24, 1
      %p98 = scmp.ne.s32.totalorder %s93, %s95
      %p99 = scmp.eq.s32.totalorder %s24, 0
      %p100 = por %p98, %p99
      %p101 = scmp.ne.s32.totalorder %s93, %s95
      %p102 = scmp.eq.s32.totalorder %s29, 1
      %p103 = por %p101, %p102
      %p104 = scmp.ne.s32.totalorder %s95, %s96
      %p105 = scmp.eq.s32.totalorder %s29, 0
      %p106 = por %p104, %p105
      %p107 = scmp.ne.s32.totalorder %s95, %s96
      %p108 = scmp.eq.s32.totalorder %s30, 1
      %p109 = por %p107, %p108
      %p111 = scmp.ne.s32.totalorder %s96, %s110
      %p112 = scmp.eq.s32.totalorder %s30, 0
      %p113 = por %p111, %p112
      %s115 = sadd.s32 %s114, 1
      %p118 = scmp.eq.s32.totalorder %s24, 1
      %p119 = scmp.ne.s32.totalorder %s114, %s116
      %p120 = scmp.eq.s32.totalorder %s24, 0
      %p121 = por %p119, %p120
      %p122 = scmp.ne.s32.totalorder %s114, %s116
      %p123 = scmp.eq.s32.totalorder %s29, 1
      %p124 = por %p122, %p123
      %p125 = scmp.ne.s32.totalorder %s116, %s117
      %p126 = scmp.eq.s32.totalorder %s29, 0
      %p127 = por %p125, %p126
      %p128 = scmp.ne.s32.totalorder %s116, %s117
      %p129 = scmp.eq.s32.totalorder %s30, 1
      %p130 = por %p128, %p129
      %p132 = scmp.ne.s32.totalorder %s117, %s131
      %p133 = scmp.eq.s32.totalorder %s30, 0
      %p134 = por %p132, %p133
      %s136 = sadd.s32 %s135, 1
      %p139 = scmp.eq.s32.totalorder %s24, 1
      %p140 = scmp.ne.s32.totalorder %s135, %s137
      %p141 = scmp.eq.s32.totalorder %s24, 0
      %p142 = por %p140, %p141
      %p143 = scmp.ne.s32.totalorder %s135, %s137
      %p144 = scmp.eq.s32.totalorder %s29, 1
      %p145 = por %p143, %p144
      %p146 = scmp.ne.s32.totalorder %s137, %s138
      %p147 = scmp.eq.s32.totalorder %s29, 0
      %p148 = por %p146, %p147
      %p149 = scmp.ne.s32.totalorder %s137, %s138
      %p150 = scmp.eq.s32.totalorder %s30, 1
      %p151 = por %p149, %p150
      %p153 = scmp.ne.s32.totalorder %s138, %s152
      %p154 = scmp.eq.s32.totalorder %s30, 0
      %p155 = por %p153, %p154
      %s157 = sadd.s32 %s156, 1
      %p160 = scmp.eq.s32.totalorder %s24, 1
      %p161 = scmp.ne.s32.totalorder %s156, %s158
      %p162 = scmp.eq.s32.totalorder %s24, 0
      %p163 = por %p161, %p162
      %p164 = scmp.ne.s32.totalorder %s156, %s158
      %p165 = scmp.eq.s32.totalorder %s29, 1
      %p166 = por %p164, %p165
      %p167 = scmp.ne.s32.totalorder %s158, %s159
      %p168 = scmp.eq.s32.totalorder %s29, 0
      %p169 = por %p167, %p168
      %p170 = scmp.ne.s32.totalorder %s158, %s159
      %p171 = scmp.eq.s32.totalorder %s30, 1
      %p172 = por %p170, %p171
      %p174 = scmp.ne.s32.totalorder %s159, %s173
      %p175 = scmp.eq.s32.totalorder %s30, 0
      %p176 = por %p174, %p175
      %s178 = sadd.s32 %s177, 1
      %p181 = scmp.eq.s32.totalorder %s24, 1
      %p182 = scmp.ne.s32.totalorder %s177, %s179
      %p183 = scmp.eq.s32.totalorder %s24, 0
      %p184 = por %p182, %p183
      %p185 = scmp.ne.s32.totalorder %s177, %s179
      %p186 = scmp.eq.s32.totalorder %s29, 1
      %p187 = por %p185, %p186
      %p188 = scmp.ne.s32.totalorder %s179, %s180
      %p189 = scmp.eq.s32.totalorder %s29, 0
      %p190 = por %p188, %p189
      %p191 = scmp.ne.s32.totalorder %s179, %s180
      %p192 = scmp.eq.s32.totalorder %s30, 1
      %p193 = por %p191, %p192
      %p195 = scmp.ne.s32.totalorder %s180, %s194
      %p196 = scmp.eq.s32.totalorder %s30, 0
      %p197 = por %p195, %p196
      %s199 = sadd.s32 %s198, 1
      %p202 = scmp.eq.s32.totalorder %s24, 1
      %p203 = scmp.ne.s32.totalorder %s198, %s200
      %p204 = scmp.eq.s32.totalorder %s24, 0
      %p205 = por %p203, %p204
      %p206 = scmp.ne.s32.totalorder %s198, %s200
      %p207 = scmp.eq.s32.totalorder %s29, 1
      %p208 = por %p206, %p207
      %p209 = scmp.ne.s32.totalorder %s200, %s201
      %p210 = scmp.eq.s32.totalorder %s29, 0
      %p211 = por %p209, %p210
      %p212 = scmp.ne.s32.totalorder %s200, %s201
      %p213 = scmp.eq.s32.totalorder %s30, 1
      %p214 = por %p212, %p213
      %p216 = scmp.ne.s32.totalorder %s201, %s215
      %p217 = scmp.eq.s32.totalorder %s30, 0
      %p218 = por %p216, %p217
      %s220 = sadd.s32 %s219, 1
      %p223 = scmp.eq.s32.totalorder %s24, 1
      %p224 = scmp.ne.s32.totalorder %s219, %s221
      %p225 = scmp.eq.s32.totalorder %s24, 0
      %p226 = por %p224, %p225
      %p227 = scmp.ne.s32.totalorder %s219, %s221
      %p228 = scmp.eq.s32.totalorder %s29, 1
      %p229 = por %p227, %p228
      %p230 = scmp.ne.s32.totalorder %s221, %s222
      %p231 = scmp.eq.s32.totalorder %s29, 0
      %p232 = por %p230, %p231
      %p233 = scmp.ne.s32.totalorder %s221, %s222
      %p234 = scmp.eq.s32.totalorder %s30, 1
      %p235 = por %p233, %p234
      %p237 = scmp.ne.s32.totalorder %s222, %s236
      %p238 = scmp.eq.s32.totalorder %s30, 0
      %p239 = por %p237, %p238
      %s241 = sadd.s32 %s240, 1
      %p244 = scmp.eq.s32.totalorder %s24, 1
      %p245 = scmp.ne.s32.totalorder %s240, %s242
      %p246 = scmp.eq.s32.totalorder %s24, 0
      %p247 = por %p245, %p246
      %p248 = scmp.ne.s32.totalorder %s240, %s242
      %p249 = scmp.eq.s32.totalorder %s29, 1
      %p250 = por %p248, %p249
      %p251 = scmp.ne.s32.totalorder %s242, %s243
      %p252 = scmp.eq.s32.totalorder %s29, 0
      %p253 = por %p251, %p252
      %p254 = scmp.ne.s32.totalorder %s242, %s243
      %p255 = scmp.eq.s32.totalorder %s30, 1
      %p256 = por %p254, %p255
      %p258 = scmp.ne.s32.totalorder %s243, %s257
      %p259 = scmp.eq.s32.totalorder %s30, 0
      %p260 = por %p258, %p259
      %s262 = sadd.s32 %s261, 1
      %p265 = scmp.eq.s32.totalorder %s24, 1
      %p266 = scmp.ne.s32.totalorder %s261, %s263
      %p267 = scmp.eq.s32.totalorder %s24, 0
      %p268 = por %p266, %p267
      %p269 = scmp.ne.s32.totalorder %s261, %s263
      %p270 = scmp.eq.s32.totalorder %s29, 1
      %p271 = por %p269, %p270
      %p272 = scmp.ne.s32.totalorder %s263, %s264
      %p273 = scmp.eq.s32.totalorder %s29, 0
      %p274 = por %p272, %p273
      %p275 = scmp.ne.s32.totalorder %s263, %s264
      %p276 = scmp.eq.s32.totalorder %s30, 1
      %p277 = por %p275, %p276
      %p279 = scmp.ne.s32.totalorder %s264, %s278
      %p280 = scmp.eq.s32.totalorder %s30, 0
      %p281 = por %p279, %p280
      %s283 = sadd.s32 %s282, 1
      %p286 = scmp.eq.s32.totalorder %s24, 1
      %p287 = scmp.ne.s32.totalorder %s282, %s284
      %p288 = scmp.eq.s32.totalorder %s24, 0
      %p289 = por %p287, %p288
      %p290 = scmp.ne.s32.totalorder %s282, %s284
      %p291 = scmp.eq.s32.totalorder %s29, 1
      %p292 = por %p290, %p291
      %p293 = scmp.ne.s32.totalorder %s284, %s285
      %p294 = scmp.eq.s32.totalorder %s29, 0
      %p295 = por %p293, %p294
      %p296 = scmp.ne.s32.totalorder %s284, %s285
      %p297 = scmp.eq.s32.totalorder %s30, 1
      %p298 = por %p296, %p297
      %p300 = scmp.ne.s32.totalorder %s285, %s299
      %p301 = scmp.eq.s32.totalorder %s30, 0
      %p302 = por %p300, %p301
      %s304 = sadd.s32 %s303, 1
      %p307 = scmp.eq.s32.totalorder %s24, 1
      %p308 = scmp.ne.s32.totalorder %s303, %s305
      %p309 = scmp.eq.s32.totalorder %s24, 0
      %p310 = por %p308, %p309
      %p311 = scmp.ne.s32.totalorder %s303, %s305
      %p312 = scmp.eq.s32.totalorder %s29, 1
      %p313 = por %p311, %p312
      %p314 = scmp.ne.s32.totalorder %s305, %s306
      %p315 = scmp.eq.s32.totalorder %s29, 0
      %p316 = por %p314, %p315
      %p317 = scmp.ne.s32.totalorder %s305, %s306
      %p318 = scmp.eq.s32.totalorder %s30, 1
      %p319 = por %p317, %p318
      %p321 = scmp.ne.s32.totalorder %s306, %s320
      %p322 = scmp.eq.s32.totalorder %s30, 0
      %p323 = por %p321, %p322
      %s324 = ssub.s32 %s31, %s43
      %p325 = scmp.eq.s32.totalorder %s324, 0
      %s327 = sadd.s32 %s326, 1
      %s328 = scalar_select %p325, %s326, %s327
      %p331 = pneg %p325
      %p332 = scmp.eq.s32.totalorder %s24, 1
      %p333 = por %p331, %p332
      %p334 = scmp.ne.s32.totalorder %s326, %s329
      %p335 = scmp.eq.s32.totalorder %s24, 0
      %p336 = por %p334, %p335
      %p337 = scmp.ne.s32.totalorder %s326, %s329
      %p338 = scmp.eq.s32.totalorder %s29, 1
      %p339 = por %p337, %p338
      %p340 = scmp.ne.s32.totalorder %s329, %s330
      %p341 = scmp.eq.s32.totalorder %s29, 0
      %p342 = por %p340, %p341
      %p343 = scmp.ne.s32.totalorder %s329, %s330
      %p344 = scmp.eq.s32.totalorder %s30, 1
      %p345 = por %p343, %p344
      %p347 = scmp.ne.s32.totalorder %s330, %s346
      %p348 = scmp.eq.s32.totalorder %s30, 0
      %p349 = por %p347, %p348
      %p350 = scmp.le.s32.totalorder 1, %s24
      %p351 = scmp.lt.s32.totalorder %s24, 3
      %p352 = pnand %p350, %p351
      %p353 = pneg %p352
      // Predicated region
      $region9: #{tpu_custom_call.1} parent=5 // pred_check
        _
      $region10: #{tpu_custom_call.1} parent=5 // pred_check_branch
        %355 = sbr.rel (%p352) target = $region12
      $region11: #{tpu_custom_call.1} parent=5 // pred_region
        %s356 = ssub.s32 %s24, 1
        // Predicated region
        $region13: #{tpu_custom_call.1} parent=11 // pred_check
          %p357 = pneg %p85
        $region14: #{tpu_custom_call.1} parent=11 // pred_check_branch
          %359 = sbr.rel (%p357) target = $region16
        $region15: #{tpu_custom_call.1} parent=11 // pred_region
          _
        $region16: #{tpu_custom_call.1} parent=11 // pred_fallthru
          _
        // Predicated region
        $region17: #{tpu_custom_call.1} parent=11 // pred_check
          %p360 = pneg %p106
        $region18: #{tpu_custom_call.1} parent=11 // pred_check_branch
          %362 = sbr.rel (%p360) target = $region20
        $region19: #{tpu_custom_call.1} parent=11 // pred_region
          _
        $region20: #{tpu_custom_call.1} parent=11 // pred_fallthru
          _
        // Predicated region
        $region21: #{tpu_custom_call.1} parent=11 // pred_check
          %p363 = pneg %p127
        $region22: #{tpu_custom_call.1} parent=11 // pred_check_branch
          %365 = sbr.rel (%p363) target = $region24
        $region23: #{tpu_custom_call.1} parent=11 // pred_region
          _
        $region24: #{tpu_custom_call.1} parent=11 // pred_fallthru
          _
        // Predicated region
        $region25: #{tpu_custom_call.1} parent=11 // pred_check
          %p366 = pneg %p148
        $region26: #{tpu_custom_call.1} parent=11 // pred_check_branch
          %368 = sbr.rel (%p366) target = $region28
        $region27: #{tpu_custom_call.1} parent=11 // pred_region
          _
        $region28: #{tpu_custom_call.1} parent=11 // pred_fallthru
          _
        // Predicated region
        $region29: #{tpu_custom_call.1} parent=11 // pred_check
          %p369 = pneg %p169
        $region30: #{tpu_custom_call.1} parent=11 // pred_check_branch
          %371 = sbr.rel (%p369) target = $region32
        $region31: #{tpu_custom_call.1} parent=11 // pred_region
          %s373 = ssub.s32 8192, 8192
          %374 = vsyncadd [#allocation4], %s373
          %s375 = sshll.u32 [#allocation3], 4
          %s376 = int_to_ptr.vmem [resolvable:$true] %s375
          %381 = dma.hbm_to_vmem [thread:$0]  %s5, 8192, %s376, [#allocation4], 512, 512, 32
        $region32: #{tpu_custom_call.1} parent=11 // pred_fallthru
          _
        // Predicated region
        $region33: #{tpu_custom_call.1} parent=11 // pred_check
          %p382 = pneg %p190
        $region34: #{tpu_custom_call.1} parent=11 // pred_check_branch
          %384 = sbr.rel (%p382) target = $region36
        $region35: #{tpu_custom_call.1} parent=11 // pred_region
          _
        $region36: #{tpu_custom_call.1} parent=11 // pred_fallthru
          _
        // Predicated region
        $region37: #{tpu_custom_call.1} parent=11 // pred_check
          %p385 = pneg %p211
        $region38: #{tpu_custom_call.1} parent=11 // pred_check_branch
          %387 = sbr.rel (%p385) target = $region40
        $region39: #{tpu_custom_call.1} parent=11 // pred_region
          %s389 = ssub.s32 32768, 32768
          %390 = vsyncadd [#allocation7], %s389
          %s391 = sshll.u32 [#allocation6], 4
          %s392 = int_to_ptr.vmem [resolvable:$true] %s391
          %397 = dma.hbm_to_vmem [thread:$0]  %s7, 32768, %s392, [#allocation7], 256, 256, 16
        $region40: #{tpu_custom_call.1} parent=11 // pred_fallthru
          _
        // Predicated region
        $region41: #{tpu_custom_call.1} parent=11 // pred_check
          %p398 = pneg %p232
        $region42: #{tpu_custom_call.1} parent=11 // pred_check_branch
          %400 = sbr.rel (%p398) target = $region44
        $region43: #{tpu_custom_call.1} parent=11 // pred_region
          _
        $region44: #{tpu_custom_call.1} parent=11 // pred_fallthru
          _
        // Predicated region
        $region45: #{tpu_custom_call.1} parent=11 // pred_check
          %p401 = pneg %p253
        $region46: #{tpu_custom_call.1} parent=11 // pred_check_branch
          %403 = sbr.rel (%p401) target = $region48
        $region47: #{tpu_custom_call.1} parent=11 // pred_region
          %s405 = ssub.s32 8192, 8192
          %406 = vsyncadd [#allocation7], %s405
          %s407 = sshll.u32 [#allocation8], 4
          %s408 = int_to_ptr.vmem [resolvable:$true] %s407
          %413 = dma.hbm_to_vmem [thread:$0]  %s9, 8192, %s408, [#allocation7], 128, 128, 8
        $region48: #{tpu_custom_call.1} parent=11 // pred_fallthru
          _
        // Predicated region
        $region49: #{tpu_custom_call.1} parent=11 // pred_check
          %p414 = pneg %p274
        $region50: #{tpu_custom_call.1} parent=11 // pred_check_branch
          %416 = sbr.rel (%p414) target = $region52
        $region51: #{tpu_custom_call.1} parent=11 // pred_region
          _
        $region52: #{tpu_custom_call.1} parent=11 // pred_fallthru
          _
        // Predicated region
        $region53: #{tpu_custom_call.1} parent=11 // pred_check
          %p417 = pneg %p295
        $region54: #{tpu_custom_call.1} parent=11 // pred_check_branch
          %419 = sbr.rel (%p417) target = $region56
        $region55: #{tpu_custom_call.1} parent=11 // pred_region
          _
        $region56: #{tpu_custom_call.1} parent=11 // pred_fallthru
          _
        // Predicated region
        $region57: #{tpu_custom_call.1} parent=11 // pred_check
          %p420 = pneg %p316
        $region58: #{tpu_custom_call.1} parent=11 // pred_check_branch
          %422 = sbr.rel (%p420) target = $region60
        $region59: #{tpu_custom_call.1} parent=11 // pred_region
          _
        $region60: #{tpu_custom_call.1} parent=11 // pred_fallthru
          _
      $region12: #{tpu_custom_call.1} parent=5 // pred_fallthru
        _
      %p423 = scmp.lt.s32.totalorder %s24, 2
      // Predicated region
      $region61: #{tpu_custom_call.1} parent=5 // pred_check
        %p424 = pneg %p423
      $region62: #{tpu_custom_call.1} parent=5 // pred_check_branch
        %426 = sbr.rel (%p424) target = $region64
      $region63: #{tpu_custom_call.1} parent=5 // pred_region
        // Predicated region
        $region65: #{tpu_custom_call.1} parent=63 // pred_check
          %p427 = pneg %p58
        $region66: #{tpu_custom_call.1} parent=63 // pred_check_branch
          %429 = sbr.rel (%p427) target = $region68
        $region67: #{tpu_custom_call.1} parent=63 // pred_region
          %s430 = smul.u32 2, %s32
          %p431 = scmp.lt.s32.totalorder %s31, 1
          %s432 = scalar_select %p431, %s31, 1
          %p433 = scmp.lt.s32.totalorder %s430, 1
          %s434 = scalar_select %p433, %s430, 1
          %s435 = smul.addr %s432, 2
          %s436 = sadd.s32 %s434, %s435
          %s437 = smul.addr %s436, 8
          %s438 = scalar_lea.vmem %s0, %s437
          %s439 = smul.u32 2, %s32
        $region68: #{tpu_custom_call.1} parent=63 // pred_fallthru
          _
      $region64: #{tpu_custom_call.1} parent=5 // pred_fallthru
        _
      %p440 = scmp.le.s32.totalorder 1, %s24
      %p441 = scmp.lt.s32.totalorder %s24, 3
      %p442 = pnand %p440, %p441
      %p443 = pneg %p442
      // Predicated region
      $region69: #{tpu_custom_call.1} parent=5 // pred_check
        _
      $region70: #{tpu_custom_call.1} parent=5 // pred_check_branch
        %445 = sbr.rel (%p442) target = $region72
      $region71: #{tpu_custom_call.1} parent=5 // pred_region
        %s446 = ssub.s32 %s24, 1
        // Predicated region
        $region73: #{tpu_custom_call.1} parent=71 // pred_check
          %p447 = pneg %p169
        $region74: #{tpu_custom_call.1} parent=71 // pred_check_branch
          %449 = sbr.rel (%p447) target = $region76
        $region75: #{tpu_custom_call.1} parent=71 // pred_region
          %450 = dma.done [#allocation4], 8192
        $region76: #{tpu_custom_call.1} parent=71 // pred_fallthru
          _
        // Predicated region
        $region77: #{tpu_custom_call.1} parent=71 // pred_check
          %p451 = pneg %p211
        $region78: #{tpu_custom_call.1} parent=71 // pred_check_branch
          %453 = sbr.rel (%p451) target = $region80
        $region79: #{tpu_custom_call.1} parent=71 // pred_region
          %454 = dma.done [#allocation7], 32768
        $region80: #{tpu_custom_call.1} parent=71 // pred_fallthru
          _
        // Predicated region
        $region81: #{tpu_custom_call.1} parent=71 // pred_check
          %p455 = pneg %p253
        $region82: #{tpu_custom_call.1} parent=71 // pred_check_branch
          %457 = sbr.rel (%p455) target = $region84
        $region83: #{tpu_custom_call.1} parent=71 // pred_region
          %458 = dma.done [#allocation7], 8192
        $region84: #{tpu_custom_call.1} parent=71 // pred_fallthru
          _
        %s459 = smul.u32 2, %s34
        %p460 = scmp.lt.s32.totalorder %s33, 1
        %s461 = scalar_select %p460, %s33, 1
        %p462 = scmp.lt.s32.totalorder %s459, 1
        %s463 = scalar_select %p462, %s459, 1
        %s464 = smul.addr %s461, 2
        %s465 = sadd.s32 %s463, %s464
        %s466 = smul.addr %s465, 8
        %s467 = scalar_lea.vmem %s0, %s466
        %p468 = pneg %p64
        %p469 = pneg %p61
        %p470 = pneg %p85
        %p471 = pneg %p82
        %p472 = pneg %p106
        %p473 = pneg %p103
        %p474 = pneg %p127
        %p475 = pneg %p124
        %p476 = pneg %p148
        %p477 = pneg %p145
        %p478 = pneg %p169
        %p479 = pneg %p166
        %p480 = pneg %p190
        %p481 = pneg %p187
        %p482 = pneg %p211
        %p483 = pneg %p208
        %p484 = pneg %p232
        %p485 = pneg %p229
        %p486 = pneg %p253
        %p487 = pneg %p250
        %p488 = pneg %p274
        %p489 = pneg %p271
        %p490 = pneg %p295
        %p491 = pneg %p292
        %p492 = pneg %p316
        %p493 = pneg %p313
        %p494 = pneg %p342
        %p495 = pneg %p339
        %s496 = sand.u32 %s329, 1
        %s497 = scalar_lea.sflag [#allocation5], %s496
        %s498 = sand.u32 %s329, 1
        %s499 = scalar_lea.vmem [#allocation9], %s498
        %s500 = smul.u32 2, %s34
        %p501 = scmp.lt.s32.totalorder %s33, 1
        %s502 = scalar_select %p501, %s33, 1
        %p503 = scmp.lt.s32.totalorder %s500, 1
        %s504 = scalar_select %p503, %s500, 1
        %s505 = smul.addr %s502, 2
        %s506 = sadd.s32 %s504, %s505
        %s507 = smul.addr %s506, 8
        %s508 = scalar_lea.vmem %s0, %s507
        %s509 = smul.u32 2, %s34
        %v511 = vld [vmem:[%s508] sm:$0xff]
        %v512 = vld [vmem:[%s508 + $0x8] sm:$0xff]
        %v513 = vld [vmem:[%s1] sm:$0x7]
        %v514 = vld [vmem:[%s2] sm:$0x1]
        %516 = vset.pattern.permute.xlu0 0
        %517 = vperm.xlu0 %516, %v511
        %v518 = vpop.permute.xlu0 %517
        %521 = vset.pattern.permute.xlu0 0
        %522 = vperm.xlu0 %521, %v512
        %v523 = vpop.permute.xlu0 %522
        %v525 = vlaneseq
        %v526 = vshrl.u32 %v525, 7
        %v527 = vsub.s32 0, %v526
        %v528 = vrot.slane %v513, %v527
        %v529 = vmul.f32 %v518, %v528
        %v530 = vmul.f32 %v523, %v528
        %531 = vset.pattern.permute.xlu0 1
        %532 = vperm.xlu0 %531, %v511
        %v533 = vpop.permute.xlu0 %532
        %535 = vset.pattern.permute.xlu0 1
        %536 = vperm.xlu0 %535, %v512
        %v537 = vpop.permute.xlu0 %536
        %v539 = vlaneseq
        %v540 = vshrl.u32 %v539, 7
        %v541 = vsub.s32 1, %v540
        %v542 = vrot.slane %v513, %v541
        %v543 = vmul.f32 %v533, %v542
        %v544 = vmul.f32 %v537, %v542
        %v545 = vadd.f32 %v529, %v543
        %v546 = vadd.f32 %v530, %v544
        %547 = vset.pattern.permute.xlu0 2
        %548 = vperm.xlu0 %547, %v511
        %v549 = vpop.permute.xlu0 %548
        %551 = vset.pattern.permute.xlu0 2
        %552 = vperm.xlu0 %551, %v512
        %v553 = vpop.permute.xlu0 %552
        %v555 = vlaneseq
        %v556 = vshrl.u32 %v555, 7
        %v557 = vsub.s32 2, %v556
        %v558 = vrot.slane %v513, %v557
        %v559 = vmul.f32 %v549, %v558
        %v560 = vmul.f32 %v553, %v558
        %v561 = vadd.f32 %v545, %v559
        %v562 = vadd.f32 %v546, %v560
        %v564 = vlaneseq
        %v565 = vshrl.u32 %v564, 7
        %v566 = vsub.s32 0, %v565
        %v567 = vrot.slane %v514, %v566
        %v569 = vadd.f32 %v561, %v567
        %v570 = vadd.f32 %v562, %v567
        %v571 = vmax.f32 %v569, 0.0
        %v572 = vmax.f32 %v570, 0.0
        %v573 = vpack.c.bf16 %v572, %v571
        %p574 = scmp.eq.s32.totalorder %s34, 0
        // Predicated region
        $region85: #{tpu_custom_call.1} parent=71 // pred_check
          %p575 = pneg %p574
        $region86: #{tpu_custom_call.1} parent=71 // pred_check_branch
          %577 = sbr.rel (%p575) target = $region88
        $region87: #{tpu_custom_call.1} parent=71 // pred_region
          %578 = vst [vmem:[#allocation2] sm:$0xff] -inf
          %579 = vst [vmem:[#allocation2 + $0x8] sm:$0xff] -inf
          %580 = vst [vmem:[#allocation2 + $0x10] sm:$0xff] -inf
          %581 = vst [vmem:[#allocation2 + $0x18] sm:$0xff] -inf
          %582 = vst [vmem:[#allocation2 + $0x20] sm:$0xff] -inf
          %583 = vst [vmem:[#allocation2 + $0x28] sm:$0xff] -inf
          %584 = vst [vmem:[#allocation2 + $0x30] sm:$0xff] -inf
          %585 = vst [vmem:[#allocation2 + $0x38] sm:$0xff] -inf
        $region88: #{tpu_custom_call.1} parent=71 // pred_fallthru
          _
        %v586 = vld [vmem:[%s3] sm:$0xf]
        %v587 = vld [vmem:[%s3 + $0x4] sm:$0xf]
        %v588 = vld [vmem:[%s3 + $0x8] sm:$0xf]
        %v589 = vld [vmem:[%s3 + $0xc] sm:$0xf]
        %v590 = vld [vmem:[%s3 + $0x10] sm:$0xf]
        %v591 = vld [vmem:[%s3 + $0x14] sm:$0xf]
        %v592 = vld [vmem:[%s3 + $0x18] sm:$0xf]
        %v593 = vld [vmem:[%s3 + $0x1c] sm:$0xf]
        %v594 = vld [vmem:[%s4] sm:$0x1]
        %v596 = vlaneseq
        %v597 = vshrl.u32 %v596, 7
        %v598 = vsub.s32 0, %v597
        %v599 = vrot.slane %v594, %v598
        %v609 = vunpack.c.l.b16 %v586
        %v610 = vunpack.c.l.b16 %v587
        %v611 = vunpack.c.l.b16 %v588
        %v612 = vunpack.c.l.b16 %v589
        %v613 = vunpack.c.l.b16 %v590
        %v614 = vunpack.c.l.b16 %v591
        %v615 = vunpack.c.l.b16 %v592
        %v616 = vunpack.c.l.b16 %v593
        %v617 = vpack.c.b16 %v610, %v609
        %v618 = vpack.c.b16 %v612, %v611
        %v619 = vpack.c.b16 %v614, %v613
        %v620 = vpack.c.b16 %v616, %v615
        %vm625 = vcmask 523264
        %v627 = vsel %vm625, %v573, 0
        %629 = vmatprep.subr.bf16.mxu0 0
        %630 = vmatpush1.bf16.msra.mxu0 %v617
        %631 = vmatprep.subr.bf16.mxu0 0
        %632 = vmatpush1.bf16.msra.mxu0 %v618
        %633 = vmatprep.subr.bf16.mxu0 0
        %634 = vmatpush1.bf16.msra.mxu0 %v619
        %635 = vmatprep.subr.bf16.mxu0 0
        %636 = vmatpush1.bf16.msra.mxu0 %v620
        %637 = vmatprep.subr.bf16.mxu0 0
        %638 = vmatpush1.bf16.msra.mxu0 0
        %639 = vmatprep.subr.bf16.mxu0 0
        %640 = vmatpush1.bf16.msra.mxu0 0
        %641 = vmatprep.subr.bf16.mxu0 0
        %642 = vmatpush1.bf16.msra.mxu0 0
        %643 = vmatprep.subr.bf16.mxu0 0
        %644 = vmatpush1.bf16.msra.mxu0 0
        %645 = vmatprep.subr.bf16.mxu0 0
        %646 = vmatpush1.bf16.msra.mxu0 0
        %647 = vmatprep.subr.bf16.mxu0 0
        %648 = vmatpush1.bf16.msra.mxu0 0
        %649 = vmatprep.subr.bf16.mxu0 0
        %650 = vmatpush1.bf16.msra.mxu0 0
        %651 = vmatprep.subr.bf16.mxu0 0
        %652 = vmatpush1.bf16.msra.mxu0 0
        %653 = vmatprep.subr.bf16.mxu0 0
        %654 = vmatpush1.bf16.msra.mxu0 0
        %655 = vmatprep.subr.bf16.mxu0 0
        %656 = vmatpush1.bf16.msra.mxu0 0
        %657 = vmatprep.subr.bf16.mxu0 0
        %658 = vmatpush1.bf16.msra.mxu0 0
        %659 = vmatprep.subr.bf16.mxu0 0
        %660 = vmatpush1.bf16.msra.mxu0 0
        %661 = vmatprep.mubr.bf16.mxu0 0
        %662 = vmatmul.mubr.bf16.gmra.mrb[0].mxu0 %v627
        %v663 = vpop.f32.mrb[0].mxu0
        %v664 = vadd.f32 %v599, %v663
        %v665 = vpop.f32.mrb[0].mxu0
        %v666 = vpop.f32.mrb[0].mxu0
        %v667 = vadd.f32 %v599, %v666
        %v668 = vpop.f32.mrb[0].mxu0
        %669 = vdwg.mxu0
        %v670 = vmax.f32 %v664, 0.0
        %v671 = vmax.f32 %v667, 0.0
        %v672 = vpack.c.bf16 %v671, %v670
        %v673 = vld [vmem:[#allocation3] sm:$0xff]
        %v674 = vld [vmem:[#allocation3 + $0x8] sm:$0xff]
        %v675 = vld [vmem:[#allocation3 + $0x10] sm:$0xff]
        %v676 = vld [vmem:[#allocation3 + $0x18] sm:$0xff]
        %v677 = vld [vmem:[#allocation3 + $0x20] sm:$0xff]
        %v678 = vld [vmem:[#allocation3 + $0x28] sm:$0xff]
        %v679 = vld [vmem:[#allocation3 + $0x30] sm:$0xff]
        %v680 = vld [vmem:[#allocation3 + $0x38] sm:$0xff]
        %v681 = vld [vmem:[#allocation3 + $0x40] sm:$0xff]
        %v682 = vld [vmem:[#allocation3 + $0x48] sm:$0xff]
        %v683 = vld [vmem:[#allocation3 + $0x50] sm:$0xff]
        %v684 = vld [vmem:[#allocation3 + $0x58] sm:$0xff]
        %v685 = vld [vmem:[#allocation3 + $0x60] sm:$0xff]
        %v686 = vld [vmem:[#allocation3 + $0x68] sm:$0xff]
        %v687 = vld [vmem:[#allocation3 + $0x70] sm:$0xff]
        %v688 = vld [vmem:[#allocation3 + $0x78] sm:$0xff]
        %v689 = vld [vmem:[#allocation3 + $0x80] sm:$0xff]
        %v690 = vld [vmem:[#allocation3 + $0x88] sm:$0xff]
        %v691 = vld [vmem:[#allocation3 + $0x90] sm:$0xff]
        %v692 = vld [vmem:[#allocation3 + $0x98] sm:$0xff]
        %v693 = vld [vmem:[#allocation3 + $0xa0] sm:$0xff]
        %v694 = vld [vmem:[#allocation3 + $0xa8] sm:$0xff]
        %v695 = vld [vmem:[#allocation3 + $0xb0] sm:$0xff]
        %v696 = vld [vmem:[#allocation3 + $0xb8] sm:$0xff]
        %v697 = vld [vmem:[#allocation3 + $0xc0] sm:$0xff]
        %v698 = vld [vmem:[#allocation3 + $0xc8] sm:$0xff]
        %v699 = vld [vmem:[#allocation3 + $0xd0] sm:$0xff]
        %v700 = vld [vmem:[#allocation3 + $0xd8] sm:$0xff]
        %v701 = vld [vmem:[#allocation3 + $0xe0] sm:$0xff]
        %v702 = vld [vmem:[#allocation3 + $0xe8] sm:$0xff]
        %v703 = vld [vmem:[#allocation3 + $0xf0] sm:$0xff]
        %v704 = vld [vmem:[#allocation3 + $0xf8] sm:$0xff]
        %v705 = vld [vmem:[#allocation3 + $0x100] sm:$0xff]
        %v706 = vld [vmem:[#allocation3 + $0x108] sm:$0xff]
        %v707 = vld [vmem:[#allocation3 + $0x110] sm:$0xff]
        %v708 = vld [vmem:[#allocation3 + $0x118] sm:$0xff]
        %v709 = vld [vmem:[#allocation3 + $0x120] sm:$0xff]
        %v710 = vld [vmem:[#allocation3 + $0x128] sm:$0xff]
        %v711 = vld [vmem:[#allocation3 + $0x130] sm:$0xff]
        %v712 = vld [vmem:[#allocation3 + $0x138] sm:$0xff]
        %v713 = vld [vmem:[#allocation3 + $0x140] sm:$0xff]
        %v714 = vld [vmem:[#allocation3 + $0x148] sm:$0xff]
        %v715 = vld [vmem:[#allocation3 + $0x150] sm:$0xff]
        %v716 = vld [vmem:[#allocation3 + $0x158] sm:$0xff]
        %v717 = vld [vmem:[#allocation3 + $0x160] sm:$0xff]
        %v718 = vld [vmem:[#allocation3 + $0x168] sm:$0xff]
        %v719 = vld [vmem:[#allocation3 + $0x170] sm:$0xff]
        %v720 = vld [vmem:[#allocation3 + $0x178] sm:$0xff]
        %v721 = vld [vmem:[#allocation3 + $0x180] sm:$0xff]
        %v722 = vld [vmem:[#allocation3 + $0x188] sm:$0xff]
        %v723 = vld [vmem:[#allocation3 + $0x190] sm:$0xff]
        %v724 = vld [vmem:[#allocation3 + $0x198] sm:$0xff]
        %v725 = vld [vmem:[#allocation3 + $0x1a0] sm:$0xff]
        %v726 = vld [vmem:[#allocation3 + $0x1a8] sm:$0xff]
        %v727 = vld [vmem:[#allocation3 + $0x1b0] sm:$0xff]
        %v728 = vld [vmem:[#allocation3 + $0x1b8] sm:$0xff]
        %v729 = vld [vmem:[#allocation3 + $0x1c0] sm:$0xff]
        %v730 = vld [vmem:[#allocation3 + $0x1c8] sm:$0xff]
        %v731 = vld [vmem:[#allocation3 + $0x1d0] sm:$0xff]
        %v732 = vld [vmem:[#allocation3 + $0x1d8] sm:$0xff]
        %v733 = vld [vmem:[#allocation3 + $0x1e0] sm:$0xff]
        %v734 = vld [vmem:[#allocation3 + $0x1e8] sm:$0xff]
        %v735 = vld [vmem:[#allocation3 + $0x1f0] sm:$0xff]
        %v736 = vld [vmem:[#allocation3 + $0x1f8] sm:$0xff]
        %v737 = vld [vmem:[%s6] sm:$0xff]
        %v739 = vlaneseq
        %v740 = vshrl.u32 %v739, 7
        %v741 = vsub.s32 0, %v740
        %v742 = vrot.slane %v737, %v741
        %v743 = vlaneseq
        %v744 = vshrl.u32 %v743, 7
        %v745 = vsub.s32 1, %v744
        %v746 = vrot.slane %v737, %v745
        %v747 = vlaneseq
        %v748 = vshrl.u32 %v747, 7
        %v749 = vsub.s32 2, %v748
        %v750 = vrot.slane %v737, %v749
        %v751 = vlaneseq
        %v752 = vshrl.u32 %v751, 7
        %v753 = vsub.s32 3, %v752
        %v754 = vrot.slane %v737, %v753
        %v755 = vlaneseq
        %v756 = vshrl.u32 %v755, 7
        %v757 = vsub.s32 4, %v756
        %v758 = vrot.slane %v737, %v757
        %v759 = vlaneseq
        %v760 = vshrl.u32 %v759, 7
        %v761 = vsub.s32 5, %v760
        %v762 = vrot.slane %v737, %v761
        %v763 = vlaneseq
        %v764 = vshrl.u32 %v763, 7
        %v765 = vsub.s32 6, %v764
        %v766 = vrot.slane %v737, %v765
        %v767 = vlaneseq
        %v768 = vshrl.u32 %v767, 7
        %v769 = vsub.s32 7, %v768
        %v770 = vrot.slane %v737, %v769
        %v843 = vunpack.c.l.b16 %v673
        %v844 = vunpack.c.h.b16 %v673
        %v845 = vunpack.c.l.b16 %v674
        %v846 = vunpack.c.h.b16 %v674
        %v847 = vunpack.c.l.b16 %v675
        %v848 = vunpack.c.h.b16 %v675
        %v849 = vunpack.c.l.b16 %v676
        %v850 = vunpack.c.h.b16 %v676
        %v851 = vunpack.c.l.b16 %v677
        %v852 = vunpack.c.h.b16 %v677
        %v853 = vunpack.c.l.b16 %v678
        %v854 = vunpack.c.h.b16 %v678
        %v855 = vunpack.c.l.b16 %v679
        %v856 = vunpack.c.h.b16 %v679
        %v857 = vunpack.c.l.b16 %v680
        %v858 = vunpack.c.h.b16 %v680
        %v859 = vunpack.c.l.b16 %v681
        %v860 = vunpack.c.h.b16 %v681
        %v861 = vunpack.c.l.b16 %v682
        %v862 = vunpack.c.h.b16 %v682
        %v863 = vunpack.c.l.b16 %v683
        %v864 = vunpack.c.h.b16 %v683
        %v865 = vunpack.c.l.b16 %v684
        %v866 = vunpack.c.h.b16 %v684
        %v867 = vunpack.c.l.b16 %v685
        %v868 = vunpack.c.h.b16 %v685
        %v869 = vunpack.c.l.b16 %v686
        %v870 = vunpack.c.h.b16 %v686
        %v871 = vunpack.c.l.b16 %v687
        %v872 = vunpack.c.h.b16 %v687
        %v873 = vunpack.c.l.b16 %v688
        %v874 = vunpack.c.h.b16 %v688
        %v875 = vunpack.c.l.b16 %v689
        %v876 = vunpack.c.h.b16 %v689
        %v877 = vunpack.c.l.b16 %v690
        %v878 = vunpack.c.h.b16 %v690
        %v879 = vunpack.c.l.b16 %v691
        %v880 = vunpack.c.h.b16 %v691
        %v881 = vunpack.c.l.b16 %v692
        %v882 = vunpack.c.h.b16 %v692
        %v883 = vunpack.c.l.b16 %v693
        %v884 = vunpack.c.h.b16 %v693
        %v885 = vunpack.c.l.b16 %v694
        %v886 = vunpack.c.h.b16 %v694
        %v887 = vunpack.c.l.b16 %v695
        %v888 = vunpack.c.h.b16 %v695
        %v889 = vunpack.c.l.b16 %v696
        %v890 = vunpack.c.h.b16 %v696
        %v891 = vunpack.c.l.b16 %v697
        %v892 = vunpack.c.h.b16 %v697
        %v893 = vunpack.c.l.b16 %v698
        %v894 = vunpack.c.h.b16 %v698
        %v895 = vunpack.c.l.b16 %v699
        %v896 = vunpack.c.h.b16 %v699
        %v897 = vunpack.c.l.b16 %v700
        %v898 = vunpack.c.h.b16 %v700
        %v899 = vunpack.c.l.b16 %v701
        %v900 = vunpack.c.h.b16 %v701
        %v901 = vunpack.c.l.b16 %v702
        %v902 = vunpack.c.h.b16 %v702
        %v903 = vunpack.c.l.b16 %v703
        %v904 = vunpack.c.h.b16 %v703
        %v905 = vunpack.c.l.b16 %v704
        %v906 = vunpack.c.h.b16 %v704
        %v907 = vunpack.c.l.b16 %v705
        %v908 = vunpack.c.h.b16 %v705
        %v909 = vunpack.c.l.b16 %v706
        %v910 = vunpack.c.h.b16 %v706
        %v911 = vunpack.c.l.b16 %v707
        %v912 = vunpack.c.h.b16 %v707
        %v913 = vunpack.c.l.b16 %v708
        %v914 = vunpack.c.h.b16 %v708
        %v915 = vunpack.c.l.b16 %v709
        %v916 = vunpack.c.h.b16 %v709
        %v917 = vunpack.c.l.b16 %v710
        %v918 = vunpack.c.h.b16 %v710
        %v919 = vunpack.c.l.b16 %v711
        %v920 = vunpack.c.h.b16 %v711
        %v921 = vunpack.c.l.b16 %v712
        %v922 = vunpack.c.h.b16 %v712
        %v923 = vunpack.c.l.b16 %v713
        %v924 = vunpack.c.h.b16 %v713
        %v925 = vunpack.c.l.b16 %v714
        %v926 = vunpack.c.h.b16 %v714
        %v927 = vunpack.c.l.b16 %v715
        %v928 = vunpack.c.h.b16 %v715
        %v929 = vunpack.c.l.b16 %v716
        %v930 = vunpack.c.h.b16 %v716
        %v931 = vunpack.c.l.b16 %v717
        %v932 = vunpack.c.h.b16 %v717
        %v933 = vunpack.c.l.b16 %v718
        %v934 = vunpack.c.h.b16 %v718
        %v935 = vunpack.c.l.b16 %v719
        %v936 = vunpack.c.h.b16 %v719
        %v937 = vunpack.c.l.b16 %v720
        %v938 = vunpack.c.h.b16 %v720
        %v939 = vunpack.c.l.b16 %v721
        %v940 = vunpack.c.h.b16 %v721
        %v941 = vunpack.c.l.b16 %v722
        %v942 = vunpack.c.h.b16 %v722
        %v943 = vunpack.c.l.b16 %v723
        %v944 = vunpack.c.h.b16 %v723
        %v945 = vunpack.c.l.b16 %v724
        %v946 = vunpack.c.h.b16 %v724
        %v947 = vunpack.c.l.b16 %v725
        %v948 = vunpack.c.h.b16 %v725
        %v949 = vunpack.c.l.b16 %v726
        %v950 = vunpack.c.h.b16 %v726
        %v951 = vunpack.c.l.b16 %v727
        %v952 = vunpack.c.h.b16 %v727
        %v953 = vunpack.c.l.b16 %v728
        %v954 = vunpack.c.h.b16 %v728
        %v955 = vunpack.c.l.b16 %v729
        %v956 = vunpack.c.h.b16 %v729
        %v957 = vunpack.c.l.b16 %v730
        %v958 = vunpack.c.h.b16 %v730
        %v959 = vunpack.c.l.b16 %v731
        %v960 = vunpack.c.h.b16 %v731
        %v961 = vunpack.c.l.b16 %v732
        %v962 = vunpack.c.h.b16 %v732
        %v963 = vunpack.c.l.b16 %v733
        %v964 = vunpack.c.h.b16 %v733
        %v965 = vunpack.c.l.b16 %v734
        %v966 = vunpack.c.h.b16 %v734
        %v967 = vunpack.c.l.b16 %v735
        %v968 = vunpack.c.h.b16 %v735
        %v969 = vunpack.c.l.b16 %v736
        %v970 = vunpack.c.h.b16 %v736
        %v971 = vpack.c.b16 %v851, %v843
        %v972 = vpack.c.b16 %v852, %v844
        %v973 = vpack.c.b16 %v853, %v845
        %v974 = vpack.c.b16 %v854, %v846
        %v975 = vpack.c.b16 %v855, %v847
        %v976 = vpack.c.b16 %v856, %v848
        %v977 = vpack.c.b16 %v857, %v849
        %v978 = vpack.c.b16 %v858, %v850
        %v979 = vpack.c.b16 %v867, %v859
        %v980 = vpack.c.b16 %v868, %v860
        %v981 = vpack.c.b16 %v869, %v861
        %v982 = vpack.c.b16 %v870, %v862
        %v983 = vpack.c.b16 %v871, %v863
        %v984 = vpack.c.b16 %v872, %v864
        %v985 = vpack.c.b16 %v873, %v865
        %v986 = vpack.c.b16 %v874, %v866
        %v987 = vpack.c.b16 %v883, %v875
        %v988 = vpack.c.b16 %v884, %v876
        %v989 = vpack.c.b16 %v885, %v877
        %v990 = vpack.c.b16 %v886, %v878
        %v991 = vpack.c.b16 %v887, %v879
        %v992 = vpack.c.b16 %v888, %v880
        %v993 = vpack.c.b16 %v889, %v881
        %v994 = vpack.c.b16 %v890, %v882
        %v995 = vpack.c.b16 %v899, %v891
        %v996 = vpack.c.b16 %v900, %v892
        %v997 = vpack.c.b16 %v901, %v893
        %v998 = vpack.c.b16 %v902, %v894
        %v999 = vpack.c.b16 %v903, %v895
        %v1000 = vpack.c.b16 %v904, %v896
        %v1001 = vpack.c.b16 %v905, %v897
        %v1002 = vpack.c.b16 %v906, %v898
        %v1003 = vpack.c.b16 %v915, %v907
        %v1004 = vpack.c.b16 %v916, %v908
        %v1005 = vpack.c.b16 %v917, %v909
        %v1006 = vpack.c.b16 %v918, %v910
        %v1007 = vpack.c.b16 %v919, %v911
        %v1008 = vpack.c.b16 %v920, %v912
        %v1009 = vpack.c.b16 %v921, %v913
        %v1010 = vpack.c.b16 %v922, %v914
        %v1011 = vpack.c.b16 %v931, %v923
        %v1012 = vpack.c.b16 %v932, %v924
        %v1013 = vpack.c.b16 %v933, %v925
        %v1014 = vpack.c.b16 %v934, %v926
        %v1015 = vpack.c.b16 %v935, %v927
        %v1016 = vpack.c.b16 %v936, %v928
        %v1017 = vpack.c.b16 %v937, %v929
        %v1018 = vpack.c.b16 %v938, %v930
        %v1019 = vpack.c.b16 %v947, %v939
        %v1020 = vpack.c.b16 %v948, %v940
        %v1021 = vpack.c.b16 %v949, %v941
        %v1022 = vpack.c.b16 %v950, %v942
        %v1023 = vpack.c.b16 %v951, %v943
        %v1024 = vpack.c.b16 %v952, %v944
        %v1025 = vpack.c.b16 %v953, %v945
        %v1026 = vpack.c.b16 %v954, %v946
        %v1027 = vpack.c.b16 %v963, %v955
        %v1028 = vpack.c.b16 %v964, %v956
        %v1029 = vpack.c.b16 %v965, %v957
        %v1030 = vpack.c.b16 %v966, %v958
        %v1031 = vpack.c.b16 %v967, %v959
        %v1032 = vpack.c.b16 %v968, %v960
        %v1033 = vpack.c.b16 %v969, %v961
        %v1034 = vpack.c.b16 %v970, %v962
        %1099 = vmatprep.subr.bf16.mxu0 %v972
        %1100 = vmatpush1.bf16.msra.mxu0 %v971
        %1101 = vmatprep.subr.bf16.mxu0 %v980
        %1102 = vmatpush1.bf16.msra.mxu0 %v979
        %1103 = vmatprep.subr.bf16.mxu0 %v988
        %1104 = vmatpush1.bf16.msra.mxu0 %v987
        %1105 = vmatprep.subr.bf16.mxu0 %v996
        %1106 = vmatpush1.bf16.msra.mxu0 %v995
        %1107 = vmatprep.subr.bf16.mxu0 %v1004
        %1108 = vmatpush1.bf16.msra.mxu0 %v1003
        %1109 = vmatprep.subr.bf16.mxu0 %v1012
        %1110 = vmatpush1.bf16.msra.mxu0 %v1011
        %1111 = vmatprep.subr.bf16.mxu0 %v1020
        %1112 = vmatpush1.bf16.msra.mxu0 %v1019
        %1113 = vmatprep.subr.bf16.mxu0 %v1028
        %1114 = vmatpush1.bf16.msra.mxu0 %v1027
        %1115 = vmatprep.subr.bf16.mxu0 0
        %1116 = vmatpush1.bf16.msra.mxu0 0
        %1117 = vmatprep.subr.bf16.mxu0 0
        %1118 = vmatpush1.bf16.msra.mxu0 0
        %1119 = vmatprep.subr.bf16.mxu0 0
        %1120 = vmatpush1.bf16.msra.mxu0 0
        %1121 = vmatprep.subr.bf16.mxu0 0
        %1122 = vmatpush1.bf16.msra.mxu0 0
        %1123 = vmatprep.subr.bf16.mxu0 0
        %1124 = vmatpush1.bf16.msra.mxu0 0
        %1125 = vmatprep.subr.bf16.mxu0 0
        %1126 = vmatpush1.bf16.msra.mxu0 0
        %1127 = vmatprep.subr.bf16.mxu0 0
        %1128 = vmatpush1.bf16.msra.mxu0 0
        %1129 = vmatprep.subr.bf16.mxu0 0
        %1130 = vmatpush1.bf16.msra.mxu0 0
        %1131 = vmatprep.mubr.bf16.mxu0 0
        %1132 = vmatmul.mubr.bf16.gmra.mrb[0].mxu0 %v672
        %v1133 = vpop.f32.mrb[0].mxu0
        %v1134 = vadd.f32 %v742, %v1133
        %v1135 = vpop.f32.mrb[0].mxu0
        %v1136 = vadd.f32 %v746, %v1135
        %v1137 = vpop.f32.mrb[0].mxu0
        %v1138 = vadd.f32 %v742, %v1137
        %v1139 = vpop.f32.mrb[0].mxu0
        %v1140 = vadd.f32 %v746, %v1139
        %1141 = vdwg.mxu0
        %1142 = vmatprep.subr.bf16.mxu0 %v974
        %1143 = vmatpush1.bf16.msra.mxu0 %v973
        %1144 = vmatprep.subr.bf16.mxu0 %v982
        %1145 = vmatpush1.bf16.msra.mxu0 %v981
        %1146 = vmatprep.subr.bf16.mxu0 %v990
        %1147 = vmatpush1.bf16.msra.mxu0 %v989
        %1148 = vmatprep.subr.bf16.mxu0 %v998
        %1149 = vmatpush1.bf16.msra.mxu0 %v997
        %1150 = vmatprep.subr.bf16.mxu0 %v1006
        %1151 = vmatpush1.bf16.msra.mxu0 %v1005
        %1152 = vmatprep.subr.bf16.mxu0 %v1014
        %1153 = vmatpush1.bf16.msra.mxu0 %v1013
        %1154 = vmatprep.subr.bf16.mxu0 %v1022
        %1155 = vmatpush1.bf16.msra.mxu0 %v1021
        %1156 = vmatprep.subr.bf16.mxu0 %v1030
        %1157 = vmatpush1.bf16.msra.mxu0 %v1029
        %1158 = vmatprep.subr.bf16.mxu0 0
        %1159 = vmatpush1.bf16.msra.mxu0 0
        %1160 = vmatprep.subr.bf16.mxu0 0
        %1161 = vmatpush1.bf16.msra.mxu0 0
        %1162 = vmatprep.subr.bf16.mxu0 0
        %1163 = vmatpush1.bf16.msra.mxu0 0
        %1164 = vmatprep.subr.bf16.mxu0 0
        %1165 = vmatpush1.bf16.msra.mxu0 0
        %1166 = vmatprep.subr.bf16.mxu0 0
        %1167 = vmatpush1.bf16.msra.mxu0 0
        %1168 = vmatprep.subr.bf16.mxu0 0
        %1169 = vmatpush1.bf16.msra.mxu0 0
        %1170 = vmatprep.subr.bf16.mxu0 0
        %1171 = vmatpush1.bf16.msra.mxu0 0
        %1172 = vmatprep.subr.bf16.mxu0 0
        %1173 = vmatpush1.bf16.msra.mxu0 0
        %1174 = vmatprep.mubr.bf16.mxu0 0
        %1175 = vmatmul.mubr.bf16.gmra.mrb[0].mxu0 %v672
        %v1176 = vpop.f32.mrb[0].mxu0
        %v1177 = vadd.f32 %v750, %v1176
        %v1178 = vpop.f32.mrb[0].mxu0
        %v1179 = vadd.f32 %v754, %v1178
        %v1180 = vpop.f32.mrb[0].mxu0
        %v1181 = vadd.f32 %v750, %v1180
        %v1182 = vpop.f32.mrb[0].mxu0
        %v1183 = vadd.f32 %v754, %v1182
        %1184 = vdwg.mxu0
        %1185 = vmatprep.subr.bf16.mxu0 %v976
        %1186 = vmatpush1.bf16.msra.mxu0 %v975
        %1187 = vmatprep.subr.bf16.mxu0 %v984
        %1188 = vmatpush1.bf16.msra.mxu0 %v983
        %1189 = vmatprep.subr.bf16.mxu0 %v992
        %1190 = vmatpush1.bf16.msra.mxu0 %v991
        %1191 = vmatprep.subr.bf16.mxu0 %v1000
        %1192 = vmatpush1.bf16.msra.mxu0 %v999
        %1193 = vmatprep.subr.bf16.mxu0 %v1008
        %1194 = vmatpush1.bf16.msra.mxu0 %v1007
        %1195 = vmatprep.subr.bf16.mxu0 %v1016
        %1196 = vmatpush1.bf16.msra.mxu0 %v1015
        %1197 = vmatprep.subr.bf16.mxu0 %v1024
        %1198 = vmatpush1.bf16.msra.mxu0 %v1023
        %1199 = vmatprep.subr.bf16.mxu0 %v1032
        %1200 = vmatpush1.bf16.msra.mxu0 %v1031
        %1201 = vmatprep.subr.bf16.mxu0 0
        %1202 = vmatpush1.bf16.msra.mxu0 0
        %1203 = vmatprep.subr.bf16.mxu0 0
        %1204 = vmatpush1.bf16.msra.mxu0 0
        %1205 = vmatprep.subr.bf16.mxu0 0
        %1206 = vmatpush1.bf16.msra.mxu0 0
        %1207 = vmatprep.subr.bf16.mxu0 0
        %1208 = vmatpush1.bf16.msra.mxu0 0
        %1209 = vmatprep.subr.bf16.mxu0 0
        %1210 = vmatpush1.bf16.msra.mxu0 0
        %1211 = vmatprep.subr.bf16.mxu0 0
        %1212 = vmatpush1.bf16.msra.mxu0 0
        %1213 = vmatprep.subr.bf16.mxu0 0
        %1214 = vmatpush1.bf16.msra.mxu0 0
        %1215 = vmatprep.subr.bf16.mxu0 0
        %1216 = vmatpush1.bf16.msra.mxu0 0
        %1217 = vmatprep.mubr.bf16.mxu0 0
        %1218 = vmatmul.mubr.bf16.gmra.mrb[0].mxu0 %v672
        %v1219 = vpop.f32.mrb[0].mxu0
        %v1220 = vadd.f32 %v758, %v1219
        %v1221 = vpop.f32.mrb[0].mxu0
        %v1222 = vadd.f32 %v762, %v1221
        %v1223 = vpop.f32.mrb[0].mxu0
        %v1224 = vadd.f32 %v758, %v1223
        %v1225 = vpop.f32.mrb[0].mxu0
        %v1226 = vadd.f32 %v762, %v1225
        %1227 = vdwg.mxu0
        %1228 = vmatprep.subr.bf16.mxu0 %v978
        %1229 = vmatpush1.bf16.msra.mxu0 %v977
        %1230 = vmatprep.subr.bf16.mxu0 %v986
        %1231 = vmatpush1.bf16.msra.mxu0 %v985
        %1232 = vmatprep.subr.bf16.mxu0 %v994
        %1233 = vmatpush1.bf16.msra.mxu0 %v993
        %1234 = vmatprep.subr.bf16.mxu0 %v1002
        %1235 = vmatpush1.bf16.msra.mxu0 %v1001
        %1236 = vmatprep.subr.bf16.mxu0 %v1010
        %1237 = vmatpush1.bf16.msra.mxu0 %v1009
        %1238 = vmatprep.subr.bf16.mxu0 %v1018
        %1239 = vmatpush1.bf16.msra.mxu0 %v1017
        %1240 = vmatprep.subr.bf16.mxu0 %v1026
        %1241 = vmatpush1.bf16.msra.mxu0 %v1025
        %1242 = vmatprep.subr.bf16.mxu0 %v1034
        %1243 = vmatpush1.bf16.msra.mxu0 %v1033
        %1244 = vmatprep.subr.bf16.mxu0 0
        %1245 = vmatpush1.bf16.msra.mxu0 0
        %1246 = vmatprep.subr.bf16.mxu0 0
        %1247 = vmatpush1.bf16.msra.mxu0 0
        %1248 = vmatprep.subr.bf16.mxu0 0
        %1249 = vmatpush1.bf16.msra.mxu0 0
        %1250 = vmatprep.subr.bf16.mxu0 0
        %1251 = vmatpush1.bf16.msra.mxu0 0
        %1252 = vmatprep.subr.bf16.mxu0 0
        %1253 = vmatpush1.bf16.msra.mxu0 0
        %1254 = vmatprep.subr.bf16.mxu0 0
        %1255 = vmatpush1.bf16.msra.mxu0 0
        %1256 = vmatprep.subr.bf16.mxu0 0
        %1257 = vmatpush1.bf16.msra.mxu0 0
        %1258 = vmatprep.subr.bf16.mxu0 0
        %1259 = vmatpush1.bf16.msra.mxu0 0
        %1260 = vmatprep.mubr.bf16.mxu0 0
        %1261 = vmatmul.mubr.bf16.gmra.mrb[0].mxu0 %v672
        %v1262 = vpop.f32.mrb[0].mxu0
        %v1263 = vadd.f32 %v766, %v1262
        %v1264 = vpop.f32.mrb[0].mxu0
        %v1265 = vadd.f32 %v770, %v1264
        %v1266 = vpop.f32.mrb[0].mxu0
        %v1267 = vadd.f32 %v766, %v1266
        %v1268 = vpop.f32.mrb[0].mxu0
        %v1269 = vadd.f32 %v770, %v1268
        %1270 = vdwg.mxu0
        %v1271 = vld [vmem:[#allocation2] sm:$0xff]
        %v1272 = vld [vmem:[#allocation2 + $0x8] sm:$0xff]
        %v1273 = vld [vmem:[#allocation2 + $0x10] sm:$0xff]
        %v1274 = vld [vmem:[#allocation2 + $0x18] sm:$0xff]
        %v1275 = vld [vmem:[#allocation2 + $0x20] sm:$0xff]
        %v1276 = vld [vmem:[#allocation2 + $0x28] sm:$0xff]
        %v1277 = vld [vmem:[#allocation2 + $0x30] sm:$0xff]
        %v1278 = vld [vmem:[#allocation2 + $0x38] sm:$0xff]
        %v1279 = vmax.f32 %v1134, %v1138
        %v1280 = vmax.f32 %v1136, %v1140
        %v1281 = vmax.f32 %v1177, %v1181
        %v1282 = vmax.f32 %v1179, %v1183
        %v1283 = vmax.f32 %v1220, %v1224
        %v1284 = vmax.f32 %v1222, %v1226
        %v1285 = vmax.f32 %v1263, %v1267
        %v1286 = vmax.f32 %v1265, %v1269
        %v1287 = vmax.f32 %v1271, %v1279
        %v1288 = vmax.f32 %v1272, %v1280
        %v1289 = vmax.f32 %v1273, %v1281
        %v1290 = vmax.f32 %v1274, %v1282
        %v1291 = vmax.f32 %v1275, %v1283
        %v1292 = vmax.f32 %v1276, %v1284
        %v1293 = vmax.f32 %v1277, %v1285
        %v1294 = vmax.f32 %v1278, %v1286
        %1295 = vst [vmem:[#allocation2] sm:$0xff] %v1287
        %1296 = vst [vmem:[#allocation2 + $0x8] sm:$0xff] %v1288
        %1297 = vst [vmem:[#allocation2 + $0x10] sm:$0xff] %v1289
        %1298 = vst [vmem:[#allocation2 + $0x18] sm:$0xff] %v1290
        %1299 = vst [vmem:[#allocation2 + $0x20] sm:$0xff] %v1291
        %1300 = vst [vmem:[#allocation2 + $0x28] sm:$0xff] %v1292
        %1301 = vst [vmem:[#allocation2 + $0x30] sm:$0xff] %v1293
        %1302 = vst [vmem:[#allocation2 + $0x38] sm:$0xff] %v1294
        // Predicated region
        $region89: #{tpu_custom_call.1} parent=71 // pred_check
          %p1303 = pneg %p574
        $region90: #{tpu_custom_call.1} parent=71 // pred_check_branch
          %1305 = sbr.rel (%p1303) target = $region92
        $region91: #{tpu_custom_call.1} parent=71 // pred_region
          %v1306 = vld [vmem:[#allocation2] sm:$0xff]
          %v1307 = vld [vmem:[#allocation2 + $0x8] sm:$0xff]
          %v1308 = vld [vmem:[#allocation2 + $0x10] sm:$0xff]
          %v1309 = vld [vmem:[#allocation2 + $0x18] sm:$0xff]
          %v1310 = vld [vmem:[#allocation2 + $0x20] sm:$0xff]
          %v1311 = vld [vmem:[#allocation2 + $0x28] sm:$0xff]
          %v1312 = vld [vmem:[#allocation2 + $0x30] sm:$0xff]
          %v1313 = vld [vmem:[#allocation2 + $0x38] sm:$0xff]
          %v1314 = vrot.slane %v1306, 4
          %v1315 = vmax.f32 %v1306, %v1314
          %v1316 = vrot.slane %v1315, 2
          %v1317 = vmax.f32 %v1315, %v1316
          %v1318 = vrot.slane %v1317, 1
          %v1319 = vmax.f32 %v1317, %v1318
          %v1320 = vrot.slane %v1307, 4
          %v1321 = vmax.f32 %v1307, %v1320
          %v1322 = vrot.slane %v1321, 2
          %v1323 = vmax.f32 %v1321, %v1322
          %v1324 = vrot.slane %v1323, 1
          %v1325 = vmax.f32 %v1323, %v1324
          %v1326 = vrot.slane %v1308, 4
          %v1327 = vmax.f32 %v1308, %v1326
          %v1328 = vrot.slane %v1327, 2
          %v1329 = vmax.f32 %v1327, %v1328
          %v1330 = vrot.slane %v1329, 1
          %v1331 = vmax.f32 %v1329, %v1330
          %v1332 = vrot.slane %v1309, 4
          %v1333 = vmax.f32 %v1309, %v1332
          %v1334 = vrot.slane %v1333, 2
          %v1335 = vmax.f32 %v1333, %v1334
          %v1336 = vrot.slane %v1335, 1
          %v1337 = vmax.f32 %v1335, %v1336
          %v1338 = vrot.slane %v1310, 4
          %v1339 = vmax.f32 %v1310, %v1338
          %v1340 = vrot.slane %v1339, 2
          %v1341 = vmax.f32 %v1339, %v1340
          %v1342 = vrot.slane %v1341, 1
          %v1343 = vmax.f32 %v1341, %v1342
          %v1344 = vrot.slane %v1311, 4
          %v1345 = vmax.f32 %v1311, %v1344
          %v1346 = vrot.slane %v1345, 2
          %v1347 = vmax.f32 %v1345, %v1346
          %v1348 = vrot.slane %v1347, 1
          %v1349 = vmax.f32 %v1347, %v1348
          %v1350 = vrot.slane %v1312, 4
          %v1351 = vmax.f32 %v1312, %v1350
          %v1352 = vrot.slane %v1351, 2
          %v1353 = vmax.f32 %v1351, %v1352
          %v1354 = vrot.slane %v1353, 1
          %v1355 = vmax.f32 %v1353, %v1354
          %v1356 = vrot.slane %v1313, 4
          %v1357 = vmax.f32 %v1313, %v1356
          %v1358 = vrot.slane %v1357, 2
          %v1359 = vmax.f32 %v1357, %v1358
          %v1360 = vrot.slane %v1359, 1
          %v1361 = vmax.f32 %v1359, %v1360
          %v1362 = vpack.c.bf16 %v1319, %v1319
          %v1363 = vpack.c.bf16 %v1325, %v1325
          %v1364 = vpack.c.bf16 %v1331, %v1331
          %v1365 = vpack.c.bf16 %v1337, %v1337
          %v1366 = vpack.c.bf16 %v1343, %v1343
          %v1367 = vpack.c.bf16 %v1349, %v1349
          %v1368 = vpack.c.bf16 %v1355, %v1355
          %v1369 = vpack.c.bf16 %v1361, %v1361
          %v1370 = vld [vmem:[#allocation6] sm:$0xff]
          %v1371 = vld [vmem:[#allocation6 + $0x8] sm:$0xff]
          %v1372 = vld [vmem:[#allocation6 + $0x10] sm:$0xff]
          %v1373 = vld [vmem:[#allocation6 + $0x18] sm:$0xff]
          %v1374 = vld [vmem:[#allocation6 + $0x20] sm:$0xff]
          %v1375 = vld [vmem:[#allocation6 + $0x28] sm:$0xff]
          %v1376 = vld [vmem:[#allocation6 + $0x30] sm:$0xff]
          %v1377 = vld [vmem:[#allocation6 + $0x38] sm:$0xff]
          %v1378 = vld [vmem:[#allocation6 + $0x40] sm:$0xff]
          %v1379 = vld [vmem:[#allocation6 + $0x48] sm:$0xff]
          %v1380 = vld [vmem:[#allocation6 + $0x50] sm:$0xff]
          %v1381 = vld [vmem:[#allocation6 + $0x58] sm:$0xff]
          %v1382 = vld [vmem:[#allocation6 + $0x60] sm:$0xff]
          %v1383 = vld [vmem:[#allocation6 + $0x68] sm:$0xff]
          %v1384 = vld [vmem:[#allocation6 + $0x70] sm:$0xff]
          %v1385 = vld [vmem:[#allocation6 + $0x78] sm:$0xff]
          %v1386 = vld [vmem:[#allocation6 + $0x80] sm:$0xff]
          %v1387 = vld [vmem:[#allocation6 + $0x88] sm:$0xff]
          %v1388 = vld [vmem:[#allocation6 + $0x90] sm:$0xff]
          %v1389 = vld [vmem:[#allocation6 + $0x98] sm:$0xff]
          %v1390 = vld [vmem:[#allocation6 + $0xa0] sm:$0xff]
          %v1391 = vld [vmem:[#allocation6 + $0xa8] sm:$0xff]
          %v1392 = vld [vmem:[#allocation6 + $0xb0] sm:$0xff]
          %v1393 = vld [vmem:[#allocation6 + $0xb8] sm:$0xff]
          %v1394 = vld [vmem:[#allocation6 + $0xc0] sm:$0xff]
          %v1395 = vld [vmem:[#allocation6 + $0xc8] sm:$0xff]
          %v1396 = vld [vmem:[#allocation6 + $0xd0] sm:$0xff]
          %v1397 = vld [vmem:[#allocation6 + $0xd8] sm:$0xff]
          %v1398 = vld [vmem:[#allocation6 + $0xe0] sm:$0xff]
          %v1399 = vld [vmem:[#allocation6 + $0xe8] sm:$0xff]
          %v1400 = vld [vmem:[#allocation6 + $0xf0] sm:$0xff]
          %v1401 = vld [vmem:[#allocation6 + $0xf8] sm:$0xff]
          %v1402 = vld [vmem:[#allocation6 + $0x100] sm:$0xff]
          %v1403 = vld [vmem:[#allocation6 + $0x108] sm:$0xff]
          %v1404 = vld [vmem:[#allocation6 + $0x110] sm:$0xff]
          %v1405 = vld [vmem:[#allocation6 + $0x118] sm:$0xff]
          %v1406 = vld [vmem:[#allocation6 + $0x120] sm:$0xff]
          %v1407 = vld [vmem:[#allocation6 + $0x128] sm:$0xff]
          %v1408 = vld [vmem:[#allocation6 + $0x130] sm:$0xff]
          %v1409 = vld [vmem:[#allocation6 + $0x138] sm:$0xff]
          %v1410 = vld [vmem:[#allocation6 + $0x140] sm:$0xff]
          %v1411 = vld [vmem:[#allocation6 + $0x148] sm:$0xff]
          %v1412 = vld [vmem:[#allocation6 + $0x150] sm:$0xff]
          %v1413 = vld [vmem:[#allocation6 + $0x158] sm:$0xff]
          %v1414 = vld [vmem:[#allocation6 + $0x160] sm:$0xff]
          %v1415 = vld [vmem:[#allocation6 + $0x168] sm:$0xff]
          %v1416 = vld [vmem:[#allocation6 + $0x170] sm:$0xff]
          %v1417 = vld [vmem:[#allocation6 + $0x178] sm:$0xff]
          %v1418 = vld [vmem:[#allocation6 + $0x180] sm:$0xff]
          %v1419 = vld [vmem:[#allocation6 + $0x188] sm:$0xff]
          %v1420 = vld [vmem:[#allocation6 + $0x190] sm:$0xff]
          %v1421 = vld [vmem:[#allocation6 + $0x198] sm:$0xff]
          %v1422 = vld [vmem:[#allocation6 + $0x1a0] sm:$0xff]
          %v1423 = vld [vmem:[#allocation6 + $0x1a8] sm:$0xff]
          %v1424 = vld [vmem:[#allocation6 + $0x1b0] sm:$0xff]
          %v1425 = vld [vmem:[#allocation6 + $0x1b8] sm:$0xff]
          %v1426 = vld [vmem:[#allocation6 + $0x1c0] sm:$0xff]
          %v1427 = vld [vmem:[#allocation6 + $0x1c8] sm:$0xff]
          %v1428 = vld [vmem:[#allocation6 + $0x1d0] sm:$0xff]
          %v1429 = vld [vmem:[#allocation6 + $0x1d8] sm:$0xff]
          %v1430 = vld [vmem:[#allocation6 + $0x1e0] sm:$0xff]
          %v1431 = vld [vmem:[#allocation6 + $0x1e8] sm:$0xff]
          %v1432 = vld [vmem:[#allocation6 + $0x1f0] sm:$0xff]
          %v1433 = vld [vmem:[#allocation6 + $0x1f8] sm:$0xff]
          %v1434 = vld [vmem:[#allocation6 + $0x200] sm:$0xff]
          %v1435 = vld [vmem:[#allocation6 + $0x208] sm:$0xff]
          %v1436 = vld [vmem:[#allocation6 + $0x210] sm:$0xff]
          %v1437 = vld [vmem:[#allocation6 + $0x218] sm:$0xff]
          %v1438 = vld [vmem:[#allocation6 + $0x220] sm:$0xff]
          %v1439 = vld [vmem:[#allocation6 + $0x228] sm:$0xff]
          %v1440 = vld [vmem:[#allocation6 + $0x230] sm:$0xff]
          %v1441 = vld [vmem:[#allocation6 + $0x238] sm:$0xff]
          %v1442 = vld [vmem:[#allocation6 + $0x240] sm:$0xff]
          %v1443 = vld [vmem:[#allocation6 + $0x248] sm:$0xff]
          %v1444 = vld [vmem:[#allocation6 + $0x250] sm:$0xff]
          %v1445 = vld [vmem:[#allocation6 + $0x258] sm:$0xff]
          %v1446 = vld [vmem:[#allocation6 + $0x260] sm:$0xff]
          %v1447 = vld [vmem:[#allocation6 + $0x268] sm:$0xff]
          %v1448 = vld [vmem:[#allocation6 + $0x270] sm:$0xff]
          %v1449 = vld [vmem:[#allocation6 + $0x278] sm:$0xff]
          %v1450 = vld [vmem:[#allocation6 + $0x280] sm:$0xff]
          %v1451 = vld [vmem:[#allocation6 + $0x288] sm:$0xff]
          %v1452 = vld [vmem:[#allocation6 + $0x290] sm:$0xff]
          %v1453 = vld [vmem:[#allocation6 + $0x298] sm:$0xff]
          %v1454 = vld [vmem:[#allocation6 + $0x2a0] sm:$0xff]
          %v1455 = vld [vmem:[#allocation6 + $0x2a8] sm:$0xff]
          %v1456 = vld [vmem:[#allocation6 + $0x2b0] sm:$0xff]
          %v1457 = vld [vmem:[#allocation6 + $0x2b8] sm:$0xff]
          %v1458 = vld [vmem:[#allocation6 + $0x2c0] sm:$0xff]
          %v1459 = vld [vmem:[#allocation6 + $0x2c8] sm:$0xff]
          %v1460 = vld [vmem:[#allocation6 + $0x2d0] sm:$0xff]
          %v1461 = vld [vmem:[#allocation6 + $0x2d8] sm:$0xff]
          %v1462 = vld [vmem:[#allocation6 + $0x2e0] sm:$0xff]
          %v1463 = vld [vmem:[#allocation6 + $0x2e8] sm:$0xff]
          %v1464 = vld [vmem:[#allocation6 + $0x2f0] sm:$0xff]
          %v1465 = vld [vmem:[#allocation6 + $0x2f8] sm:$0xff]
          %v1466 = vld [vmem:[#allocation6 + $0x300] sm:$0xff]
          %v1467 = vld [vmem:[#allocation6 + $0x308] sm:$0xff]
          %v1468 = vld [vmem:[#allocation6 + $0x310] sm:$0xff]
          %v1469 = vld [vmem:[#allocation6 + $0x318] sm:$0xff]
          %v1470 = vld [vmem:[#allocation6 + $0x320] sm:$0xff]
          %v1471 = vld [vmem:[#allocation6 + $0x328] sm:$0xff]
          %v1472 = vld [vmem:[#allocation6 + $0x330] sm:$0xff]
          %v1473 = vld [vmem:[#allocation6 + $0x338] sm:$0xff]
          %v1474 = vld [vmem:[#allocation6 + $0x340] sm:$0xff]
          %v1475 = vld [vmem:[#allocation6 + $0x348] sm:$0xff]
          %v1476 = vld [vmem:[#allocation6 + $0x350] sm:$0xff]
          %v1477 = vld [vmem:[#allocation6 + $0x358] sm:$0xff]
          %v1478 = vld [vmem:[#allocation6 + $0x360] sm:$0xff]
          %v1479 = vld [vmem:[#allocation6 + $0x368] sm:$0xff]
          %v1480 = vld [vmem:[#allocation6 + $0x370] sm:$0xff]
          %v1481 = vld [vmem:[#allocation6 + $0x378] sm:$0xff]
          %v1482 = vld [vmem:[#allocation6 + $0x380] sm:$0xff]
          %v1483 = vld [vmem:[#allocation6 + $0x388] sm:$0xff]
          %v1484 = vld [vmem:[#allocation6 + $0x390] sm:$0xff]
          %v1485 = vld [vmem:[#allocation6 + $0x398] sm:$0xff]
          %v1486 = vld [vmem:[#allocation6 + $0x3a0] sm:$0xff]
          %v1487 = vld [vmem:[#allocation6 + $0x3a8] sm:$0xff]
          %v1488 = vld [vmem:[#allocation6 + $0x3b0] sm:$0xff]
          %v1489 = vld [vmem:[#allocation6 + $0x3b8] sm:$0xff]
          %v1490 = vld [vmem:[#allocation6 + $0x3c0] sm:$0xff]
          %v1491 = vld [vmem:[#allocation6 + $0x3c8] sm:$0xff]
          %v1492 = vld [vmem:[#allocation6 + $0x3d0] sm:$0xff]
          %v1493 = vld [vmem:[#allocation6 + $0x3d8] sm:$0xff]
          %v1494 = vld [vmem:[#allocation6 + $0x3e0] sm:$0xff]
          %v1495 = vld [vmem:[#allocation6 + $0x3e8] sm:$0xff]
          %v1496 = vld [vmem:[#allocation6 + $0x3f0] sm:$0xff]
          %v1497 = vld [vmem:[#allocation6 + $0x3f8] sm:$0xff]
          %v1498 = vld [vmem:[#allocation6 + $0x400] sm:$0xff]
          %v1499 = vld [vmem:[#allocation6 + $0x408] sm:$0xff]
          %v1500 = vld [vmem:[#allocation6 + $0x410] sm:$0xff]
          %v1501 = vld [vmem:[#allocation6 + $0x418] sm:$0xff]
          %v1502 = vld [vmem:[#allocation6 + $0x420] sm:$0xff]
          %v1503 = vld [vmem:[#allocation6 + $0x428] sm:$0xff]
          %v1504 = vld [vmem:[#allocation6 + $0x430] sm:$0xff]
          %v1505 = vld [vmem:[#allocation6 + $0x438] sm:$0xff]
          %v1506 = vld [vmem:[#allocation6 + $0x440] sm:$0xff]
          %v1507 = vld [vmem:[#allocation6 + $0x448] sm:$0xff]
          %v1508 = vld [vmem:[#allocation6 + $0x450] sm:$0xff]
          %v1509 = vld [vmem:[#allocation6 + $0x458] sm:$0xff]
          %v1510 = vld [vmem:[#allocation6 + $0x460] sm:$0xff]
          %v1511 = vld [vmem:[#allocation6 + $0x468] sm:$0xff]
          %v1512 = vld [vmem:[#allocation6 + $0x470] sm:$0xff]
          %v1513 = vld [vmem:[#allocation6 + $0x478] sm:$0xff]
          %v1514 = vld [vmem:[#allocation6 + $0x480] sm:$0xff]
          %v1515 = vld [vmem:[#allocation6 + $0x488] sm:$0xff]
          %v1516 = vld [vmem:[#allocation6 + $0x490] sm:$0xff]
          %v1517 = vld [vmem:[#allocation6 + $0x498] sm:$0xff]
          %v1518 = vld [vmem:[#allocation6 + $0x4a0] sm:$0xff]
          %v1519 = vld [vmem:[#allocation6 + $0x4a8] sm:$0xff]
          %v1520 = vld [vmem:[#allocation6 + $0x4b0] sm:$0xff]
          %v1521 = vld [vmem:[#allocation6 + $0x4b8] sm:$0xff]
          %v1522 = vld [vmem:[#allocation6 + $0x4c0] sm:$0xff]
          %v1523 = vld [vmem:[#allocation6 + $0x4c8] sm:$0xff]
          %v1524 = vld [vmem:[#allocation6 + $0x4d0] sm:$0xff]
          %v1525 = vld [vmem:[#allocation6 + $0x4d8] sm:$0xff]
          %v1526 = vld [vmem:[#allocation6 + $0x4e0] sm:$0xff]
          %v1527 = vld [vmem:[#allocation6 + $0x4e8] sm:$0xff]
          %v1528 = vld [vmem:[#allocation6 + $0x4f0] sm:$0xff]
          %v1529 = vld [vmem:[#allocation6 + $0x4f8] sm:$0xff]
          %v1530 = vld [vmem:[#allocation6 + $0x500] sm:$0xff]
          %v1531 = vld [vmem:[#allocation6 + $0x508] sm:$0xff]
          %v1532 = vld [vmem:[#allocation6 + $0x510] sm:$0xff]
          %v1533 = vld [vmem:[#allocation6 + $0x518] sm:$0xff]
          %v1534 = vld [vmem:[#allocation6 + $0x520] sm:$0xff]
          %v1535 = vld [vmem:[#allocation6 + $0x528] sm:$0xff]
          %v1536 = vld [vmem:[#allocation6 + $0x530] sm:$0xff]
          %v1537 = vld [vmem:[#allocation6 + $0x538] sm:$0xff]
          %v1538 = vld [vmem:[#allocation6 + $0x540] sm:$0xff]
          %v1539 = vld [vmem:[#allocation6 + $0x548] sm:$0xff]
          %v1540 = vld [vmem:[#allocation6 + $0x550] sm:$0xff]
          %v1541 = vld [vmem:[#allocation6 + $0x558] sm:$0xff]
          %v1542 = vld [vmem:[#allocation6 + $0x560] sm:$0xff]
          %v1543 = vld [vmem:[#allocation6 + $0x568] sm:$0xff]
          %v1544 = vld [vmem:[#allocation6 + $0x570] sm:$0xff]
          %v1545 = vld [vmem:[#allocation6 + $0x578] sm:$0xff]
          %v1546 = vld [vmem:[#allocation6 + $0x580] sm:$0xff]
          %v1547 = vld [vmem:[#allocation6 + $0x588] sm:$0xff]
          %v1548 = vld [vmem:[#allocation6 + $0x590] sm:$0xff]
          %v1549 = vld [vmem:[#allocation6 + $0x598] sm:$0xff]
          %v1550 = vld [vmem:[#allocation6 + $0x5a0] sm:$0xff]
          %v1551 = vld [vmem:[#allocation6 + $0x5a8] sm:$0xff]
          %v1552 = vld [vmem:[#allocation6 + $0x5b0] sm:$0xff]
          %v1553 = vld [vmem:[#allocation6 + $0x5b8] sm:$0xff]
          %v1554 = vld [vmem:[#allocation6 + $0x5c0] sm:$0xff]
          %v1555 = vld [vmem:[#allocation6 + $0x5c8] sm:$0xff]
          %v1556 = vld [vmem:[#allocation6 + $0x5d0] sm:$0xff]
          %v1557 = vld [vmem:[#allocation6 + $0x5d8] sm:$0xff]
          %v1558 = vld [vmem:[#allocation6 + $0x5e0] sm:$0xff]
          %v1559 = vld [vmem:[#allocation6 + $0x5e8] sm:$0xff]
          %v1560 = vld [vmem:[#allocation6 + $0x5f0] sm:$0xff]
          %v1561 = vld [vmem:[#allocation6 + $0x5f8] sm:$0xff]
          %v1562 = vld [vmem:[#allocation6 + $0x600] sm:$0xff]
          %v1563 = vld [vmem:[#allocation6 + $0x608] sm:$0xff]
          %v1564 = vld [vmem:[#allocation6 + $0x610] sm:$0xff]
          %v1565 = vld [vmem:[#allocation6 + $0x618] sm:$0xff]
          %v1566 = vld [vmem:[#allocation6 + $0x620] sm:$0xff]
          %v1567 = vld [vmem:[#allocation6 + $0x628] sm:$0xff]
          %v1568 = vld [vmem:[#allocation6 + $0x630] sm:$0xff]
          %v1569 = vld [vmem:[#allocation6 + $0x638] sm:$0xff]
          %v1570 = vld [vmem:[#allocation6 + $0x640] sm:$0xff]
          %v1571 = vld [vmem:[#allocation6 + $0x648] sm:$0xff]
          %v1572 = vld [vmem:[#allocation6 + $0x650] sm:$0xff]
          %v1573 = vld [vmem:[#allocation6 + $0x658] sm:$0xff]
          %v1574 = vld [vmem:[#allocation6 + $0x660] sm:$0xff]
          %v1575 = vld [vmem:[#allocation6 + $0x668] sm:$0xff]
          %v1576 = vld [vmem:[#allocation6 + $0x670] sm:$0xff]
          %v1577 = vld [vmem:[#allocation6 + $0x678] sm:$0xff]
          %v1578 = vld [vmem:[#allocation6 + $0x680] sm:$0xff]
          %v1579 = vld [vmem:[#allocation6 + $0x688] sm:$0xff]
          %v1580 = vld [vmem:[#allocation6 + $0x690] sm:$0xff]
          %v1581 = vld [vmem:[#allocation6 + $0x698] sm:$0xff]
          %v1582 = vld [vmem:[#allocation6 + $0x6a0] sm:$0xff]
          %v1583 = vld [vmem:[#allocation6 + $0x6a8] sm:$0xff]
          %v1584 = vld [vmem:[#allocation6 + $0x6b0] sm:$0xff]
          %v1585 = vld [vmem:[#allocation6 + $0x6b8] sm:$0xff]
          %v1586 = vld [vmem:[#allocation6 + $0x6c0] sm:$0xff]
          %v1587 = vld [vmem:[#allocation6 + $0x6c8] sm:$0xff]
          %v1588 = vld [vmem:[#allocation6 + $0x6d0] sm:$0xff]
          %v1589 = vld [vmem:[#allocation6 + $0x6d8] sm:$0xff]
          %v1590 = vld [vmem:[#allocation6 + $0x6e0] sm:$0xff]
          %v1591 = vld [vmem:[#allocation6 + $0x6e8] sm:$0xff]
          %v1592 = vld [vmem:[#allocation6 + $0x6f0] sm:$0xff]
          %v1593 = vld [vmem:[#allocation6 + $0x6f8] sm:$0xff]
          %v1594 = vld [vmem:[#allocation6 + $0x700] sm:$0xff]
          %v1595 = vld [vmem:[#allocation6 + $0x708] sm:$0xff]
          %v1596 = vld [vmem:[#allocation6 + $0x710] sm:$0xff]
          %v1597 = vld [vmem:[#allocation6 + $0x718] sm:$0xff]
          %v1598 = vld [vmem:[#allocation6 + $0x720] sm:$0xff]
          %v1599 = vld [vmem:[#allocation6 + $0x728] sm:$0xff]
          %v1600 = vld [vmem:[#allocation6 + $0x730] sm:$0xff]
          %v1601 = vld [vmem:[#allocation6 + $0x738] sm:$0xff]
          %v1602 = vld [vmem:[#allocation6 + $0x740] sm:$0xff]
          %v1603 = vld [vmem:[#allocation6 + $0x748] sm:$0xff]
          %v1604 = vld [vmem:[#allocation6 + $0x750] sm:$0xff]
          %v1605 = vld [vmem:[#allocation6 + $0x758] sm:$0xff]
          %v1606 = vld [vmem:[#allocation6 + $0x760] sm:$0xff]
          %v1607 = vld [vmem:[#allocation6 + $0x768] sm:$0xff]
          %v1608 = vld [vmem:[#allocation6 + $0x770] sm:$0xff]
          %v1609 = vld [vmem:[#allocation6 + $0x778] sm:$0xff]
          %v1610 = vld [vmem:[#allocation6 + $0x780] sm:$0xff]
          %v1611 = vld [vmem:[#allocation6 + $0x788] sm:$0xff]
          %v1612 = vld [vmem:[#allocation6 + $0x790] sm:$0xff]
          %v1613 = vld [vmem:[#allocation6 + $0x798] sm:$0xff]
          %v1614 = vld [vmem:[#allocation6 + $0x7a0] sm:$0xff]
          %v1615 = vld [vmem:[#allocation6 + $0x7a8] sm:$0xff]
          %v1616 = vld [vmem:[#allocation6 + $0x7b0] sm:$0xff]
          %v1617 = vld [vmem:[#allocation6 + $0x7b8] sm:$0xff]
          %v1618 = vld [vmem:[#allocation6 + $0x7c0] sm:$0xff]
          %v1619 = vld [vmem:[#allocation6 + $0x7c8] sm:$0xff]
          %v1620 = vld [vmem:[#allocation6 + $0x7d0] sm:$0xff]
          %v1621 = vld [vmem:[#allocation6 + $0x7d8] sm:$0xff]
          %v1622 = vld [vmem:[#allocation6 + $0x7e0] sm:$0xff]
          %v1623 = vld [vmem:[#allocation6 + $0x7e8] sm:$0xff]
          %v1624 = vld [vmem:[#allocation6 + $0x7f0] sm:$0xff]
          %v1625 = vld [vmem:[#allocation6 + $0x7f8] sm:$0xff]
          %v1626 = vld [vmem:[%s8] sm:$0xf]
          %v1883 = vunpack.c.l.b16 %v1370
          %v1884 = vunpack.c.h.b16 %v1370
          %v1885 = vunpack.c.l.b16 %v1371
          %v1886 = vunpack.c.h.b16 %v1371
          %v1887 = vunpack.c.l.b16 %v1372
          %v1888 = vunpack.c.h.b16 %v1372
          %v1889 = vunpack.c.l.b16 %v1373
          %v1890 = vunpack.c.h.b16 %v1373
          %v1891 = vunpack.c.l.b16 %v1374
          %v1892 = vunpack.c.h.b16 %v1374
          %v1893 = vunpack.c.l.b16 %v1375
          %v1894 = vunpack.c.h.b16 %v1375
          %v1895 = vunpack.c.l.b16 %v1376
          %v1896 = vunpack.c.h.b16 %v1376
          %v1897 = vunpack.c.l.b16 %v1377
          %v1898 = vunpack.c.h.b16 %v1377
          %v1899 = vunpack.c.l.b16 %v1378
          %v1900 = vunpack.c.h.b16 %v1378
          %v1901 = vunpack.c.l.b16 %v1379
          %v1902 = vunpack.c.h.b16 %v1379
          %v1903 = vunpack.c.l.b16 %v1380
          %v1904 = vunpack.c.h.b16 %v1380
          %v1905 = vunpack.c.l.b16 %v1381
          %v1906 = vunpack.c.h.b16 %v1381
          %v1907 = vunpack.c.l.b16 %v1382
          %v1908 = vunpack.c.h.b16 %v1382
          %v1909 = vunpack.c.l.b16 %v1383
          %v1910 = vunpack.c.h.b16 %v1383
          %v1911 = vunpack.c.l.b16 %v1384
          %v1912 = vunpack.c.h.b16 %v1384
          %v1913 = vunpack.c.l.b16 %v1385
          %v1914 = vunpack.c.h.b16 %v1385
          %v1915 = vunpack.c.l.b16 %v1386
          %v1916 = vunpack.c.h.b16 %v1386
          %v1917 = vunpack.c.l.b16 %v1387
          %v1918 = vunpack.c.h.b16 %v1387
          %v1919 = vunpack.c.l.b16 %v1388
          %v1920 = vunpack.c.h.b16 %v1388
          %v1921 = vunpack.c.l.b16 %v1389
          %v1922 = vunpack.c.h.b16 %v1389
          %v1923 = vunpack.c.l.b16 %v1390
          %v1924 = vunpack.c.h.b16 %v1390
          %v1925 = vunpack.c.l.b16 %v1391
          %v1926 = vunpack.c.h.b16 %v1391
          %v1927 = vunpack.c.l.b16 %v1392
          %v1928 = vunpack.c.h.b16 %v1392
          %v1929 = vunpack.c.l.b16 %v1393
          %v1930 = vunpack.c.h.b16 %v1393
          %v1931 = vunpack.c.l.b16 %v1394
          %v1932 = vunpack.c.h.b16 %v1394
          %v1933 = vunpack.c.l.b16 %v1395
          %v1934 = vunpack.c.h.b16 %v1395
          %v1935 = vunpack.c.l.b16 %v1396
          %v1936 = vunpack.c.h.b16 %v1396
          %v1937 = vunpack.c.l.b16 %v1397
          %v1938 = vunpack.c.h.b16 %v1397
          %v1939 = vunpack.c.l.b16 %v1398
          %v1940 = vunpack.c.h.b16 %v1398
          %v1941 = vunpack.c.l.b16 %v1399
          %v1942 = vunpack.c.h.b16 %v1399
          %v1943 = vunpack.c.l.b16 %v1400
          %v1944 = vunpack.c.h.b16 %v1400
          %v1945 = vunpack.c.l.b16 %v1401
          %v1946 = vunpack.c.h.b16 %v1401
          %v1947 = vunpack.c.l.b16 %v1402
          %v1948 = vunpack.c.h.b16 %v1402
          %v1949 = vunpack.c.l.b16 %v1403
          %v1950 = vunpack.c.h.b16 %v1403
          %v1951 = vunpack.c.l.b16 %v1404
          %v1952 = vunpack.c.h.b16 %v1404
          %v1953 = vunpack.c.l.b16 %v1405
          %v1954 = vunpack.c.h.b16 %v1405
          %v1955 = vunpack.c.l.b16 %v1406
          %v1956 = vunpack.c.h.b16 %v1406
          %v1957 = vunpack.c.l.b16 %v1407
          %v1958 = vunpack.c.h.b16 %v1407
          %v1959 = vunpack.c.l.b16 %v1408
          %v1960 = vunpack.c.h.b16 %v1408
          %v1961 = vunpack.c.l.b16 %v1409
          %v1962 = vunpack.c.h.b16 %v1409
          %v1963 = vunpack.c.l.b16 %v1410
          %v1964 = vunpack.c.h.b16 %v1410
          %v1965 = vunpack.c.l.b16 %v1411
          %v1966 = vunpack.c.h.b16 %v1411
          %v1967 = vunpack.c.l.b16 %v1412
          %v1968 = vunpack.c.h.b16 %v1412
          %v1969 = vunpack.c.l.b16 %v1413
          %v1970 = vunpack.c.h.b16 %v1413
          %v1971 = vunpack.c.l.b16 %v1414
          %v1972 = vunpack.c.h.b16 %v1414
          %v1973 = vunpack.c.l.b16 %v1415
          %v1974 = vunpack.c.h.b16 %v1415
          %v1975 = vunpack.c.l.b16 %v1416
          %v1976 = vunpack.c.h.b16 %v1416
          %v1977 = vunpack.c.l.b16 %v1417
          %v1978 = vunpack.c.h.b16 %v1417
          %v1979 = vunpack.c.l.b16 %v1418
          %v1980 = vunpack.c.h.b16 %v1418
          %v1981 = vunpack.c.l.b16 %v1419
          %v1982 = vunpack.c.h.b16 %v1419
          %v1983 = vunpack.c.l.b16 %v1420
          %v1984 = vunpack.c.h.b16 %v1420
          %v1985 = vunpack.c.l.b16 %v1421
          %v1986 = vunpack.c.h.b16 %v1421
          %v1987 = vunpack.c.l.b16 %v1422
          %v1988 = vunpack.c.h.b16 %v1422
          %v1989 = vunpack.c.l.b16 %v1423
          %v1990 = vunpack.c.h.b16 %v1423
          %v1991 = vunpack.c.l.b16 %v1424
          %v1992 = vunpack.c.h.b16 %v1424
          %v1993 = vunpack.c.l.b16 %v1425
          %v1994 = vunpack.c.h.b16 %v1425
          %v1995 = vunpack.c.l.b16 %v1426
          %v1996 = vunpack.c.h.b16 %v1426
          %v1997 = vunpack.c.l.b16 %v1427
          %v1998 = vunpack.c.h.b16 %v1427
          %v1999 = vunpack.c.l.b16 %v1428
          %v2000 = vunpack.c.h.b16 %v1428
          %v2001 = vunpack.c.l.b16 %v1429
          %v2002 = vunpack.c.h.b16 %v1429
          %v2003 = vunpack.c.l.b16 %v1430
          %v2004 = vunpack.c.h.b16 %v1430
          %v2005 = vunpack.c.l.b16 %v1431
          %v2006 = vunpack.c.h.b16 %v1431
          %v2007 = vunpack.c.l.b16 %v1432
          %v2008 = vunpack.c.h.b16 %v1432
          %v2009 = vunpack.c.l.b16 %v1433
          %v2010 = vunpack.c.h.b16 %v1433
          %v2011 = vunpack.c.l.b16 %v1434
          %v2012 = vunpack.c.h.b16 %v1434
          %v2013 = vunpack.c.l.b16 %v1435
          %v2014 = vunpack.c.h.b16 %v1435
          %v2015 = vunpack.c.l.b16 %v1436
          %v2016 = vunpack.c.h.b16 %v1436
          %v2017 = vunpack.c.l.b16 %v1437
          %v2018 = vunpack.c.h.b16 %v1437
          %v2019 = vunpack.c.l.b16 %v1438
          %v2020 = vunpack.c.h.b16 %v1438
          %v2021 = vunpack.c.l.b16 %v1439
          %v2022 = vunpack.c.h.b16 %v1439
          %v2023 = vunpack.c.l.b16 %v1440
          %v2024 = vunpack.c.h.b16 %v1440
          %v2025 = vunpack.c.l.b16 %v1441
          %v2026 = vunpack.c.h.b16 %v1441
          %v2027 = vunpack.c.l.b16 %v1442
          %v2028 = vunpack.c.h.b16 %v1442
          %v2029 = vunpack.c.l.b16 %v1443
          %v2030 = vunpack.c.h.b16 %v1443
          %v2031 = vunpack.c.l.b16 %v1444
          %v2032 = vunpack.c.h.b16 %v1444
          %v2033 = vunpack.c.l.b16 %v1445
          %v2034 = vunpack.c.h.b16 %v1445
          %v2035 = vunpack.c.l.b16 %v1446
          %v2036 = vunpack.c.h.b16 %v1446
          %v2037 = vunpack.c.l.b16 %v1447
          %v2038 = vunpack.c.h.b16 %v1447
          %v2039 = vunpack.c.l.b16 %v1448
          %v2040 = vunpack.c.h.b16 %v1448
          %v2041 = vunpack.c.l.b16 %v1449
          %v2042 = vunpack.c.h.b16 %v1449
          %v2043 = vunpack.c.l.b16 %v1450
          %v2044 = vunpack.c.h.b16 %v1450
          %v2045 = vunpack.c.l.b16 %v1451
          %v2046 = vunpack.c.h.b16 %v1451
          %v2047 = vunpack.c.l.b16 %v1452
          %v2048 = vunpack.c.h.b16 %v1452
          %v2049 = vunpack.c.l.b16 %v1453
          %v2050 = vunpack.c.h.b16 %v1453
          %v2051 = vunpack.c.l.b16 %v1454
          %v2052 = vunpack.c.h.b16 %v1454
          %v2053 = vunpack.c.l.b16 %v1455
          %v2054 = vunpack.c.h.b16 %v1455
          %v2055 = vunpack.c.l.b16 %v1456
          %v2056 = vunpack.c.h.b16 %v1456
          %v2057 = vunpack.c.l.b16 %v1457
          %v2058 = vunpack.c.h.b16 %v1457
          %v2059 = vunpack.c.l.b16 %v1458
          %v2060 = vunpack.c.h.b16 %v1458
          %v2061 = vunpack.c.l.b16 %v1459
          %v2062 = vunpack.c.h.b16 %v1459
          %v2063 = vunpack.c.l.b16 %v1460
          %v2064 = vunpack.c.h.b16 %v1460
          %v2065 = vunpack.c.l.b16 %v1461
          %v2066 = vunpack.c.h.b16 %v1461
          %v2067 = vunpack.c.l.b16 %v1462
          %v2068 = vunpack.c.h.b16 %v1462
          %v2069 = vunpack.c.l.b16 %v1463
          %v2070 = vunpack.c.h.b16 %v1463
          %v2071 = vunpack.c.l.b16 %v1464
          %v2072 = vunpack.c.h.b16 %v1464
          %v2073 = vunpack.c.l.b16 %v1465
          %v2074 = vunpack.c.h.b16 %v1465
          %v2075 = vunpack.c.l.b16 %v1466
          %v2076 = vunpack.c.h.b16 %v1466
          %v2077 = vunpack.c.l.b16 %v1467
          %v2078 = vunpack.c.h.b16 %v1467
          %v2079 = vunpack.c.l.b16 %v1468
          %v2080 = vunpack.c.h.b16 %v1468
          %v2081 = vunpack.c.l.b16 %v1469
          %v2082 = vunpack.c.h.b16 %v1469
          %v2083 = vunpack.c.l.b16 %v1470
          %v2084 = vunpack.c.h.b16 %v1470
          %v2085 = vunpack.c.l.b16 %v1471
          %v2086 = vunpack.c.h.b16 %v1471
          %v2087 = vunpack.c.l.b16 %v1472
          %v2088 = vunpack.c.h.b16 %v1472
          %v2089 = vunpack.c.l.b16 %v1473
          %v2090 = vunpack.c.h.b16 %v1473
          %v2091 = vunpack.c.l.b16 %v1474
          %v2092 = vunpack.c.h.b16 %v1474
          %v2093 = vunpack.c.l.b16 %v1475
          %v2094 = vunpack.c.h.b16 %v1475
          %v2095 = vunpack.c.l.b16 %v1476
          %v2096 = vunpack.c.h.b16 %v1476
          %v2097 = vunpack.c.l.b16 %v1477
          %v2098 = vunpack.c.h.b16 %v1477
          %v2099 = vunpack.c.l.b16 %v1478
          %v2100 = vunpack.c.h.b16 %v1478
          %v2101 = vunpack.c.l.b16 %v1479
          %v2102 = vunpack.c.h.b16 %v1479
          %v2103 = vunpack.c.l.b16 %v1480
          %v2104 = vunpack.c.h.b16 %v1480
          %v2105 = vunpack.c.l.b16 %v1481
          %v2106 = vunpack.c.h.b16 %v1481
          %v2107 = vunpack.c.l.b16 %v1482
          %v2108 = vunpack.c.h.b16 %v1482
          %v2109 = vunpack.c.l.b16 %v1483
          %v2110 = vunpack.c.h.b16 %v1483
          %v2111 = vunpack.c.l.b16 %v1484
          %v2112 = vunpack.c.h.b16 %v1484
          %v2113 = vunpack.c.l.b16 %v1485
          %v2114 = vunpack.c.h.b16 %v1485
          %v2115 = vunpack.c.l.b16 %v1486
          %v2116 = vunpack.c.h.b16 %v1486
          %v2117 = vunpack.c.l.b16 %v1487
          %v2118 = vunpack.c.h.b16 %v1487
          %v2119 = vunpack.c.l.b16 %v1488
          %v2120 = vunpack.c.h.b16 %v1488
          %v2121 = vunpack.c.l.b16 %v1489
          %v2122 = vunpack.c.h.b16 %v1489
          %v2123 = vunpack.c.l.b16 %v1490
          %v2124 = vunpack.c.h.b16 %v1490
          %v2125 = vunpack.c.l.b16 %v1491
          %v2126 = vunpack.c.h.b16 %v1491
          %v2127 = vunpack.c.l.b16 %v1492
          %v2128 = vunpack.c.h.b16 %v1492
          %v2129 = vunpack.c.l.b16 %v1493
          %v2130 = vunpack.c.h.b16 %v1493
          %v2131 = vunpack.c.l.b16 %v1494
          %v2132 = vunpack.c.h.b16 %v1494
          %v2133 = vunpack.c.l.b16 %v1495
          %v2134 = vunpack.c.h.b16 %v1495
          %v2135 = vunpack.c.l.b16 %v1496
          %v2136 = vunpack.c.h.b16 %v1496
          %v2137 = vunpack.c.l.b16 %v1497
          %v2138 = vunpack.c.h.b16 %v1497
          %v2139 = vunpack.c.l.b16 %v1498
          %v2140 = vunpack.c.h.b16 %v1498
          %v2141 = vunpack.c.l.b16 %v1499
          %v2142 = vunpack.c.h.b16 %v1499
          %v2143 = vunpack.c.l.b16 %v1500
          %v2144 = vunpack.c.h.b16 %v1500
          %v2145 = vunpack.c.l.b16 %v1501
          %v2146 = vunpack.c.h.b16 %v1501
          %v2147 = vunpack.c.l.b16 %v1502
          %v2148 = vunpack.c.h.b16 %v1502
          %v2149 = vunpack.c.l.b16 %v1503
          %v2150 = vunpack.c.h.b16 %v1503
          %v2151 = vunpack.c.l.b16 %v1504
          %v2152 = vunpack.c.h.b16 %v1504
          %v2153 = vunpack.c.l.b16 %v1505
          %v2154 = vunpack.c.h.b16 %v1505
          %v2155 = vunpack.c.l.b16 %v1506
          %v2156 = vunpack.c.h.b16 %v1506
          %v2157 = vunpack.c.l.b16 %v1507
          %v2158 = vunpack.c.h.b16 %v1507
          %v2159 = vunpack.c.l.b16 %v1508
          %v2160 = vunpack.c.h.b16 %v1508
          %v2161 = vunpack.c.l.b16 %v1509
          %v2162 = vunpack.c.h.b16 %v1509
          %v2163 = vunpack.c.l.b16 %v1510
          %v2164 = vunpack.c.h.b16 %v1510
          %v2165 = vunpack.c.l.b16 %v1511
          %v2166 = vunpack.c.h.b16 %v1511
          %v2167 = vunpack.c.l.b16 %v1512
          %v2168 = vunpack.c.h.b16 %v1512
          %v2169 = vunpack.c.l.b16 %v1513
          %v2170 = vunpack.c.h.b16 %v1513
          %v2171 = vunpack.c.l.b16 %v1514
          %v2172 = vunpack.c.h.b16 %v1514
          %v2173 = vunpack.c.l.b16 %v1515
          %v2174 = vunpack.c.h.b16 %v1515
          %v2175 = vunpack.c.l.b16 %v1516
          %v2176 = vunpack.c.h.b16 %v1516
          %v2177 = vunpack.c.l.b16 %v1517
          %v2178 = vunpack.c.h.b16 %v1517
          %v2179 = vunpack.c.l.b16 %v1518
          %v2180 = vunpack.c.h.b16 %v1518
          %v2181 = vunpack.c.l.b16 %v1519
          %v2182 = vunpack.c.h.b16 %v1519
          %v2183 = vunpack.c.l.b16 %v1520
          %v2184 = vunpack.c.h.b16 %v1520
          %v2185 = vunpack.c.l.b16 %v1521
          %v2186 = vunpack.c.h.b16 %v1521
          %v2187 = vunpack.c.l.b16 %v1522
          %v2188 = vunpack.c.h.b16 %v1522
          %v2189 = vunpack.c.l.b16 %v1523
          %v2190 = vunpack.c.h.b16 %v1523
          %v2191 = vunpack.c.l.b16 %v1524
          %v2192 = vunpack.c.h.b16 %v1524
          %v2193 = vunpack.c.l.b16 %v1525
          %v2194 = vunpack.c.h.b16 %v1525
          %v2195 = vunpack.c.l.b16 %v1526
          %v2196 = vunpack.c.h.b16 %v1526
          %v2197 = vunpack.c.l.b16 %v1527
          %v2198 = vunpack.c.h.b16 %v1527
          %v2199 = vunpack.c.l.b16 %v1528
          %v2200 = vunpack.c.h.b16 %v1528
          %v2201 = vunpack.c.l.b16 %v1529
          %v2202 = vunpack.c.h.b16 %v1529
          %v2203 = vunpack.c.l.b16 %v1530
          %v2204 = vunpack.c.h.b16 %v1530
          %v2205 = vunpack.c.l.b16 %v1531
          %v2206 = vunpack.c.h.b16 %v1531
          %v2207 = vunpack.c.l.b16 %v1532
          %v2208 = vunpack.c.h.b16 %v1532
          %v2209 = vunpack.c.l.b16 %v1533
          %v2210 = vunpack.c.h.b16 %v1533
          %v2211 = vunpack.c.l.b16 %v1534
          %v2212 = vunpack.c.h.b16 %v1534
          %v2213 = vunpack.c.l.b16 %v1535
          %v2214 = vunpack.c.h.b16 %v1535
          %v2215 = vunpack.c.l.b16 %v1536
          %v2216 = vunpack.c.h.b16 %v1536
          %v2217 = vunpack.c.l.b16 %v1537
          %v2218 = vunpack.c.h.b16 %v1537
          %v2219 = vunpack.c.l.b16 %v1538
          %v2220 = vunpack.c.h.b16 %v1538
          %v2221 = vunpack.c.l.b16 %v1539
          %v2222 = vunpack.c.h.b16 %v1539
          %v2223 = vunpack.c.l.b16 %v1540
          %v2224 = vunpack.c.h.b16 %v1540
          %v2225 = vunpack.c.l.b16 %v1541
          %v2226 = vunpack.c.h.b16 %v1541
          %v2227 = vunpack.c.l.b16 %v1542
          %v2228 = vunpack.c.h.b16 %v1542
          %v2229 = vunpack.c.l.b16 %v1543
          %v2230 = vunpack.c.h.b16 %v1543
          %v2231 = vunpack.c.l.b16 %v1544
          %v2232 = vunpack.c.h.b16 %v1544
          %v2233 = vunpack.c.l.b16 %v1545
          %v2234 = vunpack.c.h.b16 %v1545
          %v2235 = vunpack.c.l.b16 %v1546
          %v2236 = vunpack.c.h.b16 %v1546
          %v2237 = vunpack.c.l.b16 %v1547
          %v2238 = vunpack.c.h.b16 %v1547
          %v2239 = vunpack.c.l.b16 %v1548
          %v2240 = vunpack.c.h.b16 %v1548
          %v2241 = vunpack.c.l.b16 %v1549
          %v2242 = vunpack.c.h.b16 %v1549
          %v2243 = vunpack.c.l.b16 %v1550
          %v2244 = vunpack.c.h.b16 %v1550
          %v2245 = vunpack.c.l.b16 %v1551
          %v2246 = vunpack.c.h.b16 %v1551
          %v2247 = vunpack.c.l.b16 %v1552
          %v2248 = vunpack.c.h.b16 %v1552
          %v2249 = vunpack.c.l.b16 %v1553
          %v2250 = vunpack.c.h.b16 %v1553
          %v2251 = vunpack.c.l.b16 %v1554
          %v2252 = vunpack.c.h.b16 %v1554
          %v2253 = vunpack.c.l.b16 %v1555
          %v2254 = vunpack.c.h.b16 %v1555
          %v2255 = vunpack.c.l.b16 %v1556
          %v2256 = vunpack.c.h.b16 %v1556
          %v2257 = vunpack.c.l.b16 %v1557
          %v2258 = vunpack.c.h.b16 %v1557
          %v2259 = vunpack.c.l.b16 %v1558
          %v2260 = vunpack.c.h.b16 %v1558
          %v2261 = vunpack.c.l.b16 %v1559
          %v2262 = vunpack.c.h.b16 %v1559
          %v2263 = vunpack.c.l.b16 %v1560
          %v2264 = vunpack.c.h.b16 %v1560
          %v2265 = vunpack.c.l.b16 %v1561
          %v2266 = vunpack.c.h.b16 %v1561
          %v2267 = vunpack.c.l.b16 %v1562
          %v2268 = vunpack.c.h.b16 %v1562
          %v2269 = vunpack.c.l.b16 %v1563
          %v2270 = vunpack.c.h.b16 %v1563
          %v2271 = vunpack.c.l.b16 %v1564
          %v2272 = vunpack.c.h.b16 %v1564
          %v2273 = vunpack.c.l.b16 %v1565
          %v2274 = vunpack.c.h.b16 %v1565
          %v2275 = vunpack.c.l.b16 %v1566
          %v2276 = vunpack.c.h.b16 %v1566
          %v2277 = vunpack.c.l.b16 %v1567
          %v2278 = vunpack.c.h.b16 %v1567
          %v2279 = vunpack.c.l.b16 %v1568
          %v2280 = vunpack.c.h.b16 %v1568
          %v2281 = vunpack.c.l.b16 %v1569
          %v2282 = vunpack.c.h.b16 %v1569
          %v2283 = vunpack.c.l.b16 %v1570
          %v2284 = vunpack.c.h.b16 %v1570
          %v2285 = vunpack.c.l.b16 %v1571
          %v2286 = vunpack.c.h.b16 %v1571
          %v2287 = vunpack.c.l.b16 %v1572
          %v2288 = vunpack.c.h.b16 %v1572
          %v2289 = vunpack.c.l.b16 %v1573
          %v2290 = vunpack.c.h.b16 %v1573
          %v2291 = vunpack.c.l.b16 %v1574
          %v2292 = vunpack.c.h.b16 %v1574
          %v2293 = vunpack.c.l.b16 %v1575
          %v2294 = vunpack.c.h.b16 %v1575
          %v2295 = vunpack.c.l.b16 %v1576
          %v2296 = vunpack.c.h.b16 %v1576
          %v2297 = vunpack.c.l.b16 %v1577
          %v2298 = vunpack.c.h.b16 %v1577
          %v2299 = vunpack.c.l.b16 %v1578
          %v2300 = vunpack.c.h.b16 %v1578
          %v2301 = vunpack.c.l.b16 %v1579
          %v2302 = vunpack.c.h.b16 %v1579
          %v2303 = vunpack.c.l.b16 %v1580
          %v2304 = vunpack.c.h.b16 %v1580
          %v2305 = vunpack.c.l.b16 %v1581
          %v2306 = vunpack.c.h.b16 %v1581
          %v2307 = vunpack.c.l.b16 %v1582
          %v2308 = vunpack.c.h.b16 %v1582
          %v2309 = vunpack.c.l.b16 %v1583
          %v2310 = vunpack.c.h.b16 %v1583
          %v2311 = vunpack.c.l.b16 %v1584
          %v2312 = vunpack.c.h.b16 %v1584
          %v2313 = vunpack.c.l.b16 %v1585
          %v2314 = vunpack.c.h.b16 %v1585
          %v2315 = vunpack.c.l.b16 %v1586
          %v2316 = vunpack.c.h.b16 %v1586
          %v2317 = vunpack.c.l.b16 %v1587
          %v2318 = vunpack.c.h.b16 %v1587
          %v2319 = vunpack.c.l.b16 %v1588
          %v2320 = vunpack.c.h.b16 %v1588
          %v2321 = vunpack.c.l.b16 %v1589
          %v2322 = vunpack.c.h.b16 %v1589
          %v2323 = vunpack.c.l.b16 %v1590
          %v2324 = vunpack.c.h.b16 %v1590
          %v2325 = vunpack.c.l.b16 %v1591
          %v2326 = vunpack.c.h.b16 %v1591
          %v2327 = vunpack.c.l.b16 %v1592
          %v2328 = vunpack.c.h.b16 %v1592
          %v2329 = vunpack.c.l.b16 %v1593
          %v2330 = vunpack.c.h.b16 %v1593
          %v2331 = vunpack.c.l.b16 %v1594
          %v2332 = vunpack.c.h.b16 %v1594
          %v2333 = vunpack.c.l.b16 %v1595
          %v2334 = vunpack.c.h.b16 %v1595
          %v2335 = vunpack.c.l.b16 %v1596
          %v2336 = vunpack.c.h.b16 %v1596
          %v2337 = vunpack.c.l.b16 %v1597
          %v2338 = vunpack.c.h.b16 %v1597
          %v2339 = vunpack.c.l.b16 %v1598
          %v2340 = vunpack.c.h.b16 %v1598
          %v2341 = vunpack.c.l.b16 %v1599
          %v2342 = vunpack.c.h.b16 %v1599
          %v2343 = vunpack.c.l.b16 %v1600
          %v2344 = vunpack.c.h.b16 %v1600
          %v2345 = vunpack.c.l.b16 %v1601
          %v2346 = vunpack.c.h.b16 %v1601
          %v2347 = vunpack.c.l.b16 %v1602
          %v2348 = vunpack.c.h.b16 %v1602
          %v2349 = vunpack.c.l.b16 %v1603
          %v2350 = vunpack.c.h.b16 %v1603
          %v2351 = vunpack.c.l.b16 %v1604
          %v2352 = vunpack.c.h.b16 %v1604
          %v2353 = vunpack.c.l.b16 %v1605
          %v2354 = vunpack.c.h.b16 %v1605
          %v2355 = vunpack.c.l.b16 %v1606
          %v2356 = vunpack.c.h.b16 %v1606
          %v2357 = vunpack.c.l.b16 %v1607
          %v2358 = vunpack.c.h.b16 %v1607
          %v2359 = vunpack.c.l.b16 %v1608
          %v2360 = vunpack.c.h.b16 %v1608
          %v2361 = vunpack.c.l.b16 %v1609
          %v2362 = vunpack.c.h.b16 %v1609
          %v2363 = vunpack.c.l.b16 %v1610
          %v2364 = vunpack.c.h.b16 %v1610
          %v2365 = vunpack.c.l.b16 %v1611
          %v2366 = vunpack.c.h.b16 %v1611
          %v2367 = vunpack.c.l.b16 %v1612
          %v2368 = vunpack.c.h.b16 %v1612
          %v2369 = vunpack.c.l.b16 %v1613
          %v2370 = vunpack.c.h.b16 %v1613
          %v2371 = vunpack.c.l.b16 %v1614
          %v2372 = vunpack.c.h.b16 %v1614
          %v2373 = vunpack.c.l.b16 %v1615
          %v2374 = vunpack.c.h.b16 %v1615
          %v2375 = vunpack.c.l.b16 %v1616
          %v2376 = vunpack.c.h.b16 %v1616
          %v2377 = vunpack.c.l.b16 %v1617
          %v2378 = vunpack.c.h.b16 %v1617
          %v2379 = vunpack.c.l.b16 %v1618
          %v2380 = vunpack.c.h.b16 %v1618
          %v2381 = vunpack.c.l.b16 %v1619
          %v2382 = vunpack.c.h.b16 %v1619
          %v2383 = vunpack.c.l.b16 %v1620
          %v2384 = vunpack.c.h.b16 %v1620
          %v2385 = vunpack.c.l.b16 %v1621
          %v2386 = vunpack.c.h.b16 %v1621
          %v2387 = vunpack.c.l.b16 %v1622
          %v2388 = vunpack.c.h.b16 %v1622
          %v2389 = vunpack.c.l.b16 %v1623
          %v2390 = vunpack.c.h.b16 %v1623
          %v2391 = vunpack.c.l.b16 %v1624
          %v2392 = vunpack.c.h.b16 %v1624
          %v2393 = vunpack.c.l.b16 %v1625
          %v2394 = vunpack.c.h.b16 %v1625
          %v2395 = vpack.c.b16 %v1887, %v1883
          %v2396 = vpack.c.b16 %v1888, %v1884
          %v2397 = vpack.c.b16 %v1889, %v1885
          %v2398 = vpack.c.b16 %v1890, %v1886
          %v2399 = vpack.c.b16 %v1895, %v1891
          %v2400 = vpack.c.b16 %v1896, %v1892
          %v2401 = vpack.c.b16 %v1897, %v1893
          %v2402 = vpack.c.b16 %v1898, %v1894
          %v2403 = vpack.c.b16 %v1903, %v1899
          %v2404 = vpack.c.b16 %v1904, %v1900
          %v2405 = vpack.c.b16 %v1905, %v1901
          %v2406 = vpack.c.b16 %v1906, %v1902
          %v2407 = vpack.c.b16 %v1911, %v1907
          %v2408 = vpack.c.b16 %v1912, %v1908
          %v2409 = vpack.c.b16 %v1913, %v1909
          %v2410 = vpack.c.b16 %v1914, %v1910
          %v2411 = vpack.c.b16 %v1919, %v1915
          %v2412 = vpack.c.b16 %v1920, %v1916
          %v2413 = vpack.c.b16 %v1921, %v1917
          %v2414 = vpack.c.b16 %v1922, %v1918
          %v2415 = vpack.c.b16 %v1927, %v1923
          %v2416 = vpack.c.b16 %v1928, %v1924
          %v2417 = vpack.c.b16 %v1929, %v1925
          %v2418 = vpack.c.b16 %v1930, %v1926
          %v2419 = vpack.c.b16 %v1935, %v1931
          %v2420 = vpack.c.b16 %v1936, %v1932
          %v2421 = vpack.c.b16 %v1937, %v1933
          %v2422 = vpack.c.b16 %v1938, %v1934
          %v2423 = vpack.c.b16 %v1943, %v1939
          %v2424 = vpack.c.b16 %v1944, %v1940
          %v2425 = vpack.c.b16 %v1945, %v1941
          %v2426 = vpack.c.b16 %v1946, %v1942
          %v2427 = vpack.c.b16 %v1951, %v1947
          %v2428 = vpack.c.b16 %v1952, %v1948
          %v2429 = vpack.c.b16 %v1953, %v1949
          %v2430 = vpack.c.b16 %v1954, %v1950
          %v2431 = vpack.c.b16 %v1959, %v1955
          %v2432 = vpack.c.b16 %v1960, %v1956
          %v2433 = vpack.c.b16 %v1961, %v1957
          %v2434 = vpack.c.b16 %v1962, %v1958
          %v2435 = vpack.c.b16 %v1967, %v1963
          %v2436 = vpack.c.b16 %v1968, %v1964
          %v2437 = vpack.c.b16 %v1969, %v1965
          %v2438 = vpack.c.b16 %v1970, %v1966
          %v2439 = vpack.c.b16 %v1975, %v1971
          %v2440 = vpack.c.b16 %v1976, %v1972
          %v2441 = vpack.c.b16 %v1977, %v1973
          %v2442 = vpack.c.b16 %v1978, %v1974
          %v2443 = vpack.c.b16 %v1983, %v1979
          %v2444 = vpack.c.b16 %v1984, %v1980
          %v2445 = vpack.c.b16 %v1985, %v1981
          %v2446 = vpack.c.b16 %v1986, %v1982
          %v2447 = vpack.c.b16 %v1991, %v1987
          %v2448 = vpack.c.b16 %v1992, %v1988
          %v2449 = vpack.c.b16 %v1993, %v1989
          %v2450 = vpack.c.b16 %v1994, %v1990
          %v2451 = vpack.c.b16 %v1999, %v1995
          %v2452 = vpack.c.b16 %v2000, %v1996
          %v2453 = vpack.c.b16 %v2001, %v1997
          %v2454 = vpack.c.b16 %v2002, %v1998
          %v2455 = vpack.c.b16 %v2007, %v2003
          %v2456 = vpack.c.b16 %v2008, %v2004
          %v2457 = vpack.c.b16 %v2009, %v2005
          %v2458 = vpack.c.b16 %v2010, %v2006
          %v2459 = vpack.c.b16 %v2015, %v2011
          %v2460 = vpack.c.b16 %v2016, %v2012
          %v2461 = vpack.c.b16 %v2017, %v2013
          %v2462 = vpack.c.b16 %v2018, %v2014
          %v2463 = vpack.c.b16 %v2023, %v2019
          %v2464 = vpack.c.b16 %v2024, %v2020
          %v2465 = vpack.c.b16 %v2025, %v2021
          %v2466 = vpack.c.b16 %v2026, %v2022
          %v2467 = vpack.c.b16 %v2031, %v2027
          %v2468 = vpack.c.b16 %v2032, %v2028
          %v2469 = vpack.c.b16 %v2033, %v2029
          %v2470 = vpack.c.b16 %v2034, %v2030
          %v2471 = vpack.c.b16 %v2039, %v2035
          %v2472 = vpack.c.b16 %v2040, %v2036
          %v2473 = vpack.c.b16 %v2041, %v2037
          %v2474 = vpack.c.b16 %v2042, %v2038
          %v2475 = vpack.c.b16 %v2047, %v2043
          %v2476 = vpack.c.b16 %v2048, %v2044
          %v2477 = vpack.c.b16 %v2049, %v2045
          %v2478 = vpack.c.b16 %v2050, %v2046
          %v2479 = vpack.c.b16 %v2055, %v2051
          %v2480 = vpack.c.b16 %v2056, %v2052
          %v2481 = vpack.c.b16 %v2057, %v2053
          %v2482 = vpack.c.b16 %v2058, %v2054
          %v2483 = vpack.c.b16 %v2063, %v2059
          %v2484 = vpack.c.b16 %v2064, %v2060
          %v2485 = vpack.c.b16 %v2065, %v2061
          %v2486 = vpack.c.b16 %v2066, %v2062
          %v2487 = vpack.c.b16 %v2071, %v2067
          %v2488 = vpack.c.b16 %v2072, %v2068
          %v2489 = vpack.c.b16 %v2073, %v2069
          %v2490 = vpack.c.b16 %v2074, %v2070
          %v2491 = vpack.c.b16 %v2079, %v2075
          %v2492 = vpack.c.b16 %v2080, %v2076
          %v2493 = vpack.c.b16 %v2081, %v2077
          %v2494 = vpack.c.b16 %v2082, %v2078
          %v2495 = vpack.c.b16 %v2087, %v2083
          %v2496 = vpack.c.b16 %v2088, %v2084
          %v2497 = vpack.c.b16 %v2089, %v2085
          %v2498 = vpack.c.b16 %v2090, %v2086
          %v2499 = vpack.c.b16 %v2095, %v2091
          %v2500 = vpack.c.b16 %v2096, %v2092
          %v2501 = vpack.c.b16 %v2097, %v2093
          %v2502 = vpack.c.b16 %v2098, %v2094
          %v2503 = vpack.c.b16 %v2103, %v2099
          %v2504 = vpack.c.b16 %v2104, %v2100
          %v2505 = vpack.c.b16 %v2105, %v2101
          %v2506 = vpack.c.b16 %v2106, %v2102
          %v2507 = vpack.c.b16 %v2111, %v2107
          %v2508 = vpack.c.b16 %v2112, %v2108
          %v2509 = vpack.c.b16 %v2113, %v2109
          %v2510 = vpack.c.b16 %v2114, %v2110
          %v2511 = vpack.c.b16 %v2119, %v2115
          %v2512 = vpack.c.b16 %v2120, %v2116
          %v2513 = vpack.c.b16 %v2121, %v2117
          %v2514 = vpack.c.b16 %v2122, %v2118
          %v2515 = vpack.c.b16 %v2127, %v2123
          %v2516 = vpack.c.b16 %v2128, %v2124
          %v2517 = vpack.c.b16 %v2129, %v2125
          %v2518 = vpack.c.b16 %v2130, %v2126
          %v2519 = vpack.c.b16 %v2135, %v2131
          %v2520 = vpack.c.b16 %v2136, %v2132
          %v2521 = vpack.c.b16 %v2137, %v2133
          %v2522 = vpack.c.b16 %v2138, %v2134
          %v2523 = vpack.c.b16 %v2143, %v2139
          %v2524 = vpack.c.b16 %v2144, %v2140
          %v2525 = vpack.c.b16 %v2145, %v2141
          %v2526 = vpack.c.b16 %v2146, %v2142
          %v2527 = vpack.c.b16 %v2151, %v2147
          %v2528 = vpack.c.b16 %v2152, %v2148
          %v2529 = vpack.c.b16 %v2153, %v2149
          %v2530 = vpack.c.b16 %v2154, %v2150
          %v2531 = vpack.c.b16 %v2159, %v2155
          %v2532 = vpack.c.b16 %v2160, %v2156
          %v2533 = vpack.c.b16 %v2161, %v2157
          %v2534 = vpack.c.b16 %v2162, %v2158
          %v2535 = vpack.c.b16 %v2167, %v2163
          %v2536 = vpack.c.b16 %v2168, %v2164
          %v2537 = vpack.c.b16 %v2169, %v2165
          %v2538 = vpack.c.b16 %v2170, %v2166
          %v2539 = vpack.c.b16 %v2175, %v2171
          %v2540 = vpack.c.b16 %v2176, %v2172
          %v2541 = vpack.c.b16 %v2177, %v2173
          %v2542 = vpack.c.b16 %v2178, %v2174
          %v2543 = vpack.c.b16 %v2183, %v2179
          %v2544 = vpack.c.b16 %v2184, %v2180
          %v2545 = vpack.c.b16 %v2185, %v2181
          %v2546 = vpack.c.b16 %v2186, %v2182
          %v2547 = vpack.c.b16 %v2191, %v2187
          %v2548 = vpack.c.b16 %v2192, %v2188
          %v2549 = vpack.c.b16 %v2193, %v2189
          %v2550 = vpack.c.b16 %v2194, %v2190
          %v2551 = vpack.c.b16 %v2199, %v2195
          %v2552 = vpack.c.b16 %v2200, %v2196
          %v2553 = vpack.c.b16 %v2201, %v2197
          %v2554 = vpack.c.b16 %v2202, %v2198
          %v2555 = vpack.c.b16 %v2207, %v2203
          %v2556 = vpack.c.b16 %v2208, %v2204
          %v2557 = vpack.c.b16 %v2209, %v2205
          %v2558 = vpack.c.b16 %v2210, %v2206
          %v2559 = vpack.c.b16 %v2215, %v2211
          %v2560 = vpack.c.b16 %v2216, %v2212
          %v2561 = vpack.c.b16 %v2217, %v2213
          %v2562 = vpack.c.b16 %v2218, %v2214
          %v2563 = vpack.c.b16 %v2223, %v2219
          %v2564 = vpack.c.b16 %v2224, %v2220
          %v2565 = vpack.c.b16 %v2225, %v2221
          %v2566 = vpack.c.b16 %v2226, %v2222
          %v2567 = vpack.c.b16 %v2231, %v2227
          %v2568 = vpack.c.b16 %v2232, %v2228
          %v2569 = vpack.c.b16 %v2233, %v2229
          %v2570 = vpack.c.b16 %v2234, %v2230
          %v2571 = vpack.c.b16 %v2239, %v2235
          %v2572 = vpack.c.b16 %v2240, %v2236
          %v2573 = vpack.c.b16 %v2241, %v2237
          %v2574 = vpack.c.b16 %v2242, %v2238
          %v2575 = vpack.c.b16 %v2247, %v2243
          %v2576 = vpack.c.b16 %v2248, %v2244
          %v2577 = vpack.c.b16 %v2249, %v2245
          %v2578 = vpack.c.b16 %v2250, %v2246
          %v2579 = vpack.c.b16 %v2255, %v2251
          %v2580 = vpack.c.b16 %v2256, %v2252
          %v2581 = vpack.c.b16 %v2257, %v2253
          %v2582 = vpack.c.b16 %v2258, %v2254
          %v2583 = vpack.c.b16 %v2263, %v2259
          %v2584 = vpack.c.b16 %v2264, %v2260
          %v2585 = vpack.c.b16 %v2265, %v2261
          %v2586 = vpack.c.b16 %v2266, %v2262
          %v2587 = vpack.c.b16 %v2271, %v2267
          %v2588 = vpack.c.b16 %v2272, %v2268
          %v2589 = vpack.c.b16 %v2273, %v2269
          %v2590 = vpack.c.b16 %v2274, %v2270
          %v2591 = vpack.c.b16 %v2279, %v2275
          %v2592 = vpack.c.b16 %v2280, %v2276
          %v2593 = vpack.c.b16 %v2281, %v2277
          %v2594 = vpack.c.b16 %v2282, %v2278
          %v2595 = vpack.c.b16 %v2287, %v2283
          %v2596 = vpack.c.b16 %v2288, %v2284
          %v2597 = vpack.c.b16 %v2289, %v2285
          %v2598 = vpack.c.b16 %v2290, %v2286
          %v2599 = vpack.c.b16 %v2295, %v2291
          %v2600 = vpack.c.b16 %v2296, %v2292
          %v2601 = vpack.c.b16 %v2297, %v2293
          %v2602 = vpack.c.b16 %v2298, %v2294
          %v2603 = vpack.c.b16 %v2303, %v2299
          %v2604 = vpack.c.b16 %v2304, %v2300
          %v2605 = vpack.c.b16 %v2305, %v2301
          %v2606 = vpack.c.b16 %v2306, %v2302
          %v2607 = vpack.c.b16 %v2311, %v2307
          %v2608 = vpack.c.b16 %v2312, %v2308
          %v2609 = vpack.c.b16 %v2313, %v2309
          %v2610 = vpack.c.b16 %v2314, %v2310
          %v2611 = vpack.c.b16 %v2319, %v2315
          %v2612 = vpack.c.b16 %v2320, %v2316
          %v2613 = vpack.c.b16 %v2321, %v2317
          %v2614 = vpack.c.b16 %v2322, %v2318
          %v2615 = vpack.c.b16 %v2327, %v2323
          %v2616 = vpack.c.b16 %v2328, %v2324
          %v2617 = vpack.c.b16 %v2329, %v2325
          %v2618 = vpack.c.b16 %v2330, %v2326
          %v2619 = vpack.c.b16 %v2335, %v2331
          %v2620 = vpack.c.b16 %v2336, %v2332
          %v2621 = vpack.c.b16 %v2337, %v2333
          %v2622 = vpack.c.b16 %v2338, %v2334
          %v2623 = vpack.c.b16 %v2343, %v2339
          %v2624 = vpack.c.b16 %v2344, %v2340
          %v2625 = vpack.c.b16 %v2345, %v2341
          %v2626 = vpack.c.b16 %v2346, %v2342
          %v2627 = vpack.c.b16 %v2351, %v2347
          %v2628 = vpack.c.b16 %v2352, %v2348
          %v2629 = vpack.c.b16 %v2353, %v2349
          %v2630 = vpack.c.b16 %v2354, %v2350
          %v2631 = vpack.c.b16 %v2359, %v2355
          %v2632 = vpack.c.b16 %v2360, %v2356
          %v2633 = vpack.c.b16 %v2361, %v2357
          %v2634 = vpack.c.b16 %v2362, %v2358
          %v2635 = vpack.c.b16 %v2367, %v2363
          %v2636 = vpack.c.b16 %v2368, %v2364
          %v2637 = vpack.c.b16 %v2369, %v2365
          %v2638 = vpack.c.b16 %v2370, %v2366
          %v2639 = vpack.c.b16 %v2375, %v2371
          %v2640 = vpack.c.b16 %v2376, %v2372
          %v2641 = vpack.c.b16 %v2377, %v2373
          %v2642 = vpack.c.b16 %v2378, %v2374
          %v2643 = vpack.c.b16 %v2383, %v2379
          %v2644 = vpack.c.b16 %v2384, %v2380
          %v2645 = vpack.c.b16 %v2385, %v2381
          %v2646 = vpack.c.b16 %v2386, %v2382
          %v2647 = vpack.c.b16 %v2391, %v2387
          %v2648 = vpack.c.b16 %v2392, %v2388
          %v2649 = vpack.c.b16 %v2393, %v2389
          %v2650 = vpack.c.b16 %v2394, %v2390
          %v2908 = vlaneseq
          %v2909 = vshrl.u32 %v2908, 7
          %v2910 = vsub.s32 0, %v2909
          %v2911 = vrot.slane %v1626, %v2910
          %v2912 = vlaneseq
          %v2913 = vshrl.u32 %v2912, 7
          %v2914 = vsub.s32 1, %v2913
          %v2915 = vrot.slane %v1626, %v2914
          %v2916 = vlaneseq
          %v2917 = vshrl.u32 %v2916, 7
          %v2918 = vsub.s32 2, %v2917
          %v2919 = vrot.slane %v1626, %v2918
          %v2920 = vlaneseq
          %v2921 = vshrl.u32 %v2920, 7
          %v2922 = vsub.s32 3, %v2921
          %v2923 = vrot.slane %v1626, %v2922
          %2928 = vmatprep.subr.bf16.mxu0 %v2396
          %2929 = vmatpush1.bf16.msra.mxu0 %v2395
          %2930 = vmatprep.subr.bf16.mxu0 %v2400
          %2931 = vmatpush1.bf16.msra.mxu0 %v2399
          %2932 = vmatprep.subr.bf16.mxu0 %v2404
          %2933 = vmatpush1.bf16.msra.mxu0 %v2403
          %2934 = vmatprep.subr.bf16.mxu0 %v2408
          %2935 = vmatpush1.bf16.msra.mxu0 %v2407
          %2936 = vmatprep.subr.bf16.mxu0 %v2412
          %2937 = vmatpush1.bf16.msra.mxu0 %v2411
          %2938 = vmatprep.subr.bf16.mxu0 %v2416
          %2939 = vmatpush1.bf16.msra.mxu0 %v2415
          %2940 = vmatprep.subr.bf16.mxu0 %v2420
          %2941 = vmatpush1.bf16.msra.mxu0 %v2419
          %2942 = vmatprep.subr.bf16.mxu0 %v2424
          %2943 = vmatpush1.bf16.msra.mxu0 %v2423
          %2944 = vmatprep.subr.bf16.mxu0 %v2428
          %2945 = vmatpush1.bf16.msra.mxu0 %v2427
          %2946 = vmatprep.subr.bf16.mxu0 %v2432
          %2947 = vmatpush1.bf16.msra.mxu0 %v2431
          %2948 = vmatprep.subr.bf16.mxu0 %v2436
          %2949 = vmatpush1.bf16.msra.mxu0 %v2435
          %2950 = vmatprep.subr.bf16.mxu0 %v2440
          %2951 = vmatpush1.bf16.msra.mxu0 %v2439
          %2952 = vmatprep.subr.bf16.mxu0 %v2444
          %2953 = vmatpush1.bf16.msra.mxu0 %v2443
          %2954 = vmatprep.subr.bf16.mxu0 %v2448
          %2955 = vmatpush1.bf16.msra.mxu0 %v2447
          %2956 = vmatprep.subr.bf16.mxu0 %v2452
          %2957 = vmatpush1.bf16.msra.mxu0 %v2451
          %2958 = vmatprep.subr.bf16.mxu0 %v2456
          %2959 = vmatpush1.bf16.msra.mxu0 %v2455
          %2960 = vmatprep.mubr.bf16.mxu0 %v1363
          %2961 = vmatmul.mubr.bf16.gmra.mrb[0].mxu0 %v1362
          %v2962 = vpop.f32.mrb[0].mxu0
          %v2963 = vadd.f32 %v2911, %v2962
          %v2964 = vpop.f32.mrb[0].mxu0
          %v2965 = vadd.f32 %v2915, %v2964
          %v2966 = vpop.f32.mrb[0].mxu0
          %v2967 = vpop.f32.mrb[0].mxu0
          %2968 = vdwg.mxu0
          %2969 = vmatprep.subr.bf16.mxu0 %v2460
          %2970 = vmatpush1.bf16.msra.mxu0 %v2459
          %2971 = vmatprep.subr.bf16.mxu0 %v2464
          %2972 = vmatpush1.bf16.msra.mxu0 %v2463
          %2973 = vmatprep.subr.bf16.mxu0 %v2468
          %2974 = vmatpush1.bf16.msra.mxu0 %v2467
          %2975 = vmatprep.subr.bf16.mxu0 %v2472
          %2976 = vmatpush1.bf16.msra.mxu0 %v2471
          %2977 = vmatprep.subr.bf16.mxu0 %v2476
          %2978 = vmatpush1.bf16.msra.mxu0 %v2475
          %2979 = vmatprep.subr.bf16.mxu0 %v2480
          %2980 = vmatpush1.bf16.msra.mxu0 %v2479
          %2981 = vmatprep.subr.bf16.mxu0 %v2484
          %2982 = vmatpush1.bf16.msra.mxu0 %v2483
          %2983 = vmatprep.subr.bf16.mxu0 %v2488
          %2984 = vmatpush1.bf16.msra.mxu0 %v2487
          %2985 = vmatprep.subr.bf16.mxu0 %v2492
          %2986 = vmatpush1.bf16.msra.mxu0 %v2491
          %2987 = vmatprep.subr.bf16.mxu0 %v2496
          %2988 = vmatpush1.bf16.msra.mxu0 %v2495
          %2989 = vmatprep.subr.bf16.mxu0 %v2500
          %2990 = vmatpush1.bf16.msra.mxu0 %v2499
          %2991 = vmatprep.subr.bf16.mxu0 %v2504
          %2992 = vmatpush1.bf16.msra.mxu0 %v2503
          %2993 = vmatprep.subr.bf16.mxu0 %v2508
          %2994 = vmatpush1.bf16.msra.mxu0 %v2507
          %2995 = vmatprep.subr.bf16.mxu0 %v2512
          %2996 = vmatpush1.bf16.msra.mxu0 %v2511
          %2997 = vmatprep.subr.bf16.mxu0 %v2516
          %2998 = vmatpush1.bf16.msra.mxu0 %v2515
          %2999 = vmatprep.subr.bf16.mxu0 %v2520
          %3000 = vmatpush1.bf16.msra.mxu0 %v2519
          %3001 = vmatprep.mubr.bf16.mxu0 %v1365
          %3002 = vmatmul.mubr.bf16.gmra.mrb[0].mxu0 %v1364
          %v3003 = vpop.f32.mrb[0].mxu0
          %v3004 = vadd.f32 %v2963, %v3003
          %v3005 = vpop.f32.mrb[0].mxu0
          %v3006 = vadd.f32 %v2965, %v3005
          %v3007 = vpop.f32.mrb[0].mxu0
          %v3008 = vpop.f32.mrb[0].mxu0
          %3009 = vdwg.mxu0
          %3010 = vmatprep.subr.bf16.mxu0 %v2524
          %3011 = vmatpush1.bf16.msra.mxu0 %v2523
          %3012 = vmatprep.subr.bf16.mxu0 %v2528
          %3013 = vmatpush1.bf16.msra.mxu0 %v2527
          %3014 = vmatprep.subr.bf16.mxu0 %v2532
          %3015 = vmatpush1.bf16.msra.mxu0 %v2531
          %3016 = vmatprep.subr.bf16.mxu0 %v2536
          %3017 = vmatpush1.bf16.msra.mxu0 %v2535
          %3018 = vmatprep.subr.bf16.mxu0 %v2540
          %3019 = vmatpush1.bf16.msra.mxu0 %v2539
          %3020 = vmatprep.subr.bf16.mxu0 %v2544
          %3021 = vmatpush1.bf16.msra.mxu0 %v2543
          %3022 = vmatprep.subr.bf16.mxu0 %v2548
          %3023 = vmatpush1.bf16.msra.mxu0 %v2547
          %3024 = vmatprep.subr.bf16.mxu0 %v2552
          %3025 = vmatpush1.bf16.msra.mxu0 %v2551
          %3026 = vmatprep.subr.bf16.mxu0 %v2556
          %3027 = vmatpush1.bf16.msra.mxu0 %v2555
          %3028 = vmatprep.subr.bf16.mxu0 %v2560
          %3029 = vmatpush1.bf16.msra.mxu0 %v2559
          %3030 = vmatprep.subr.bf16.mxu0 %v2564
          %3031 = vmatpush1.bf16.msra.mxu0 %v2563
          %3032 = vmatprep.subr.bf16.mxu0 %v2568
          %3033 = vmatpush1.bf16.msra.mxu0 %v2567
          %3034 = vmatprep.subr.bf16.mxu0 %v2572
          %3035 = vmatpush1.bf16.msra.mxu0 %v2571
          %3036 = vmatprep.subr.bf16.mxu0 %v2576
          %3037 = vmatpush1.bf16.msra.mxu0 %v2575
          %3038 = vmatprep.subr.bf16.mxu0 %v2580
          %3039 = vmatpush1.bf16.msra.mxu0 %v2579
          %3040 = vmatprep.subr.bf16.mxu0 %v2584
          %3041 = vmatpush1.bf16.msra.mxu0 %v2583
          %3042 = vmatprep.mubr.bf16.mxu0 %v1367
          %3043 = vmatmul.mubr.bf16.gmra.mrb[0].mxu0 %v1366
          %v3044 = vpop.f32.mrb[0].mxu0
          %v3045 = vadd.f32 %v3004, %v3044
          %v3046 = vpop.f32.mrb[0].mxu0
          %v3047 = vadd.f32 %v3006, %v3046
          %v3048 = vpop.f32.mrb[0].mxu0
          %v3049 = vpop.f32.mrb[0].mxu0
          %3050 = vdwg.mxu0
          %3051 = vmatprep.subr.bf16.mxu0 %v2588
          %3052 = vmatpush1.bf16.msra.mxu0 %v2587
          %3053 = vmatprep.subr.bf16.mxu0 %v2592
          %3054 = vmatpush1.bf16.msra.mxu0 %v2591
          %3055 = vmatprep.subr.bf16.mxu0 %v2596
          %3056 = vmatpush1.bf16.msra.mxu0 %v2595
          %3057 = vmatprep.subr.bf16.mxu0 %v2600
          %3058 = vmatpush1.bf16.msra.mxu0 %v2599
          %3059 = vmatprep.subr.bf16.mxu0 %v2604
          %3060 = vmatpush1.bf16.msra.mxu0 %v2603
          %3061 = vmatprep.subr.bf16.mxu0 %v2608
          %3062 = vmatpush1.bf16.msra.mxu0 %v2607
          %3063 = vmatprep.subr.bf16.mxu0 %v2612
          %3064 = vmatpush1.bf16.msra.mxu0 %v2611
          %3065 = vmatprep.subr.bf16.mxu0 %v2616
          %3066 = vmatpush1.bf16.msra.mxu0 %v2615
          %3067 = vmatprep.subr.bf16.mxu0 %v2620
          %3068 = vmatpush1.bf16.msra.mxu0 %v2619
          %3069 = vmatprep.subr.bf16.mxu0 %v2624
          %3070 = vmatpush1.bf16.msra.mxu0 %v2623
          %3071 = vmatprep.subr.bf16.mxu0 %v2628
          %3072 = vmatpush1.bf16.msra.mxu0 %v2627
          %3073 = vmatprep.subr.bf16.mxu0 %v2632
          %3074 = vmatpush1.bf16.msra.mxu0 %v2631
          %3075 = vmatprep.subr.bf16.mxu0 %v2636
          %3076 = vmatpush1.bf16.msra.mxu0 %v2635
          %3077 = vmatprep.subr.bf16.mxu0 %v2640
          %3078 = vmatpush1.bf16.msra.mxu0 %v2639
          %3079 = vmatprep.subr.bf16.mxu0 %v2644
          %3080 = vmatpush1.bf16.msra.mxu0 %v2643
          %3081 = vmatprep.subr.bf16.mxu0 %v2648
          %3082 = vmatpush1.bf16.msra.mxu0 %v2647
          %3083 = vmatprep.mubr.bf16.mxu0 %v1369
          %3084 = vmatmul.mubr.bf16.gmra.mrb[0].mxu0 %v1368
          %v3085 = vpop.f32.mrb[0].mxu0
          %v3086 = vadd.f32 %v3045, %v3085
          %v3087 = vpop.f32.mrb[0].mxu0
          %v3088 = vadd.f32 %v3047, %v3087
          %v3089 = vpop.f32.mrb[0].mxu0
          %v3090 = vpop.f32.mrb[0].mxu0
          %3091 = vdwg.mxu0
          %3092 = vmatprep.subr.bf16.mxu0 %v2398
          %3093 = vmatpush1.bf16.msra.mxu0 %v2397
          %3094 = vmatprep.subr.bf16.mxu0 %v2402
          %3095 = vmatpush1.bf16.msra.mxu0 %v2401
          %3096 = vmatprep.subr.bf16.mxu0 %v2406
          %3097 = vmatpush1.bf16.msra.mxu0 %v2405
          %3098 = vmatprep.subr.bf16.mxu0 %v2410
          %3099 = vmatpush1.bf16.msra.mxu0 %v2409
          %3100 = vmatprep.subr.bf16.mxu0 %v2414
          %3101 = vmatpush1.bf16.msra.mxu0 %v2413
          %3102 = vmatprep.subr.bf16.mxu0 %v2418
          %3103 = vmatpush1.bf16.msra.mxu0 %v2417
          %3104 = vmatprep.subr.bf16.mxu0 %v2422
          %3105 = vmatpush1.bf16.msra.mxu0 %v2421
          %3106 = vmatprep.subr.bf16.mxu0 %v2426
          %3107 = vmatpush1.bf16.msra.mxu0 %v2425
          %3108 = vmatprep.subr.bf16.mxu0 %v2430
          %3109 = vmatpush1.bf16.msra.mxu0 %v2429
          %3110 = vmatprep.subr.bf16.mxu0 %v2434
          %3111 = vmatpush1.bf16.msra.mxu0 %v2433
          %3112 = vmatprep.subr.bf16.mxu0 %v2438
          %3113 = vmatpush1.bf16.msra.mxu0 %v2437
          %3114 = vmatprep.subr.bf16.mxu0 %v2442
          %3115 = vmatpush1.bf16.msra.mxu0 %v2441
          %3116 = vmatprep.subr.bf16.mxu0 %v2446
          %3117 = vmatpush1.bf16.msra.mxu0 %v2445
          %3118 = vmatprep.subr.bf16.mxu0 %v2450
          %3119 = vmatpush1.bf16.msra.mxu0 %v2449
          %3120 = vmatprep.subr.bf16.mxu0 %v2454
          %3121 = vmatpush1.bf16.msra.mxu0 %v2453
          %3122 = vmatprep.subr.bf16.mxu0 %v2458
          %3123 = vmatpush1.bf16.msra.mxu0 %v2457
          %3124 = vmatprep.mubr.bf16.mxu0 %v1363
          %3125 = vmatmul.mubr.bf16.gmra.mrb[0].mxu0 %v1362
          %v3126 = vpop.f32.mrb[0].mxu0
          %v3127 = vadd.f32 %v2919, %v3126
          %v3128 = vpop.f32.mrb[0].mxu0
          %v3129 = vadd.f32 %v2923, %v3128
          %v3130 = vpop.f32.mrb[0].mxu0
          %v3131 = vpop.f32.mrb[0].mxu0
          %3132 = vdwg.mxu0
          %3133 = vmatprep.subr.bf16.mxu0 %v2462
          %3134 = vmatpush1.bf16.msra.mxu0 %v2461
          %3135 = vmatprep.subr.bf16.mxu0 %v2466
          %3136 = vmatpush1.bf16.msra.mxu0 %v2465
          %3137 = vmatprep.subr.bf16.mxu0 %v2470
          %3138 = vmatpush1.bf16.msra.mxu0 %v2469
          %3139 = vmatprep.subr.bf16.mxu0 %v2474
          %3140 = vmatpush1.bf16.msra.mxu0 %v2473
          %3141 = vmatprep.subr.bf16.mxu0 %v2478
          %3142 = vmatpush1.bf16.msra.mxu0 %v2477
          %3143 = vmatprep.subr.bf16.mxu0 %v2482
          %3144 = vmatpush1.bf16.msra.mxu0 %v2481
          %3145 = vmatprep.subr.bf16.mxu0 %v2486
          %3146 = vmatpush1.bf16.msra.mxu0 %v2485
          %3147 = vmatprep.subr.bf16.mxu0 %v2490
          %3148 = vmatpush1.bf16.msra.mxu0 %v2489
          %3149 = vmatprep.subr.bf16.mxu0 %v2494
          %3150 = vmatpush1.bf16.msra.mxu0 %v2493
          %3151 = vmatprep.subr.bf16.mxu0 %v2498
          %3152 = vmatpush1.bf16.msra.mxu0 %v2497
          %3153 = vmatprep.subr.bf16.mxu0 %v2502
          %3154 = vmatpush1.bf16.msra.mxu0 %v2501
          %3155 = vmatprep.subr.bf16.mxu0 %v2506
          %3156 = vmatpush1.bf16.msra.mxu0 %v2505
          %3157 = vmatprep.subr.bf16.mxu0 %v2510
          %3158 = vmatpush1.bf16.msra.mxu0 %v2509
          %3159 = vmatprep.subr.bf16.mxu0 %v2514
          %3160 = vmatpush1.bf16.msra.mxu0 %v2513
          %3161 = vmatprep.subr.bf16.mxu0 %v2518
          %3162 = vmatpush1.bf16.msra.mxu0 %v2517
          %3163 = vmatprep.subr.bf16.mxu0 %v2522
          %3164 = vmatpush1.bf16.msra.mxu0 %v2521
          %3165 = vmatprep.mubr.bf16.mxu0 %v1365
          %3166 = vmatmul.mubr.bf16.gmra.mrb[0].mxu0 %v1364
          %v3167 = vpop.f32.mrb[0].mxu0
          %v3168 = vadd.f32 %v3127, %v3167
          %v3169 = vpop.f32.mrb[0].mxu0
          %v3170 = vadd.f32 %v3129, %v3169
          %v3171 = vpop.f32.mrb[0].mxu0
          %v3172 = vpop.f32.mrb[0].mxu0
          %3173 = vdwg.mxu0
          %3174 = vmatprep.subr.bf16.mxu0 %v2526
          %3175 = vmatpush1.bf16.msra.mxu0 %v2525
          %3176 = vmatprep.subr.bf16.mxu0 %v2530
          %3177 = vmatpush1.bf16.msra.mxu0 %v2529
          %3178 = vmatprep.subr.bf16.mxu0 %v2534
          %3179 = vmatpush1.bf16.msra.mxu0 %v2533
          %3180 = vmatprep.subr.bf16.mxu0 %v2538
          %3181 = vmatpush1.bf16.msra.mxu0 %v2537
          %3182 = vmatprep.subr.bf16.mxu0 %v2542
          %3183 = vmatpush1.bf16.msra.mxu0 %v2541
          %3184 = vmatprep.subr.bf16.mxu0 %v2546
          %3185 = vmatpush1.bf16.msra.mxu0 %v2545
          %3186 = vmatprep.subr.bf16.mxu0 %v2550
          %3187 = vmatpush1.bf16.msra.mxu0 %v2549
          %3188 = vmatprep.subr.bf16.mxu0 %v2554
          %3189 = vmatpush1.bf16.msra.mxu0 %v2553
          %3190 = vmatprep.subr.bf16.mxu0 %v2558
          %3191 = vmatpush1.bf16.msra.mxu0 %v2557
          %3192 = vmatprep.subr.bf16.mxu0 %v2562
          %3193 = vmatpush1.bf16.msra.mxu0 %v2561
          %3194 = vmatprep.subr.bf16.mxu0 %v2566
          %3195 = vmatpush1.bf16.msra.mxu0 %v2565
          %3196 = vmatprep.subr.bf16.mxu0 %v2570
          %3197 = vmatpush1.bf16.msra.mxu0 %v2569
          %3198 = vmatprep.subr.bf16.mxu0 %v2574
          %3199 = vmatpush1.bf16.msra.mxu0 %v2573
          %3200 = vmatprep.subr.bf16.mxu0 %v2578
          %3201 = vmatpush1.bf16.msra.mxu0 %v2577
          %3202 = vmatprep.subr.bf16.mxu0 %v2582
          %3203 = vmatpush1.bf16.msra.mxu0 %v2581
          %3204 = vmatprep.subr.bf16.mxu0 %v2586
          %3205 = vmatpush1.bf16.msra.mxu0 %v2585
          %3206 = vmatprep.mubr.bf16.mxu0 %v1367
          %3207 = vmatmul.mubr.bf16.gmra.mrb[0].mxu0 %v1366
          %v3208 = vpop.f32.mrb[0].mxu0
          %v3209 = vadd.f32 %v3168, %v3208
          %v3210 = vpop.f32.mrb[0].mxu0
          %v3211 = vadd.f32 %v3170, %v3210
          %v3212 = vpop.f32.mrb[0].mxu0
          %v3213 = vpop.f32.mrb[0].mxu0
          %3214 = vdwg.mxu0
          %3215 = vmatprep.subr.bf16.mxu0 %v2590
          %3216 = vmatpush1.bf16.msra.mxu0 %v2589
          %3217 = vmatprep.subr.bf16.mxu0 %v2594
          %3218 = vmatpush1.bf16.msra.mxu0 %v2593
          %3219 = vmatprep.subr.bf16.mxu0 %v2598
          %3220 = vmatpush1.bf16.msra.mxu0 %v2597
          %3221 = vmatprep.subr.bf16.mxu0 %v2602
          %3222 = vmatpush1.bf16.msra.mxu0 %v2601
          %3223 = vmatprep.subr.bf16.mxu0 %v2606
          %3224 = vmatpush1.bf16.msra.mxu0 %v2605
          %3225 = vmatprep.subr.bf16.mxu0 %v2610
          %3226 = vmatpush1.bf16.msra.mxu0 %v2609
          %3227 = vmatprep.subr.bf16.mxu0 %v2614
          %3228 = vmatpush1.bf16.msra.mxu0 %v2613
          %3229 = vmatprep.subr.bf16.mxu0 %v2618
          %3230 = vmatpush1.bf16.msra.mxu0 %v2617
          %3231 = vmatprep.subr.bf16.mxu0 %v2622
          %3232 = vmatpush1.bf16.msra.mxu0 %v2621
          %3233 = vmatprep.subr.bf16.mxu0 %v2626
          %3234 = vmatpush1.bf16.msra.mxu0 %v2625
          %3235 = vmatprep.subr.bf16.mxu0 %v2630
          %3236 = vmatpush1.bf16.msra.mxu0 %v2629
          %3237 = vmatprep.subr.bf16.mxu0 %v2634
          %3238 = vmatpush1.bf16.msra.mxu0 %v2633
          %3239 = vmatprep.subr.bf16.mxu0 %v2638
          %3240 = vmatpush1.bf16.msra.mxu0 %v2637
          %3241 = vmatprep.subr.bf16.mxu0 %v2642
          %3242 = vmatpush1.bf16.msra.mxu0 %v2641
          %3243 = vmatprep.subr.bf16.mxu0 %v2646
          %3244 = vmatpush1.bf16.msra.mxu0 %v2645
          %3245 = vmatprep.subr.bf16.mxu0 %v2650
          %3246 = vmatpush1.bf16.msra.mxu0 %v2649
          %3247 = vmatprep.mubr.bf16.mxu0 %v1369
          %3248 = vmatmul.mubr.bf16.gmra.mrb[0].mxu0 %v1368
          %v3249 = vpop.f32.mrb[0].mxu0
          %v3250 = vadd.f32 %v3209, %v3249
          %v3251 = vpop.f32.mrb[0].mxu0
          %v3252 = vadd.f32 %v3211, %v3251
          %v3253 = vpop.f32.mrb[0].mxu0
          %v3254 = vpop.f32.mrb[0].mxu0
          %3255 = vdwg.mxu0
          %v3256 = vmax.f32 %v3086, 0.0
          %v3257 = vmax.f32 %v3088, 0.0
          %v3258 = vmax.f32 %v3250, 0.0
          %v3259 = vmax.f32 %v3252, 0.0
          %v3260 = vpack.c.bf16 %v3256, %v3256
          %v3261 = vpack.c.bf16 %v3257, %v3257
          %v3262 = vpack.c.bf16 %v3258, %v3258
          %v3263 = vpack.c.bf16 %v3259, %v3259
          %v3264 = vld [vmem:[#allocation8] sm:$0xff]
          %v3265 = vld [vmem:[#allocation8 + $0x8] sm:$0xff]
          %v3266 = vld [vmem:[#allocation8 + $0x10] sm:$0xff]
          %v3267 = vld [vmem:[#allocation8 + $0x18] sm:$0xff]
          %v3268 = vld [vmem:[#allocation8 + $0x20] sm:$0xff]
          %v3269 = vld [vmem:[#allocation8 + $0x28] sm:$0xff]
          %v3270 = vld [vmem:[#allocation8 + $0x30] sm:$0xff]
          %v3271 = vld [vmem:[#allocation8 + $0x38] sm:$0xff]
          %v3272 = vld [vmem:[#allocation8 + $0x40] sm:$0xff]
          %v3273 = vld [vmem:[#allocation8 + $0x48] sm:$0xff]
          %v3274 = vld [vmem:[#allocation8 + $0x50] sm:$0xff]
          %v3275 = vld [vmem:[#allocation8 + $0x58] sm:$0xff]
          %v3276 = vld [vmem:[#allocation8 + $0x60] sm:$0xff]
          %v3277 = vld [vmem:[#allocation8 + $0x68] sm:$0xff]
          %v3278 = vld [vmem:[#allocation8 + $0x70] sm:$0xff]
          %v3279 = vld [vmem:[#allocation8 + $0x78] sm:$0xff]
          %v3280 = vld [vmem:[#allocation8 + $0x80] sm:$0xff]
          %v3281 = vld [vmem:[#allocation8 + $0x88] sm:$0xff]
          %v3282 = vld [vmem:[#allocation8 + $0x90] sm:$0xff]
          %v3283 = vld [vmem:[#allocation8 + $0x98] sm:$0xff]
          %v3284 = vld [vmem:[#allocation8 + $0xa0] sm:$0xff]
          %v3285 = vld [vmem:[#allocation8 + $0xa8] sm:$0xff]
          %v3286 = vld [vmem:[#allocation8 + $0xb0] sm:$0xff]
          %v3287 = vld [vmem:[#allocation8 + $0xb8] sm:$0xff]
          %v3288 = vld [vmem:[#allocation8 + $0xc0] sm:$0xff]
          %v3289 = vld [vmem:[#allocation8 + $0xc8] sm:$0xff]
          %v3290 = vld [vmem:[#allocation8 + $0xd0] sm:$0xff]
          %v3291 = vld [vmem:[#allocation8 + $0xd8] sm:$0xff]
          %v3292 = vld [vmem:[#allocation8 + $0xe0] sm:$0xff]
          %v3293 = vld [vmem:[#allocation8 + $0xe8] sm:$0xff]
          %v3294 = vld [vmem:[#allocation8 + $0xf0] sm:$0xff]
          %v3295 = vld [vmem:[#allocation8 + $0xf8] sm:$0xff]
          %v3296 = vld [vmem:[#allocation8 + $0x100] sm:$0xff]
          %v3297 = vld [vmem:[#allocation8 + $0x108] sm:$0xff]
          %v3298 = vld [vmem:[#allocation8 + $0x110] sm:$0xff]
          %v3299 = vld [vmem:[#allocation8 + $0x118] sm:$0xff]
          %v3300 = vld [vmem:[#allocation8 + $0x120] sm:$0xff]
          %v3301 = vld [vmem:[#allocation8 + $0x128] sm:$0xff]
          %v3302 = vld [vmem:[#allocation8 + $0x130] sm:$0xff]
          %v3303 = vld [vmem:[#allocation8 + $0x138] sm:$0xff]
          %v3304 = vld [vmem:[#allocation8 + $0x140] sm:$0xff]
          %v3305 = vld [vmem:[#allocation8 + $0x148] sm:$0xff]
          %v3306 = vld [vmem:[#allocation8 + $0x150] sm:$0xff]
          %v3307 = vld [vmem:[#allocation8 + $0x158] sm:$0xff]
          %v3308 = vld [vmem:[#allocation8 + $0x160] sm:$0xff]
          %v3309 = vld [vmem:[#allocation8 + $0x168] sm:$0xff]
          %v3310 = vld [vmem:[#allocation8 + $0x170] sm:$0xff]
          %v3311 = vld [vmem:[#allocation8 + $0x178] sm:$0xff]
          %v3312 = vld [vmem:[#allocation8 + $0x180] sm:$0xff]
          %v3313 = vld [vmem:[#allocation8 + $0x188] sm:$0xff]
          %v3314 = vld [vmem:[#allocation8 + $0x190] sm:$0xff]
          %v3315 = vld [vmem:[#allocation8 + $0x198] sm:$0xff]
          %v3316 = vld [vmem:[#allocation8 + $0x1a0] sm:$0xff]
          %v3317 = vld [vmem:[#allocation8 + $0x1a8] sm:$0xff]
          %v3318 = vld [vmem:[#allocation8 + $0x1b0] sm:$0xff]
          %v3319 = vld [vmem:[#allocation8 + $0x1b8] sm:$0xff]
          %v3320 = vld [vmem:[#allocation8 + $0x1c0] sm:$0xff]
          %v3321 = vld [vmem:[#allocation8 + $0x1c8] sm:$0xff]
          %v3322 = vld [vmem:[#allocation8 + $0x1d0] sm:$0xff]
          %v3323 = vld [vmem:[#allocation8 + $0x1d8] sm:$0xff]
          %v3324 = vld [vmem:[#allocation8 + $0x1e0] sm:$0xff]
          %v3325 = vld [vmem:[#allocation8 + $0x1e8] sm:$0xff]
          %v3326 = vld [vmem:[#allocation8 + $0x1f0] sm:$0xff]
          %v3327 = vld [vmem:[#allocation8 + $0x1f8] sm:$0xff]
          %v3328 = vld [vmem:[%s10] sm:$0x3]
          %v3393 = vunpack.c.l.b16 %v3264
          %v3394 = vunpack.c.h.b16 %v3264
          %v3395 = vunpack.c.l.b16 %v3265
          %v3396 = vunpack.c.h.b16 %v3265
          %v3397 = vunpack.c.l.b16 %v3266
          %v3398 = vunpack.c.h.b16 %v3266
          %v3399 = vunpack.c.l.b16 %v3267
          %v3400 = vunpack.c.h.b16 %v3267
          %v3401 = vunpack.c.l.b16 %v3268
          %v3402 = vunpack.c.h.b16 %v3268
          %v3403 = vunpack.c.l.b16 %v3269
          %v3404 = vunpack.c.h.b16 %v3269
          %v3405 = vunpack.c.l.b16 %v3270
          %v3406 = vunpack.c.h.b16 %v3270
          %v3407 = vunpack.c.l.b16 %v3271
          %v3408 = vunpack.c.h.b16 %v3271
          %v3409 = vunpack.c.l.b16 %v3272
          %v3410 = vunpack.c.h.b16 %v3272
          %v3411 = vunpack.c.l.b16 %v3273
          %v3412 = vunpack.c.h.b16 %v3273
          %v3413 = vunpack.c.l.b16 %v3274
          %v3414 = vunpack.c.h.b16 %v3274
          %v3415 = vunpack.c.l.b16 %v3275
          %v3416 = vunpack.c.h.b16 %v3275
          %v3417 = vunpack.c.l.b16 %v3276
          %v3418 = vunpack.c.h.b16 %v3276
          %v3419 = vunpack.c.l.b16 %v3277
          %v3420 = vunpack.c.h.b16 %v3277
          %v3421 = vunpack.c.l.b16 %v3278
          %v3422 = vunpack.c.h.b16 %v3278
          %v3423 = vunpack.c.l.b16 %v3279
          %v3424 = vunpack.c.h.b16 %v3279
          %v3425 = vunpack.c.l.b16 %v3280
          %v3426 = vunpack.c.h.b16 %v3280
          %v3427 = vunpack.c.l.b16 %v3281
          %v3428 = vunpack.c.h.b16 %v3281
          %v3429 = vunpack.c.l.b16 %v3282
          %v3430 = vunpack.c.h.b16 %v3282
          %v3431 = vunpack.c.l.b16 %v3283
          %v3432 = vunpack.c.h.b16 %v3283
          %v3433 = vunpack.c.l.b16 %v3284
          %v3434 = vunpack.c.h.b16 %v3284
          %v3435 = vunpack.c.l.b16 %v3285
          %v3436 = vunpack.c.h.b16 %v3285
          %v3437 = vunpack.c.l.b16 %v3286
          %v3438 = vunpack.c.h.b16 %v3286
          %v3439 = vunpack.c.l.b16 %v3287
          %v3440 = vunpack.c.h.b16 %v3287
          %v3441 = vunpack.c.l.b16 %v3288
          %v3442 = vunpack.c.h.b16 %v3288
          %v3443 = vunpack.c.l.b16 %v3289
          %v3444 = vunpack.c.h.b16 %v3289
          %v3445 = vunpack.c.l.b16 %v3290
          %v3446 = vunpack.c.h.b16 %v3290
          %v3447 = vunpack.c.l.b16 %v3291
          %v3448 = vunpack.c.h.b16 %v3291
          %v3449 = vunpack.c.l.b16 %v3292
          %v3450 = vunpack.c.h.b16 %v3292
          %v3451 = vunpack.c.l.b16 %v3293
          %v3452 = vunpack.c.h.b16 %v3293
          %v3453 = vunpack.c.l.b16 %v3294
          %v3454 = vunpack.c.h.b16 %v3294
          %v3455 = vunpack.c.l.b16 %v3295
          %v3456 = vunpack.c.h.b16 %v3295
          %v3457 = vunpack.c.l.b16 %v3296
          %v3458 = vunpack.c.h.b16 %v3296
          %v3459 = vunpack.c.l.b16 %v3297
          %v3460 = vunpack.c.h.b16 %v3297
          %v3461 = vunpack.c.l.b16 %v3298
          %v3462 = vunpack.c.h.b16 %v3298
          %v3463 = vunpack.c.l.b16 %v3299
          %v3464 = vunpack.c.h.b16 %v3299
          %v3465 = vunpack.c.l.b16 %v3300
          %v3466 = vunpack.c.h.b16 %v3300
          %v3467 = vunpack.c.l.b16 %v3301
          %v3468 = vunpack.c.h.b16 %v3301
          %v3469 = vunpack.c.l.b16 %v3302
          %v3470 = vunpack.c.h.b16 %v3302
          %v3471 = vunpack.c.l.b16 %v3303
          %v3472 = vunpack.c.h.b16 %v3303
          %v3473 = vunpack.c.l.b16 %v3304
          %v3474 = vunpack.c.h.b16 %v3304
          %v3475 = vunpack.c.l.b16 %v3305
          %v3476 = vunpack.c.h.b16 %v3305
          %v3477 = vunpack.c.l.b16 %v3306
          %v3478 = vunpack.c.h.b16 %v3306
          %v3479 = vunpack.c.l.b16 %v3307
          %v3480 = vunpack.c.h.b16 %v3307
          %v3481 = vunpack.c.l.b16 %v3308
          %v3482 = vunpack.c.h.b16 %v3308
          %v3483 = vunpack.c.l.b16 %v3309
          %v3484 = vunpack.c.h.b16 %v3309
          %v3485 = vunpack.c.l.b16 %v3310
          %v3486 = vunpack.c.h.b16 %v3310
          %v3487 = vunpack.c.l.b16 %v3311
          %v3488 = vunpack.c.h.b16 %v3311
          %v3489 = vunpack.c.l.b16 %v3312
          %v3490 = vunpack.c.h.b16 %v3312
          %v3491 = vunpack.c.l.b16 %v3313
          %v3492 = vunpack.c.h.b16 %v3313
          %v3493 = vunpack.c.l.b16 %v3314
          %v3494 = vunpack.c.h.b16 %v3314
          %v3495 = vunpack.c.l.b16 %v3315
          %v3496 = vunpack.c.h.b16 %v3315
          %v3497 = vunpack.c.l.b16 %v3316
          %v3498 = vunpack.c.h.b16 %v3316
          %v3499 = vunpack.c.l.b16 %v3317
          %v3500 = vunpack.c.h.b16 %v3317
          %v3501 = vunpack.c.l.b16 %v3318
          %v3502 = vunpack.c.h.b16 %v3318
          %v3503 = vunpack.c.l.b16 %v3319
          %v3504 = vunpack.c.h.b16 %v3319
          %v3505 = vunpack.c.l.b16 %v3320
          %v3506 = vunpack.c.h.b16 %v3320
          %v3507 = vunpack.c.l.b16 %v3321
          %v3508 = vunpack.c.h.b16 %v3321
          %v3509 = vunpack.c.l.b16 %v3322
          %v3510 = vunpack.c.h.b16 %v3322
          %v3511 = vunpack.c.l.b16 %v3323
          %v3512 = vunpack.c.h.b16 %v3323
          %v3513 = vunpack.c.l.b16 %v3324
          %v3514 = vunpack.c.h.b16 %v3324
          %v3515 = vunpack.c.l.b16 %v3325
          %v3516 = vunpack.c.h.b16 %v3325
          %v3517 = vunpack.c.l.b16 %v3326
          %v3518 = vunpack.c.h.b16 %v3326
          %v3519 = vunpack.c.l.b16 %v3327
          %v3520 = vunpack.c.h.b16 %v3327
          %v3521 = vpack.c.b16 %v3395, %v3393
          %v3522 = vpack.c.b16 %v3396, %v3394
          %v3523 = vpack.c.b16 %v3399, %v3397
          %v3524 = vpack.c.b16 %v3400, %v3398
          %v3525 = vpack.c.b16 %v3403, %v3401
          %v3526 = vpack.c.b16 %v3404, %v3402
          %v3527 = vpack.c.b16 %v3407, %v3405
          %v3528 = vpack.c.b16 %v3408, %v3406
          %v3529 = vpack.c.b16 %v3411, %v3409
          %v3530 = vpack.c.b16 %v3412, %v3410
          %v3531 = vpack.c.b16 %v3415, %v3413
          %v3532 = vpack.c.b16 %v3416, %v3414
          %v3533 = vpack.c.b16 %v3419, %v3417
          %v3534 = vpack.c.b16 %v3420, %v3418
          %v3535 = vpack.c.b16 %v3423, %v3421
          %v3536 = vpack.c.b16 %v3424, %v3422
          %v3537 = vpack.c.b16 %v3427, %v3425
          %v3538 = vpack.c.b16 %v3428, %v3426
          %v3539 = vpack.c.b16 %v3431, %v3429
          %v3540 = vpack.c.b16 %v3432, %v3430
          %v3541 = vpack.c.b16 %v3435, %v3433
          %v3542 = vpack.c.b16 %v3436, %v3434
          %v3543 = vpack.c.b16 %v3439, %v3437
          %v3544 = vpack.c.b16 %v3440, %v3438
          %v3545 = vpack.c.b16 %v3443, %v3441
          %v3546 = vpack.c.b16 %v3444, %v3442
          %v3547 = vpack.c.b16 %v3447, %v3445
          %v3548 = vpack.c.b16 %v3448, %v3446
          %v3549 = vpack.c.b16 %v3451, %v3449
          %v3550 = vpack.c.b16 %v3452, %v3450
          %v3551 = vpack.c.b16 %v3455, %v3453
          %v3552 = vpack.c.b16 %v3456, %v3454
          %v3553 = vpack.c.b16 %v3459, %v3457
          %v3554 = vpack.c.b16 %v3460, %v3458
          %v3555 = vpack.c.b16 %v3463, %v3461
          %v3556 = vpack.c.b16 %v3464, %v3462
          %v3557 = vpack.c.b16 %v3467, %v3465
          %v3558 = vpack.c.b16 %v3468, %v3466
          %v3559 = vpack.c.b16 %v3471, %v3469
          %v3560 = vpack.c.b16 %v3472, %v3470
          %v3561 = vpack.c.b16 %v3475, %v3473
          %v3562 = vpack.c.b16 %v3476, %v3474
          %v3563 = vpack.c.b16 %v3479, %v3477
          %v3564 = vpack.c.b16 %v3480, %v3478
          %v3565 = vpack.c.b16 %v3483, %v3481
          %v3566 = vpack.c.b16 %v3484, %v3482
          %v3567 = vpack.c.b16 %v3487, %v3485
          %v3568 = vpack.c.b16 %v3488, %v3486
          %v3569 = vpack.c.b16 %v3491, %v3489
          %v3570 = vpack.c.b16 %v3492, %v3490
          %v3571 = vpack.c.b16 %v3495, %v3493
          %v3572 = vpack.c.b16 %v3496, %v3494
          %v3573 = vpack.c.b16 %v3499, %v3497
          %v3574 = vpack.c.b16 %v3500, %v3498
          %v3575 = vpack.c.b16 %v3503, %v3501
          %v3576 = vpack.c.b16 %v3504, %v3502
          %v3577 = vpack.c.b16 %v3507, %v3505
          %v3578 = vpack.c.b16 %v3508, %v3506
          %v3579 = vpack.c.b16 %v3511, %v3509
          %v3580 = vpack.c.b16 %v3512, %v3510
          %v3581 = vpack.c.b16 %v3515, %v3513
          %v3582 = vpack.c.b16 %v3516, %v3514
          %v3583 = vpack.c.b16 %v3519, %v3517
          %v3584 = vpack.c.b16 %v3520, %v3518
          %v3650 = vlaneseq
          %v3651 = vshrl.u32 %v3650, 7
          %v3652 = vsub.s32 0, %v3651
          %v3653 = vrot.slane %v3328, %v3652
          %v3654 = vlaneseq
          %v3655 = vshrl.u32 %v3654, 7
          %v3656 = vsub.s32 1, %v3655
          %v3657 = vrot.slane %v3328, %v3656
          %3660 = vmatprep.subr.bf16.mxu0 %v3522
          %3661 = vmatpush1.bf16.msra.mxu0 %v3521
          %3662 = vmatprep.subr.bf16.mxu0 %v3524
          %3663 = vmatpush1.bf16.msra.mxu0 %v3523
          %3664 = vmatprep.subr.bf16.mxu0 %v3526
          %3665 = vmatpush1.bf16.msra.mxu0 %v3525
          %3666 = vmatprep.subr.bf16.mxu0 %v3528
          %3667 = vmatpush1.bf16.msra.mxu0 %v3527
          %3668 = vmatprep.subr.bf16.mxu0 %v3530
          %3669 = vmatpush1.bf16.msra.mxu0 %v3529
          %3670 = vmatprep.subr.bf16.mxu0 %v3532
          %3671 = vmatpush1.bf16.msra.mxu0 %v3531
          %3672 = vmatprep.subr.bf16.mxu0 %v3534
          %3673 = vmatpush1.bf16.msra.mxu0 %v3533
          %3674 = vmatprep.subr.bf16.mxu0 %v3536
          %3675 = vmatpush1.bf16.msra.mxu0 %v3535
          %3676 = vmatprep.subr.bf16.mxu0 %v3538
          %3677 = vmatpush1.bf16.msra.mxu0 %v3537
          %3678 = vmatprep.subr.bf16.mxu0 %v3540
          %3679 = vmatpush1.bf16.msra.mxu0 %v3539
          %3680 = vmatprep.subr.bf16.mxu0 %v3542
          %3681 = vmatpush1.bf16.msra.mxu0 %v3541
          %3682 = vmatprep.subr.bf16.mxu0 %v3544
          %3683 = vmatpush1.bf16.msra.mxu0 %v3543
          %3684 = vmatprep.subr.bf16.mxu0 %v3546
          %3685 = vmatpush1.bf16.msra.mxu0 %v3545
          %3686 = vmatprep.subr.bf16.mxu0 %v3548
          %3687 = vmatpush1.bf16.msra.mxu0 %v3547
          %3688 = vmatprep.subr.bf16.mxu0 %v3550
          %3689 = vmatpush1.bf16.msra.mxu0 %v3549
          %3690 = vmatprep.subr.bf16.mxu0 %v3552
          %3691 = vmatpush1.bf16.msra.mxu0 %v3551
          %3692 = vmatprep.mubr.bf16.mxu0 %v3261
          %3693 = vmatmul.mubr.bf16.gmra.mrb[0].mxu0 %v3260
          %v3694 = vpop.f32.mrb[0].mxu0
          %v3695 = vadd.f32 %v3653, %v3694
          %v3696 = vpop.f32.mrb[0].mxu0
          %v3697 = vadd.f32 %v3657, %v3696
          %v3698 = vpop.f32.mrb[0].mxu0
          %v3699 = vpop.f32.mrb[0].mxu0
          %3700 = vdwg.mxu0
          %3701 = vmatprep.subr.bf16.mxu0 %v3554
          %3702 = vmatpush1.bf16.msra.mxu0 %v3553
          %3703 = vmatprep.subr.bf16.mxu0 %v3556
          %3704 = vmatpush1.bf16.msra.mxu0 %v3555
          %3705 = vmatprep.subr.bf16.mxu0 %v3558
          %3706 = vmatpush1.bf16.msra.mxu0 %v3557
          %3707 = vmatprep.subr.bf16.mxu0 %v3560
          %3708 = vmatpush1.bf16.msra.mxu0 %v3559
          %3709 = vmatprep.subr.bf16.mxu0 %v3562
          %3710 = vmatpush1.bf16.msra.mxu0 %v3561
          %3711 = vmatprep.subr.bf16.mxu0 %v3564
          %3712 = vmatpush1.bf16.msra.mxu0 %v3563
          %3713 = vmatprep.subr.bf16.mxu0 %v3566
          %3714 = vmatpush1.bf16.msra.mxu0 %v3565
          %3715 = vmatprep.subr.bf16.mxu0 %v3568
          %3716 = vmatpush1.bf16.msra.mxu0 %v3567
          %3717 = vmatprep.subr.bf16.mxu0 %v3570
          %3718 = vmatpush1.bf16.msra.mxu0 %v3569
          %3719 = vmatprep.subr.bf16.mxu0 %v3572
          %3720 = vmatpush1.bf16.msra.mxu0 %v3571
          %3721 = vmatprep.subr.bf16.mxu0 %v3574
          %3722 = vmatpush1.bf16.msra.mxu0 %v3573
          %3723 = vmatprep.subr.bf16.mxu0 %v3576
          %3724 = vmatpush1.bf16.msra.mxu0 %v3575
          %3725 = vmatprep.subr.bf16.mxu0 %v3578
          %3726 = vmatpush1.bf16.msra.mxu0 %v3577
          %3727 = vmatprep.subr.bf16.mxu0 %v3580
          %3728 = vmatpush1.bf16.msra.mxu0 %v3579
          %3729 = vmatprep.subr.bf16.mxu0 %v3582
          %3730 = vmatpush1.bf16.msra.mxu0 %v3581
          %3731 = vmatprep.subr.bf16.mxu0 %v3584
          %3732 = vmatpush1.bf16.msra.mxu0 %v3583
          %3733 = vmatprep.mubr.bf16.mxu0 %v3263
          %3734 = vmatmul.mubr.bf16.gmra.mrb[0].mxu0 %v3262
          %v3735 = vpop.f32.mrb[0].mxu0
          %v3736 = vadd.f32 %v3695, %v3735
          %v3737 = vpop.f32.mrb[0].mxu0
          %v3738 = vadd.f32 %v3697, %v3737
          %v3739 = vpop.f32.mrb[0].mxu0
          %v3740 = vpop.f32.mrb[0].mxu0
          %3741 = vdwg.mxu0
          %v3742 = vmax.f32 %v3736, 0.0
          %v3743 = vmax.f32 %v3738, 0.0
          %v3744 = vpack.c.bf16 %v3742, %v3742
          %v3745 = vpack.c.bf16 %v3743, %v3743
          %v3746 = vld [vmem:[%s11] sm:$0xf]
          %v3747 = vld [vmem:[%s11 + $0x4] sm:$0xf]
          %v3748 = vld [vmem:[%s11 + $0x8] sm:$0xf]
          %v3749 = vld [vmem:[%s11 + $0xc] sm:$0xf]
          %v3750 = vld [vmem:[%s11 + $0x10] sm:$0xf]
          %v3751 = vld [vmem:[%s11 + $0x14] sm:$0xf]
          %v3752 = vld [vmem:[%s11 + $0x18] sm:$0xf]
          %v3753 = vld [vmem:[%s11 + $0x1c] sm:$0xf]
          %v3754 = vld [vmem:[%s11 + $0x20] sm:$0xf]
          %v3755 = vld [vmem:[%s11 + $0x24] sm:$0xf]
          %v3756 = vld [vmem:[%s11 + $0x28] sm:$0xf]
          %v3757 = vld [vmem:[%s11 + $0x2c] sm:$0xf]
          %v3758 = vld [vmem:[%s11 + $0x30] sm:$0xf]
          %v3759 = vld [vmem:[%s11 + $0x34] sm:$0xf]
          %v3760 = vld [vmem:[%s11 + $0x38] sm:$0xf]
          %v3761 = vld [vmem:[%s11 + $0x3c] sm:$0xf]
          %v3762 = vld [vmem:[%s11 + $0x40] sm:$0xf]
          %v3763 = vld [vmem:[%s11 + $0x44] sm:$0xf]
          %v3764 = vld [vmem:[%s11 + $0x48] sm:$0xf]
          %v3765 = vld [vmem:[%s11 + $0x4c] sm:$0xf]
          %v3766 = vld [vmem:[%s11 + $0x50] sm:$0xf]
          %v3767 = vld [vmem:[%s11 + $0x54] sm:$0xf]
          %v3768 = vld [vmem:[%s11 + $0x58] sm:$0xf]
          %v3769 = vld [vmem:[%s11 + $0x5c] sm:$0xf]
          %v3770 = vld [vmem:[%s11 + $0x60] sm:$0xf]
          %v3771 = vld [vmem:[%s11 + $0x64] sm:$0xf]
          %v3772 = vld [vmem:[%s11 + $0x68] sm:$0xf]
          %v3773 = vld [vmem:[%s11 + $0x6c] sm:$0xf]
          %v3774 = vld [vmem:[%s11 + $0x70] sm:$0xf]
          %v3775 = vld [vmem:[%s11 + $0x74] sm:$0xf]
          %v3776 = vld [vmem:[%s11 + $0x78] sm:$0xf]
          %v3777 = vld [vmem:[%s11 + $0x7c] sm:$0xf]
          %v3778 = vld [vmem:[%s12] sm:$0x1]
          %v3811 = vunpack.c.l.b16 %v3746
          %v3812 = vunpack.c.l.b16 %v3747
          %v3813 = vunpack.c.l.b16 %v3748
          %v3814 = vunpack.c.l.b16 %v3749
          %v3815 = vunpack.c.l.b16 %v3750
          %v3816 = vunpack.c.l.b16 %v3751
          %v3817 = vunpack.c.l.b16 %v3752
          %v3818 = vunpack.c.l.b16 %v3753
          %v3819 = vunpack.c.l.b16 %v3754
          %v3820 = vunpack.c.l.b16 %v3755
          %v3821 = vunpack.c.l.b16 %v3756
          %v3822 = vunpack.c.l.b16 %v3757
          %v3823 = vunpack.c.l.b16 %v3758
          %v3824 = vunpack.c.l.b16 %v3759
          %v3825 = vunpack.c.l.b16 %v3760
          %v3826 = vunpack.c.l.b16 %v3761
          %v3827 = vunpack.c.l.b16 %v3762
          %v3828 = vunpack.c.l.b16 %v3763
          %v3829 = vunpack.c.l.b16 %v3764
          %v3830 = vunpack.c.l.b16 %v3765
          %v3831 = vunpack.c.l.b16 %v3766
          %v3832 = vunpack.c.l.b16 %v3767
          %v3833 = vunpack.c.l.b16 %v3768
          %v3834 = vunpack.c.l.b16 %v3769
          %v3835 = vunpack.c.l.b16 %v3770
          %v3836 = vunpack.c.l.b16 %v3771
          %v3837 = vunpack.c.l.b16 %v3772
          %v3838 = vunpack.c.l.b16 %v3773
          %v3839 = vunpack.c.l.b16 %v3774
          %v3840 = vunpack.c.l.b16 %v3775
          %v3841 = vunpack.c.l.b16 %v3776
          %v3842 = vunpack.c.l.b16 %v3777
          %v3843 = vpack.c.b16 %v3812, %v3811
          %v3844 = vpack.c.b16 %v3814, %v3813
          %v3845 = vpack.c.b16 %v3816, %v3815
          %v3846 = vpack.c.b16 %v3818, %v3817
          %v3847 = vpack.c.b16 %v3820, %v3819
          %v3848 = vpack.c.b16 %v3822, %v3821
          %v3849 = vpack.c.b16 %v3824, %v3823
          %v3850 = vpack.c.b16 %v3826, %v3825
          %v3851 = vpack.c.b16 %v3828, %v3827
          %v3852 = vpack.c.b16 %v3830, %v3829
          %v3853 = vpack.c.b16 %v3832, %v3831
          %v3854 = vpack.c.b16 %v3834, %v3833
          %v3855 = vpack.c.b16 %v3836, %v3835
          %v3856 = vpack.c.b16 %v3838, %v3837
          %v3857 = vpack.c.b16 %v3840, %v3839
          %v3858 = vpack.c.b16 %v3842, %v3841
          %3875 = vmatprep.subr.bf16.mxu0 0
          %3876 = vmatpush1.bf16.msra.mxu0 %v3843
          %3877 = vmatprep.subr.bf16.mxu0 0
          %3878 = vmatpush1.bf16.msra.mxu0 %v3844
          %3879 = vmatprep.subr.bf16.mxu0 0
          %3880 = vmatpush1.bf16.msra.mxu0 %v3845
          %3881 = vmatprep.subr.bf16.mxu0 0
          %3882 = vmatpush1.bf16.msra.mxu0 %v3846
          %3883 = vmatprep.subr.bf16.mxu0 0
          %3884 = vmatpush1.bf16.msra.mxu0 %v3847
          %3885 = vmatprep.subr.bf16.mxu0 0
          %3886 = vmatpush1.bf16.msra.mxu0 %v3848
          %3887 = vmatprep.subr.bf16.mxu0 0
          %3888 = vmatpush1.bf16.msra.mxu0 %v3849
          %3889 = vmatprep.subr.bf16.mxu0 0
          %3890 = vmatpush1.bf16.msra.mxu0 %v3850
          %3891 = vmatprep.subr.bf16.mxu0 0
          %3892 = vmatpush1.bf16.msra.mxu0 %v3851
          %3893 = vmatprep.subr.bf16.mxu0 0
          %3894 = vmatpush1.bf16.msra.mxu0 %v3852
          %3895 = vmatprep.subr.bf16.mxu0 0
          %3896 = vmatpush1.bf16.msra.mxu0 %v3853
          %3897 = vmatprep.subr.bf16.mxu0 0
          %3898 = vmatpush1.bf16.msra.mxu0 %v3854
          %3899 = vmatprep.subr.bf16.mxu0 0
          %3900 = vmatpush1.bf16.msra.mxu0 %v3855
          %3901 = vmatprep.subr.bf16.mxu0 0
          %3902 = vmatpush1.bf16.msra.mxu0 %v3856
          %3903 = vmatprep.subr.bf16.mxu0 0
          %3904 = vmatpush1.bf16.msra.mxu0 %v3857
          %3905 = vmatprep.subr.bf16.mxu0 0
          %3906 = vmatpush1.bf16.msra.mxu0 %v3858
          %3907 = vmatprep.mubr.bf16.mxu0 %v3745
          %3908 = vmatmul.mubr.bf16.gmra.mrb[0].mxu0 %v3744
          %v3909 = vpop.f32.mrb[0].mxu0
          %v3910 = vadd.f32 %v3778, %v3909
          %v3911 = vpop.f32.mrb[0].mxu0
          %v3912 = vpop.f32.mrb[0].mxu0
          %v3913 = vpop.f32.mrb[0].mxu0
          %3914 = vdwg.mxu0
          %vm3915 = vcmask 65536
          %3916 = vst.msk [vmem:[%s499] sm:$0x1] %vm3915, %v3910
        $region92: #{tpu_custom_call.1} parent=71 // pred_fallthru
          _
        %s3917 = sand.u32 %s329, 1
        %s3918 = scalar_lea.sflag [#allocation5], %s3917
        %s3919 = sand.u32 %s329, 1
        %s3920 = scalar_lea.vmem [#allocation9], %s3919
        // Predicated region
        $region93: #{tpu_custom_call.1} parent=71 // pred_check
          %p3921 = pneg %p339
        $region94: #{tpu_custom_call.1} parent=71 // pred_check_branch
          %3923 = sbr.rel (%p3921) target = $region96
        $region95: #{tpu_custom_call.1} parent=71 // pred_region
          %s3925 = ssub.s32 16, 16
          %3926 = vsyncadd %s3918, %s3925
          %s3927 = smul.addr %s33, 16
          %s3928 = scalar_lea.hbm %s13, %s3927
          %s3930 = sshll.u32 %s3920, 4
          %s3931 = int_to_ptr.vmem [resolvable:$true] %s3930
          %3933 = dma.vmem_to_hbm [thread:$0]  %s3931, 16, %s3928, %s3918
        $region96: #{tpu_custom_call.1} parent=71 // pred_fallthru
          _
      $region72: #{tpu_custom_call.1} parent=5 // pred_fallthru
        _
      %p3934 = scmp.le.s32.totalorder 2, %s24
      // Predicated region
      $region97: #{tpu_custom_call.1} parent=5 // pred_check
        %p3935 = pneg %p3934
      $region98: #{tpu_custom_call.1} parent=5 // pred_check_branch
        %3937 = sbr.rel (%p3935) target = $region100
      $region99: #{tpu_custom_call.1} parent=5 // pred_region
        %s3938 = ssub.s32 %s24, 2
        // Predicated region
        $region101: #{tpu_custom_call.1} parent=99 // pred_check
          %p3939 = pneg %p345
        $region102: #{tpu_custom_call.1} parent=99 // pred_check_branch
          %3941 = sbr.rel (%p3939) target = $region104
        $region103: #{tpu_custom_call.1} parent=99 // pred_region
          %s3942 = sand.u32 %s330, 1
          %s3943 = scalar_lea.sflag [#allocation5], %s3942
          %s3944 = sand.u32 %s330, 1
          %s3945 = scalar_lea.vmem [#allocation9], %s3944
          %3946 = dma.done %s3943, 16
        $region104: #{tpu_custom_call.1} parent=99 // pred_fallthru
          _
      $region100: #{tpu_custom_call.1} parent=5 // pred_fallthru
        _
    $region6: #{tpu_custom_call.1} parent=1 // loop_footer
      %s28 = sadd.s32 1, %s24
    $region7: #{tpu_custom_call.1} parent=1 // loop_footer_branch
      %23 = sbr.rel target = $region3
    $region8: #{tpu_custom_call.1} parent=1 // loop_exit
      _
    %3947 = vsyncpa [#allocation4], 1
    %s3948 = scalar_lea.sflag [#allocation4], 1
    %3949 = vsyncpa %s3948, 1
    %3950 = vsyncpa [#allocation7], 1
    %3951 = vsyncpa [#allocation5], 1
    %s3952 = scalar_lea.sflag [#allocation5], 1
    %3953 = vsyncpa %s3952, 1

</llo_original>
